<compile_context>
chip_gen: v5e
topology: v5e:2x2
jax: 0.10.0
libtpu: 0.0.40
codegen_flags: <defaults>
</compile_context>

<pallas_src>
import functools

import jax
import jax.numpy as jnp
from jax.experimental import pallas as pl
from jax.experimental.pallas import tpu as pltpu


_INV_SQRT2 = 0.7071067811865475


# ----------------------------------------------------------------------------
# GELU epilogues (computed in f32 after the MXU accumulation).
# ----------------------------------------------------------------------------
def _erf_f32(x):
    # Abramowitz & Stegun 7.1.26, |err| <= 1.5e-7.  Exact divide (previously an
    # approximate EUP reciprocal was used here and broke the f32 tolerance).
    p = 0.3275911
    a1, a2, a3, a4, a5 = (0.254829592, -0.284496736, 1.421413741,
                          -1.453152027, 1.061405429)
    ax = jnp.abs(x)
    t = 1.0 / (1.0 + p * ax)
    poly = ((((a5 * t + a4) * t + a3) * t + a2) * t + a1) * t
    y = 1.0 - poly * jnp.exp(-ax * ax)
    return jnp.where(x >= 0.0, y, -y)


def _gelu_erf(x):
    # torch.nn.functional.gelu default (erf-based) GELU.
    return 0.5 * x * (1.0 + _erf_f32(x * _INV_SQRT2))


def _gelu_tanh(x):
    # torch F.gelu(approximate="tanh"): ~half the VALU ops of the erf poly and
    # tanh lands on the EUP slot -- preferred on v7x where the epilogue is the
    # saturating slot once bf16 MXU operands are used.
    c = 0.7978845608028654  # sqrt(2/pi)
    return 0.5 * x * (1.0 + jnp.tanh(c * (x + 0.044715 * x * x * x)))


_GELUS = {"erf": _gelu_erf, "tanh": _gelu_tanh}


def _round_up(x, m):
    return (x + m - 1) // m * m


# ----------------------------------------------------------------------------
# Pass 1: whisper rows ->  GELU(w @ Wmix + bmix)  written to rows [0, Sw) of
# the shared concat-layout buffer.
# ----------------------------------------------------------------------------
def _mix_gelu_kernel(x_ref, wm_ref, bm_ref, o_ref, *, gelu):
    acc = jnp.dot(x_ref[...], wm_ref[...], preferred_element_type=jnp.float32)
    o_ref[...] = gelu(acc + bm_ref[...]).astype(o_ref.dtype)


# ----------------------------------------------------------------------------
# Pass 2: donut rows, fully fused
#   GELU( GELU(d @ Wimg + bimg) @ Wmix + bmix )
# written at a row offset of the same buffer (aliased), so the image_linear
# intermediate and the concat never hit HBM.
# ----------------------------------------------------------------------------
def _donut_fused_kernel(d_ref, wi_ref, bi_ref, wm_ref, bm_ref, buf_ref, o_ref,
                        *, gelu):
    del buf_ref  # aliased concat buffer; written only through o_ref
    h = jnp.dot(d_ref[...], wi_ref[...], preferred_element_type=jnp.float32)
    # bf16 by default -> the mix matmul runs at full MXU rate.
    h = gelu(h + bi_ref[...]).astype(wm_ref.dtype)
    acc = jnp.dot(h, wm_ref[...], preferred_element_type=jnp.float32)
    o_ref[...] = gelu(acc + bm_ref[...]).astype(o_ref.dtype)


# ----------------------------------------------------------------------------
# Wrapper: mixed-encoder part of transModel.forward
# ----------------------------------------------------------------------------
def trans_encoder_mix(d_encoder_output, w_encoder_output, params, *,
                      tq=512, mxu_dtype=jnp.bfloat16, out_dtype=None,
                      gelu_impl="erf"):
    """GELU(mix_linear(concat([w, GELU(image_linear(d))], axis=1)))."""
    B, Sd, Din = d_encoder_output.shape
    Bw, Sw, D = w_encoder_output.shape
    assert B == Bw
    if out_dtype is None:
        out_dtype = w_encoder_output.dtype
    gelu = _GELUS[gelu_impl]

    wi, bi = params["image_linear_w"], params["image_linear_b"]
    wm, bm = params["mix_linear_w"], params["mix_linear_b"]
    assert wi.shape == (Din, D) and wm.shape == (D, D)

    # bf16 MXU operands by default (all generations).  Bias add + GELU are f32;
    # accumulation is f32.
    if mxu_dtype is not None:
        d_encoder_output = d_encoder_output.astype(mxu_dtype)
        w_encoder_output = w_encoder_output.astype(mxu_dtype)
        wi = wi.astype(mxu_dtype)
        wm = wm.astype(mxu_dtype)
    bi = bi.astype(jnp.float32)
    bm = bm.astype(jnp.float32)

    # Row tile: large tiles amortize the ~0.35us per-grid-step overhead
    # (mem-bound roofline ~63% -> ~85% of HBM BW going 256 -> 512 rows).
    # Always a multiple of 8 so the (8,128) BlockSpec constraint holds.
    tq = max(8, min(tq, _round_up(max(Sw, Sd), 8)))
    tq = _round_up(tq, 8)
    nt_w = pl.cdiv(Sw, tq)
    nt_d = pl.cdiv(Sd, tq)

    # Ragged lengths are handled by Pallas boundary clipping on cdiv grids:
    # out-of-bounds rows of a last tile read unspecified values and their
    # writes are either dropped at the array edge or land in a pad gap that is
    # sliced away below.  No jnp.pad of the inputs (extra HBM round trips).
    aligned = (Sw % tq == 0)
    Sw_pad = nt_w * tq
    if aligned:
        St_out = Sw + Sd            # exact concat layout; donut tail write-clips
    else:
        St_out = Sw_pad + nt_d * tq  # pad gap between segments, sliced at the end

    # Right-sized scoped-VMEM cap (double-buffered tiles + resident weights),
    # clamped to v7x's 64 MiB physical VMEM.
    act_sz = jnp.dtype(w_encoder_output.dtype).itemsize
    out_sz = jnp.dtype(out_dtype).itemsize
    w_sz = jnp.dtype(wi.dtype).itemsize
    est = (2 * tq * max(Din, D) * act_sz            # double-buffered input tile
           + 2 * tq * D * out_sz                    # double-buffered output tile
           + 2 * (Din * D + D * D + 2 * D) * w_sz   # resident weights + biases
           + 6 * tq * D * 4)                        # f32 accumulators / epilogue
    # TODO(synk): pipeline_mode=pl.Buffered(1) on the weight/bias specs would
    # drop their second buffer and free a few more MiB of headroom on v7x.
    vmem_limit = int(min(max(est + (8 << 20), 24 << 20), 64 << 20))
    compiler_params = pltpu.CompilerParams(
        dimension_semantics=("parallel", "parallel"),   # batch x seq tiles
        vmem_limit_bytes=vmem_limit,
    )

    # ---- pass 1: whisper segment -> rows [0, Sw) of the concat buffer -------
    buf = pl.pallas_call(
        functools.partial(_mix_gelu_kernel, gelu=gelu),
        out_shape=jax.ShapeDtypeStruct((B, St_out, D), out_dtype),
        grid_spec=pltpu.PrefetchScalarGridSpec(
            num_scalar_prefetch=0,
            grid=(B, nt_w),
            in_specs=[
                pl.BlockSpec((None, tq, D), lambda b, t: (b, t, 0)),
                pl.BlockSpec((D, D), lambda b, t: (0, 0)),      # Wmix resident
                pl.BlockSpec((1, D), lambda b, t: (0, 0)),      # bmix resident
            ],
            out_specs=pl.BlockSpec((None, tq, D), lambda b, t: (b, t, 0)),
        ),
        compiler_params=compiler_params,
    )(w_encoder_output, wm, bm)

    # ---- pass 2: donut segment, fused, written at row offset nt_w*tq of the
    # same buffer (input_output_aliases) -> image_linear intermediate and the
    # concat never touch HBM. --------------------------------------------------
    out = pl.pallas_call(
        functools.partial(_donut_fused_kernel, gelu=gelu),
        out_shape=jax.ShapeDtypeStruct((B, St_out, D), out_dtype),
        grid_spec=pltpu.PrefetchScalarGridSpec(
            num_scalar_prefetch=0,
            grid=(B, nt_d),
            in_specs=[
                pl.BlockSpec((None, tq, Din), lambda b, t: (b, t, 0)),
                pl.BlockSpec((Din, D), lambda b, t: (0, 0)),    # Wimg resident
                pl.BlockSpec((1, D), lambda b, t: (0, 0)),      # bimg resident
                pl.BlockSpec((D, D), lambda b, t: (0, 0)),      # Wmix resident
                pl.BlockSpec((1, D), lambda b, t: (0, 0)),      # bmix resident
                pl.BlockSpec(memory_space=pl.ANY),              # aliased buffer
            ],
            out_specs=pl.BlockSpec((None, tq, D),
                                   lambda b, t: (b, t + nt_w, 0)),
        ),
        input_output_aliases={5: 0},       # write into pass-1's buffer in place
        compiler_params=compiler_params,
    )(d_encoder_output, wi, bi, wm, bm, buf)

    if aligned:
        return out                          # exact concat layout, no extra copy
    # Sw is not a tile multiple: drop the pad gap between the two segments.
    # TODO(synk): masked stores / element-offset DMA would remove this copy.
    return jnp.concatenate([out[:, :Sw], out[:, Sw_pad:Sw_pad + Sd]], axis=1)


def trans_model_forward(d_encoder_output, w_encoder_output, labels, params, *,
                        tq=512, mxu_dtype=jnp.bfloat16, out_dtype=None,
                        gelu_impl="erf"):
    """Mirrors transModel.forward, taking the sub-encoder outputs as inputs."""
    del labels  # consumed only by the checkpoint-loaded whisper decoder
    # TODO(synk): donut encoder / whisper encoder / whisper decoder are loaded
    # from .pth checkpoints with no architecture in this module; their outputs
    # are taken as kernel inputs and the decoder call is omitted.
    return trans_encoder_mix(d_encoder_output, w_encoder_output, params,
                             tq=tq, mxu_dtype=mxu_dtype, out_dtype=out_dtype,
                             gelu_impl=gelu_impl)


# ----------------------------------------------------------------------------
# Deterministic parameter construction and smoke test
# ----------------------------------------------------------------------------
def init_params(key, d_img_in, d_model, dtype=jnp.float32):
    k1, k2, k3, k4 = jax.random.split(key, 4)
    s_img = 1.0 / jnp.sqrt(jnp.float32(d_img_in))
    s_mix = 1.0 / jnp.sqrt(jnp.float32(d_model))
    return {
        # pre_model.image_linear : Linear(d_img_in -> d_model)
        "image_linear_w": (jax.random.normal(k1, (d_img_in, d_model)) * s_img).astype(dtype),
        "image_linear_b": (jax.random.normal(k2, (1, d_model)) * 0.01).astype(dtype),
        # self.mix_linear : Linear(768 -> 768)  (d_model stands in for 768)
        "mix_linear_w": (jax.random.normal(k3, (d_model, d_model)) * s_mix).astype(dtype),
        "mix_linear_b": (jax.random.normal(k4, (1, d_model)) * 0.01).astype(dtype),
    }


if __name__ == "__main__":
    key = jax.random.PRNGKey(0)
    kd, kw, kl, kp = jax.random.split(key, 4)

    # small, hardware-friendly stand-ins (real model: d_model=768, donut
    # hidden=1024, seq lengths ~1200-4800)
    B, Sd, Sw = 2, 384, 256
    D_IMG_IN, D_MODEL = 256, 128

    d_enc = jax.random.normal(kd, (B, Sd, D_IMG_IN), dtype=jnp.float32)
    w_enc = jax.random.normal(kw, (B, Sw, D_MODEL), dtype=jnp.float32)
    labels = jax.random.randint(kl, (B, 8), 0, 100, dtype=jnp.int32)
    params = init_params(kp, D_IMG_IN, D_MODEL)

    # plain-JAX reference (same math, no Pallas)
    def ref(d, w, p, gelu="erf"):
        if gelu == "erf":
            g = lambda x: 0.5 * x * (1.0 + jax.scipy.special.erf(x * _INV_SQRT2))
        else:
            c = 0.7978845608028654
            g = lambda x: 0.5 * x * (1.0 + jnp.tanh(c * (x + 0.044715 * x ** 3)))
        dd = g(d @ p["image_linear_w"] + p["image_linear_b"][0])
        e = jnp.concatenate([w, dd], axis=1)
        return g(e @ p["mix_linear_w"] + p["mix_linear_b"][0])

    # 1) f32 MXU operands, tile-aligned Sw (direct concat-layout write path,
    #    no padding, no trailing copy), exact-erf GELU.
    fwd = jax.jit(functools.partial(trans_model_forward, params=params,
                                    tq=128, mxu_dtype=jnp.float32))
    out = jax.block_until_ready(fwd(d_enc, w_enc, labels))
    exp = ref(d_enc, w_enc, params)
    assert out.shape == (B, Sw + Sd, D_MODEL)
    assert jnp.allclose(out, exp, atol=1e-2, rtol=1e-2), float(
        jnp.max(jnp.abs(out - exp)))

    # 2) defaults: bf16 MXU operands + bf16 output, ragged sequence lengths
    #    (no input pad; boundary tiles clipped; trailing slice-concat).
    d_r, w_r = d_enc[:, : Sd - 56], w_enc[:, : Sw - 40]
    fwd_bf16 = jax.jit(functools.partial(trans_model_forward, params=params,
                                         out_dtype=jnp.bfloat16))
    out_r = jax.block_until_ready(fwd_bf16(d_r, w_r, labels))
    exp_r = ref(d_r, w_r, params)
    assert out_r.shape == exp_r.shape and out_r.dtype == jnp.bfloat16
    err_r = jnp.max(jnp.abs(out_r.astype(jnp.float32) - exp_r))
    assert jnp.allclose(out_r.astype(jnp.float32), exp_r,
                        atol=8e-2, rtol=8e-2), float(err_r)

    # 3) tanh-GELU epilogue (cheaper VALU path for v7x), bf16 operands.
    fwd_tanh = jax.jit(functools.partial(trans_model_forward, params=params,
                                         gelu_impl="tanh"))
    out_t = jax.block_until_ready(fwd_tanh(d_enc, w_enc, labels))
    exp_t = ref(d_enc, w_enc, params, gelu="tanh")
    assert out_t.shape == exp_t.shape
    assert jnp.allclose(out_t, exp_t, atol=8e-2, rtol=8e-2), float(
        jnp.max(jnp.abs(out_t - exp_t)))

    print("KERNEL_OK")
</pallas_src>

<mosaic_0001>
module attributes {stable_mosaic.version = 11 : i64} {
  func.func @_mix_gelu_kernel(%arg0: i32, %arg1: i32, %arg2: memref<1x128x128xf32, #tpu.memory_space<vmem>>, %arg3: memref<128x128xf32, #tpu.memory_space<vmem>>, %arg4: memref<1x128xf32, #tpu.memory_space<vmem>>, %arg5: memref<1x128x128xf32, #tpu.memory_space<vmem>>) attributes {dimension_semantics = [#tpu.dimension_semantics<parallel>, #tpu.dimension_semantics<parallel>], iteration_bounds = array<i64: 2, 2>, scalar_prefetch = 0 : i64, scratch_operands = 0 : i64, tpu.core_type = #tpu.core_type<tc>, window_params = [{transform_indices = @transform_0, window_bounds = array<i64: 1, 128, 128>}, {pipeline_mode = #tpu.pipeline_mode<synchronous>, transform_indices = @transform_1, window_bounds = array<i64: 128, 128>}, {pipeline_mode = #tpu.pipeline_mode<synchronous>, transform_indices = @transform_2, window_bounds = array<i64: 1, 128>}, {transform_indices = @transform_3, window_bounds = array<i64: 1, 128, 128>}]} {
    %c0 = arith.constant 0 : index
    %c0_0 = arith.constant 0 : index
    %c0_1 = arith.constant 0 : index
    %0 = vector.load %arg2[%c0, %c0_0, %c0_1] : memref<1x128x128xf32, #tpu.memory_space<vmem>>, vector<1x128x128xf32>
    %1 = vector.shape_cast %0 : vector<1x128x128xf32> to vector<128x128xf32>
    %c0_2 = arith.constant 0 : index
    %c0_3 = arith.constant 0 : index
    %2 = vector.load %arg3[%c0_2, %c0_3] : memref<128x128xf32, #tpu.memory_space<vmem>>, vector<128x128xf32>
    %cst = arith.constant dense<0.000000e+00> : vector<128x128xf32>
    %3 = tpu.matmul %1, %2, %cst {dimension_numbers = #tpu.dot_dimension_numbers<[1], [0], [0], [1], [0, 0, 1, 1], [], []>} : vector<128x128xf32>, vector<128x128xf32>, vector<128x128xf32> -> vector<128x128xf32>
    %c0_4 = arith.constant 0 : index
    %c0_5 = arith.constant 0 : index
    %4 = vector.load %arg4[%c0_4, %c0_5] : memref<1x128xf32, #tpu.memory_space<vmem>>, vector<1x128xf32>
    %5 = vector.broadcast %4 : vector<1x128xf32> to vector<128x128xf32>
    %6 = arith.addf %3, %5 : vector<128x128xf32>
    %cst_6 = arith.constant 5.000000e-01 : f32
    %7 = vector.broadcast %cst_6 : f32 to vector<128x128xf32>
    %8 = arith.mulf %7, %6 : vector<128x128xf32>
    %cst_7 = arith.constant 0.707106769 : f32
    %9 = vector.broadcast %cst_7 : f32 to vector<128x128xf32>
    %10 = arith.mulf %6, %9 : vector<128x128xf32>
    %11 = math.absf %10 : vector<128x128xf32>
    %cst_8 = arith.constant 0.327591091 : f32
    %12 = vector.broadcast %cst_8 : f32 to vector<128x128xf32>
    %13 = arith.mulf %12, %11 : vector<128x128xf32>
    %cst_9 = arith.constant 1.000000e+00 : f32
    %14 = vector.broadcast %cst_9 : f32 to vector<128x128xf32>
    %15 = arith.addf %14, %13 : vector<128x128xf32>
    %cst_10 = arith.constant 1.000000e+00 : f32
    %16 = vector.broadcast %cst_10 : f32 to vector<128x128xf32>
    %17 = arith.divf %16, %15 : vector<128x128xf32>
    %cst_11 = arith.constant 1.06140542 : f32
    %18 = vector.broadcast %cst_11 : f32 to vector<128x128xf32>
    %19 = arith.mulf %18, %17 : vector<128x128xf32>
    %cst_12 = arith.constant -1.45315206 : f32
    %20 = vector.broadcast %cst_12 : f32 to vector<128x128xf32>
    %21 = arith.addf %19, %20 : vector<128x128xf32>
    %22 = arith.mulf %21, %17 : vector<128x128xf32>
    %cst_13 = arith.constant 1.42141378 : f32
    %23 = vector.broadcast %cst_13 : f32 to vector<128x128xf32>
    %24 = arith.addf %22, %23 : vector<128x128xf32>
    %25 = arith.mulf %24, %17 : vector<128x128xf32>
    %cst_14 = arith.constant -0.284496725 : f32
    %26 = vector.broadcast %cst_14 : f32 to vector<128x128xf32>
    %27 = arith.addf %25, %26 : vector<128x128xf32>
    %28 = arith.mulf %27, %17 : vector<128x128xf32>
    %cst_15 = arith.constant 0.254829586 : f32
    %29 = vector.broadcast %cst_15 : f32 to vector<128x128xf32>
    %30 = arith.addf %28, %29 : vector<128x128xf32>
    %31 = arith.mulf %30, %17 : vector<128x128xf32>
    %cst_16 = arith.constant 0.000000e+00 : f32
    %32 = vector.broadcast %cst_16 : f32 to vector<128x128xf32>
    %33 = arith.subf %32, %11 : vector<128x128xf32>
    %34 = arith.mulf %33, %11 : vector<128x128xf32>
    %35 = math.exp %34 : vector<128x128xf32>
    %36 = arith.mulf %31, %35 : vector<128x128xf32>
    %cst_17 = arith.constant 1.000000e+00 : f32
    %37 = vector.broadcast %cst_17 : f32 to vector<128x128xf32>
    %38 = arith.subf %37, %36 : vector<128x128xf32>
    %cst_18 = arith.constant 0.000000e+00 : f32
    %39 = vector.broadcast %cst_18 : f32 to vector<128x128xf32>
    %40 = arith.cmpf oge, %10, %39 : vector<128x128xf32>
    %cst_19 = arith.constant 0.000000e+00 : f32
    %41 = vector.broadcast %cst_19 : f32 to vector<128x128xf32>
    %42 = arith.subf %41, %38 : vector<128x128xf32>
    %43 = arith.select %40, %38, %42 : vector<128x128xi1>, vector<128x128xf32>
    %cst_20 = arith.constant 1.000000e+00 : f32
    %44 = vector.broadcast %cst_20 : f32 to vector<128x128xf32>
    %45 = arith.addf %44, %43 : vector<128x128xf32>
    %46 = arith.mulf %8, %45 : vector<128x128xf32>
    %c0_21 = arith.constant 0 : index
    %c0_22 = arith.constant 0 : index
    %c0_23 = arith.constant 0 : index
    %47 = vector.load %arg5[%c0_21, %c0_22, %c0_23] : memref<1x128x128xf32, #tpu.memory_space<vmem>>, vector<1x128x128xf32>
    %48 = vector.shape_cast %47 : vector<1x128x128xf32> to vector<128x128xf32>
    %49 = vector.shape_cast %46 : vector<128x128xf32> to vector<1x128x128xf32>
    tpu.vector_store %arg5[%c0_21, %c0_22, %c0_23], %49 {strides = array<i32>} : memref<1x128x128xf32, #tpu.memory_space<vmem>>, vector<1x128x128xf32>,
    return
  }
  func.func @transform_0(%arg0: i32, %arg1: i32) -> (i32, i32, i32) {
    %c0_i32 = arith.constant 0 : i32
    %c0_i32_0 = arith.constant 0 : i32
    return %arg0, %arg1, %c0_i32 : i32, i32, i32
  }
  func.func @transform_1(%arg0: i32, %arg1: i32) -> (i32, i32) {
    %c0_i32 = arith.constant 0 : i32
    %c0_i32_0 = arith.constant 0 : i32
    %c0_i32_1 = arith.constant 0 : i32
    return %c0_i32, %c0_i32_0 : i32, i32
  }
  func.func @transform_2(%arg0: i32, %arg1: i32) -> (i32, i32) {
    %c0_i32 = arith.constant 0 : i32
    %c0_i32_0 = arith.constant 0 : i32
    %c0_i32_1 = arith.constant 0 : i32
    return %c0_i32, %c0_i32_0 : i32, i32
  }
  func.func @transform_3(%arg0: i32, %arg1: i32) -> (i32, i32, i32) {
    %c0_i32 = arith.constant 0 : i32
    %c0_i32_0 = arith.constant 0 : i32
    return %arg0, %arg1, %c0_i32 : i32, i32, i32
  }
}

module attributes {stable_mosaic.version = 11 : i64} {
  func.func @_donut_fused_kernel(%arg0: i32, %arg1: i32, %arg2: memref<1x128x256xf32, #tpu.memory_space<vmem>>, %arg3: memref<256x128xf32, #tpu.memory_space<vmem>>, %arg4: memref<1x128xf32, #tpu.memory_space<vmem>>, %arg5: memref<128x128xf32, #tpu.memory_space<vmem>>, %arg6: memref<1x128xf32, #tpu.memory_space<vmem>>, %arg7: memref<2x640x128xf32, #tpu.memory_space<any>>, %arg8: memref<1x128x128xf32, #tpu.memory_space<vmem>>) attributes {dimension_semantics = [#tpu.dimension_semantics<parallel>, #tpu.dimension_semantics<parallel>], iteration_bounds = array<i64: 2, 3>, scalar_prefetch = 0 : i64, scratch_operands = 0 : i64, tpu.core_type = #tpu.core_type<tc>, window_params = [{transform_indices = @transform_0, window_bounds = array<i64: 1, 128, 256>}, {pipeline_mode = #tpu.pipeline_mode<synchronous>, transform_indices = @transform_1, window_bounds = array<i64: 256, 128>}, {pipeline_mode = #tpu.pipeline_mode<synchronous>, transform_indices = @transform_2, window_bounds = array<i64: 1, 128>}, {pipeline_mode = #tpu.pipeline_mode<synchronous>, transform_indices = @transform_3, window_bounds = array<i64: 128, 128>}, {pipeline_mode = #tpu.pipeline_mode<synchronous>, transform_indices = @transform_4, window_bounds = array<i64: 1, 128>}, {}, {transform_indices = @transform_6, window_bounds = array<i64: 1, 128, 128>}]} {
    %c0 = arith.constant 0 : index
    %c0_0 = arith.constant 0 : index
    %c0_1 = arith.constant 0 : index
    %0 = vector.load %arg2[%c0, %c0_0, %c0_1] : memref<1x128x256xf32, #tpu.memory_space<vmem>>, vector<1x128x256xf32>
    %1 = vector.shape_cast %0 : vector<1x128x256xf32> to vector<128x256xf32>
    %c0_2 = arith.constant 0 : index
    %c0_3 = arith.constant 0 : index
    %2 = vector.load %arg3[%c0_2, %c0_3] : memref<256x128xf32, #tpu.memory_space<vmem>>, vector<256x128xf32>
    %cst = arith.constant dense<0.000000e+00> : vector<128x128xf32>
    %3 = tpu.matmul %1, %2, %cst {dimension_numbers = #tpu.dot_dimension_numbers<[1], [0], [0], [1], [0, 0, 1, 1], [], []>} : vector<128x256xf32>, vector<256x128xf32>, vector<128x128xf32> -> vector<128x128xf32>
    %c0_4 = arith.constant 0 : index
    %c0_5 = arith.constant 0 : index
    %4 = vector.load %arg4[%c0_4, %c0_5] : memref<1x128xf32, #tpu.memory_space<vmem>>, vector<1x128xf32>
    %5 = vector.broadcast %4 : vector<1x128xf32> to vector<128x128xf32>
    %6 = arith.addf %3, %5 : vector<128x128xf32>
    %cst_6 = arith.constant 5.000000e-01 : f32
    %7 = vector.broadcast %cst_6 : f32 to vector<128x128xf32>
    %8 = arith.mulf %7, %6 : vector<128x128xf32>
    %cst_7 = arith.constant 0.707106769 : f32
    %9 = vector.broadcast %cst_7 : f32 to vector<128x128xf32>
    %10 = arith.mulf %6, %9 : vector<128x128xf32>
    %11 = math.absf %10 : vector<128x128xf32>
    %cst_8 = arith.constant 0.327591091 : f32
    %12 = vector.broadcast %cst_8 : f32 to vector<128x128xf32>
    %13 = arith.mulf %12, %11 : vector<128x128xf32>
    %cst_9 = arith.constant 1.000000e+00 : f32
    %14 = vector.broadcast %cst_9 : f32 to vector<128x128xf32>
    %15 = arith.addf %14, %13 : vector<128x128xf32>
    %cst_10 = arith.constant 1.000000e+00 : f32
    %16 = vector.broadcast %cst_10 : f32 to vector<128x128xf32>
    %17 = arith.divf %16, %15 : vector<128x128xf32>
    %cst_11 = arith.constant 1.06140542 : f32
    %18 = vector.broadcast %cst_11 : f32 to vector<128x128xf32>
    %19 = arith.mulf %18, %17 : vector<128x128xf32>
    %cst_12 = arith.constant -1.45315206 : f32
    %20 = vector.broadcast %cst_12 : f32 to vector<128x128xf32>
    %21 = arith.addf %19, %20 : vector<128x128xf32>
    %22 = arith.mulf %21, %17 : vector<128x128xf32>
    %cst_13 = arith.constant 1.42141378 : f32
    %23 = vector.broadcast %cst_13 : f32 to vector<128x128xf32>
    %24 = arith.addf %22, %23 : vector<128x128xf32>
    %25 = arith.mulf %24, %17 : vector<128x128xf32>
    %cst_14 = arith.constant -0.284496725 : f32
    %26 = vector.broadcast %cst_14 : f32 to vector<128x128xf32>
    %27 = arith.addf %25, %26 : vector<128x128xf32>
    %28 = arith.mulf %27, %17 : vector<128x128xf32>
    %cst_15 = arith.constant 0.254829586 : f32
    %29 = vector.broadcast %cst_15 : f32 to vector<128x128xf32>
    %30 = arith.addf %28, %29 : vector<128x128xf32>
    %31 = arith.mulf %30, %17 : vector<128x128xf32>
    %cst_16 = arith.constant 0.000000e+00 : f32
    %32 = vector.broadcast %cst_16 : f32 to vector<128x128xf32>
    %33 = arith.subf %32, %11 : vector<128x128xf32>
    %34 = arith.mulf %33, %11 : vector<128x128xf32>
    %35 = math.exp %34 : vector<128x128xf32>
    %36 = arith.mulf %31, %35 : vector<128x128xf32>
    %cst_17 = arith.constant 1.000000e+00 : f32
    %37 = vector.broadcast %cst_17 : f32 to vector<128x128xf32>
    %38 = arith.subf %37, %36 : vector<128x128xf32>
    %cst_18 = arith.constant 0.000000e+00 : f32
    %39 = vector.broadcast %cst_18 : f32 to vector<128x128xf32>
    %40 = arith.cmpf oge, %10, %39 : vector<128x128xf32>
    %cst_19 = arith.constant 0.000000e+00 : f32
    %41 = vector.broadcast %cst_19 : f32 to vector<128x128xf32>
    %42 = arith.subf %41, %38 : vector<128x128xf32>
    %43 = arith.select %40, %38, %42 : vector<128x128xi1>, vector<128x128xf32>
    %cst_20 = arith.constant 1.000000e+00 : f32
    %44 = vector.broadcast %cst_20 : f32 to vector<128x128xf32>
    %45 = arith.addf %44, %43 : vector<128x128xf32>
    %46 = arith.mulf %8, %45 : vector<128x128xf32>
    %c0_21 = arith.constant 0 : index
    %c0_22 = arith.constant 0 : index
    %47 = vector.load %arg5[%c0_21, %c0_22] : memref<128x128xf32, #tpu.memory_space<vmem>>, vector<128x128xf32>
    %cst_23 = arith.constant dense<0.000000e+00> : vector<128x128xf32>
    %48 = tpu.matmul %46, %47, %cst_23 {dimension_numbers = #tpu.dot_dimension_numbers<[1], [0], [0], [1], [0, 0, 1, 1], [], []>} : vector<128x128xf32>, vector<128x128xf32>, vector<128x128xf32> -> vector<128x128xf32>
    %c0_24 = arith.constant 0 : index
    %c0_25 = arith.constant 0 : index
    %49 = vector.load %arg6[%c0_24, %c0_25] : memref<1x128xf32, #tpu.memory_space<vmem>>, vector<1x128xf32>
    %50 = vector.broadcast %49 : vector<1x128xf32> to vector<128x128xf32>
    %51 = arith.addf %48, %50 : vector<128x128xf32>
    %cst_26 = arith.constant 5.000000e-01 : f32
    %52 = vector.broadcast %cst_26 : f32 to vector<128x128xf32>
    %53 = arith.mulf %52, %51 : vector<128x128xf32>
    %cst_27 = arith.constant 0.707106769 : f32
    %54 = vector.broadcast %cst_27 : f32 to vector<128x128xf32>
    %55 = arith.mulf %51, %54 : vector<128x128xf32>
    %56 = math.absf %55 : vector<128x128xf32>
    %cst_28 = arith.constant 0.327591091 : f32
    %57 = vector.broadcast %cst_28 : f32 to vector<128x128xf32>
    %58 = arith.mulf %57, %56 : vector<128x128xf32>
    %cst_29 = arith.constant 1.000000e+00 : f32
    %59 = vector.broadcast %cst_29 : f32 to vector<128x128xf32>
    %60 = arith.addf %59, %58 : vector<128x128xf32>
    %cst_30 = arith.constant 1.000000e+00 : f32
    %61 = vector.broadcast %cst_30 : f32 to vector<128x128xf32>
    %62 = arith.divf %61, %60 : vector<128x128xf32>
    %cst_31 = arith.constant 1.06140542 : f32
    %63 = vector.broadcast %cst_31 : f32 to vector<128x128xf32>
    %64 = arith.mulf %63, %62 : vector<128x128xf32>
    %cst_32 = arith.constant -1.45315206 : f32
    %65 = vector.broadcast %cst_32 : f32 to vector<128x128xf32>
    %66 = arith.addf %64, %65 : vector<128x128xf32>
    %67 = arith.mulf %66, %62 : vector<128x128xf32>
    %cst_33 = arith.constant 1.42141378 : f32
    %68 = vector.broadcast %cst_33 : f32 to vector<128x128xf32>
    %69 = arith.addf %67, %68 : vector<128x128xf32>
    %70 = arith.mulf %69, %62 : vector<128x128xf32>
    %cst_34 = arith.constant -0.284496725 : f32
    %71 = vector.broadcast %cst_34 : f32 to vector<128x128xf32>
    %72 = arith.addf %70, %71 : vector<128x128xf32>
    %73 = arith.mulf %72, %62 : vector<128x128xf32>
    %cst_35 = arith.constant 0.254829586 : f32
    %74 = vector.broadcast %cst_35 : f32 to vector<128x128xf32>
    %75 = arith.addf %73, %74 : vector<128x128xf32>
    %76 = arith.mulf %75, %62 : vector<128x128xf32>
    %cst_36 = arith.constant 0.000000e+00 : f32
    %77 = vector.broadcast %cst_36 : f32 to vector<128x128xf32>
    %78 = arith.subf %77, %56 : vector<128x128xf32>
    %79 = arith.mulf %78, %56 : vector<128x128xf32>
    %80 = math.exp %79 : vector<128x128xf32>
    %81 = arith.mulf %76, %80 : vector<128x128xf32>
    %cst_37 = arith.constant 1.000000e+00 : f32
    %82 = vector.broadcast %cst_37 : f32 to vector<128x128xf32>
    %83 = arith.subf %82, %81 : vector<128x128xf32>
    %cst_38 = arith.constant 0.000000e+00 : f32
    %84 = vector.broadcast %cst_38 : f32 to vector<128x128xf32>
    %85 = arith.cmpf oge, %55, %84 : vector<128x128xf32>
    %cst_39 = arith.constant 0.000000e+00 : f32
    %86 = vector.broadcast %cst_39 : f32 to vector<128x128xf32>
    %87 = arith.subf %86, %83 : vector<128x128xf32>
    %88 = arith.select %85, %83, %87 : vector<128x128xi1>, vector<128x128xf32>
    %cst_40 = arith.constant 1.000000e+00 : f32
    %89 = vector.broadcast %cst_40 : f32 to vector<128x128xf32>
    %90 = arith.addf %89, %88 : vector<128x128xf32>
    %91 = arith.mulf %53, %90 : vector<128x128xf32>
    %c0_41 = arith.constant 0 : index
    %c0_42 = arith.constant 0 : index
    %c0_43 = arith.constant 0 : index
    %92 = vector.load %arg8[%c0_41, %c0_42, %c0_43] : memref<1x128x128xf32, #tpu.memory_space<vmem>>, vector<1x128x128xf32>
    %93 = vector.shape_cast %92 : vector<1x128x128xf32> to vector<128x128xf32>
    %94 = vector.shape_cast %91 : vector<128x128xf32> to vector<1x128x128xf32>
    tpu.vector_store %arg8[%c0_41, %c0_42, %c0_43], %94 {strides = array<i32>} : memref<1x128x128xf32, #tpu.memory_space<vmem>>, vector<1x128x128xf32>,
    return
  }
  func.func @transform_0(%arg0: i32, %arg1: i32) -> (i32, i32, i32) {
    %c0_i32 = arith.constant 0 : i32
    %c0_i32_0 = arith.constant 0 : i32
    return %arg0, %arg1, %c0_i32 : i32, i32, i32
  }
  func.func @transform_1(%arg0: i32, %arg1: i32) -> (i32, i32) {
    %c0_i32 = arith.constant 0 : i32
    %c0_i32_0 = arith.constant 0 : i32
    %c0_i32_1 = arith.constant 0 : i32
    return %c0_i32, %c0_i32_0 : i32, i32
  }
  func.func @transform_2(%arg0: i32, %arg1: i32) -> (i32, i32) {
    %c0_i32 = arith.constant 0 : i32
    %c0_i32_0 = arith.constant 0 : i32
    %c0_i32_1 = arith.constant 0 : i32
    return %c0_i32, %c0_i32_0 : i32, i32
  }
  func.func @transform_3(%arg0: i32, %arg1: i32) -> (i32, i32) {
    %c0_i32 = arith.constant 0 : i32
    %c0_i32_0 = arith.constant 0 : i32
    %c0_i32_1 = arith.constant 0 : i32
    return %c0_i32, %c0_i32_0 : i32, i32
  }
  func.func @transform_4(%arg0: i32, %arg1: i32) -> (i32, i32) {
    %c0_i32 = arith.constant 0 : i32
    %c0_i32_0 = arith.constant 0 : i32
    %c0_i32_1 = arith.constant 0 : i32
    return %c0_i32, %c0_i32_0 : i32, i32
  }
  func.func @transform_6(%arg0: i32, %arg1: i32) -> (i32, i32, i32) {
    %c2_i32 = arith.constant 2 : i32
    %0 = arith.addi %arg1, %c2_i32 : i32
    %c0_i32 = arith.constant 0 : i32
    %c0_i32_0 = arith.constant 0 : i32
    return %arg0, %0, %c0_i32 : i32, i32, i32
  }
}

</mosaic_0001>

<llo_original>
// kernel: trans_model_forward.2
$region0: #{trans_model_forward.2}
  #allocation0 [shape = 'u32[]', space=smem, size = 0x4, offset = 0x4, fixed_abs, tag = 'smem constant byte address 0x4 - core index']
  #allocation1 [shape = 'u32[72,128]{1,0:T(1,128)}', space=vmem, size = 0x9000, scoped, tag = 'internal scratch']
  %s0 = inlined_call_operand.hbm [shape: f32[2,256,128], index: 0, kind: input, shape index: {}]
  %s1 = inlined_call_operand.hbm [shape: f32[128,128], index: 1, kind: input, shape index: {}]
  %s2 = inlined_call_operand.vmem [shape: f32[1,128], index: 2, kind: input, shape index: {}]
  %s3 = inlined_call_operand.hbm [shape: f32[2,640,128], index: 3, kind: output, shape index: {}]
  %s4 = sld [smem:[#allocation0]]
  $region53: #{trans_model_forward.2} parent=0
    _
  %s6 = ssub.s32 1, %s4
  %s7 = scalar_select 0, %s6, %s4
  $region1: #{trans_model_forward.2} parent=0
    #allocation2 [shape = 'u8[131072]{0}', space=vmem, size = 0x20000, scoped, tag = 'input window, operand 0']
    #allocation3 [shape = 's32[2]{0}', space=sflag, size = 0x8, scoped, tag = 'scoped memory for trans_model_forward.2']
    #allocation4 [shape = 's32[2]{0}', space=sflag, size = 0x8, scoped, tag = 'scoped memory for trans_model_forward.2']
    #allocation5 [shape = 'u8[65536]{0}', space=vmem, size = 0x10000, scoped, tag = 'input window, operand 1, single buffered']
    #allocation6 [shape = 's32[1]{0}', space=sflag, size = 0x4, scoped, tag = 'scoped memory for trans_model_forward.2']
    #allocation7 [shape = 'u8[131072]{0}', space=vmem, size = 0x20000, scoped, tag = 'output window, operand 0']
    %8 = vsyncpa [#allocation3], 0
    %s9 = scalar_lea.sflag [#allocation3], 1
    %10 = vsyncpa %s9, 0
    %11 = vsyncpa [#allocation6], 0
    %12 = vsyncpa [#allocation4], 0
    %s13 = scalar_lea.sflag [#allocation4], 1
    %14 = vsyncpa %s13, 0
    loop: start=0, step=1, limit=6
    $region2: #{trans_model_forward.2} parent=1 // loop_pre_header
      _
    $region3: #{trans_model_forward.2} parent=1 // loop_header
      %s16 = sphi 0, %s20
      %p17 = scmp.ge.s32.totalorder %s16, 6
      %s23 = sphi 0, %s35
      %s24 = sphi 0, %s31
      %s25 = sphi 0, %s23
      %s26 = sphi 0, %s24
      %s27 = sphi 0, %s25
      %s28 = sphi 0, %s26
      %s40 = sphi 0, %s42
      %s43 = sphi 0, %s40
      %s44 = sphi 0, %s43
      %s60 = sphi 0, %s44
      %s64 = sphi 0, %s64
      %s66 = sphi 0, %s64
      %s67 = sphi 0, %s66
      %s81 = sphi 0, %s67
      %s85 = sphi 0, %s85
      %s87 = sphi 0, %s85
      %s88 = sphi 0, %s87
      %s102 = sphi 0, %s88
      %s110 = sphi 0, %s112
      %s113 = sphi 0, %s110
      %s114 = sphi 0, %s113
      %s130 = sphi 0, %s114
    $region4: #{trans_model_forward.2} parent=1 // loop_header_branch
      %19 = sbr.rel (%p17) target = $region8
    $region5: #{trans_model_forward.2} parent=1 // loop_body
      %s21 = ssub.s32 %s16, 1
      %s22 = ssub.s32 %s16, 2
      %s29 = sadd.s32 1, %s24
      %p30 = scmp.ge.s32.totalorder %s29, 2
      %s31 = scalar_select %p30, 0, %s29
      %s32 = sadd.s32 1, %s23
      %s33 = scalar_select %p30, %s32, %s23
      %p34 = scmp.ge.s32.totalorder %s33, 2
      %s35 = scalar_select %p34, 0, %s33
      %s36 = ssub.s32 %s23, %s35
      %s37 = ssub.s32 %s24, %s31
      %s38 = sor.u32 %s36, %s37
      %p39 = scmp.eq.s32.totalorder %s38, 0
      %s41 = sadd.s32 %s40, 1
      %s42 = scalar_select %p39, %s40, %s41
      %p45 = pneg %p39
      %p46 = scmp.eq.s32.totalorder %s16, 3
      %p47 = por %p45, %p46
      %p48 = scmp.ne.s32.totalorder %s40, %s43
      %p49 = scmp.eq.s32.totalorder %s16, 0
      %p50 = por %p48, %p49
      %p51 = scmp.ne.s32.totalorder %s40, %s43
      %p52 = scmp.eq.s32.totalorder %s21, 3
      %p53 = por %p51, %p52
      %p54 = scmp.ne.s32.totalorder %s43, %s44
      %p55 = scmp.eq.s32.totalorder %s21, 0
      %p56 = por %p54, %p55
      %p57 = scmp.ne.s32.totalorder %s43, %s44
      %p58 = scmp.eq.s32.totalorder %s22, 3
      %p59 = por %p57, %p58
      %p61 = scmp.ne.s32.totalorder %s44, %s60
      %p62 = scmp.eq.s32.totalorder %s22, 0
      %p63 = por %p61, %p62
      %s65 = sadd.s32 %s64, 1
      %p68 = scmp.eq.s32.totalorder %s16, 3
      %p69 = scmp.ne.s32.totalorder %s64, %s66
      %p70 = scmp.eq.s32.totalorder %s16, 0
      %p71 = por %p69, %p70
      %p72 = scmp.ne.s32.totalorder %s64, %s66
      %p73 = scmp.eq.s32.totalorder %s21, 3
      %p74 = por %p72, %p73
      %p75 = scmp.ne.s32.totalorder %s66, %s67
      %p76 = scmp.eq.s32.totalorder %s21, 0
      %p77 = por %p75, %p76
      %p78 = scmp.ne.s32.totalorder %s66, %s67
      %p79 = scmp.eq.s32.totalorder %s22, 3
      %p80 = por %p78, %p79
      %p82 = scmp.ne.s32.totalorder %s67, %s81
      %p83 = scmp.eq.s32.totalorder %s22, 0
      %p84 = por %p82, %p83
      %s86 = sadd.s32 %s85, 1
      %p89 = scmp.eq.s32.totalorder %s16, 3
      %p90 = scmp.ne.s32.totalorder %s85, %s87
      %p91 = scmp.eq.s32.totalorder %s16, 0
      %p92 = por %p90, %p91
      %p93 = scmp.ne.s32.totalorder %s85, %s87
      %p94 = scmp.eq.s32.totalorder %s21, 3
      %p95 = por %p93, %p94
      %p96 = scmp.ne.s32.totalorder %s87, %s88
      %p97 = scmp.eq.s32.totalorder %s21, 0
      %p98 = por %p96, %p97
      %p99 = scmp.ne.s32.totalorder %s87, %s88
      %p100 = scmp.eq.s32.totalorder %s22, 3
      %p101 = por %p99, %p100
      %p103 = scmp.ne.s32.totalorder %s88, %s102
      %p104 = scmp.eq.s32.totalorder %s22, 0
      %p105 = por %p103, %p104
      %s106 = ssub.s32 %s23, %s35
      %s107 = ssub.s32 %s24, %s31
      %s108 = sor.u32 %s106, %s107
      %p109 = scmp.eq.s32.totalorder %s108, 0
      %s111 = sadd.s32 %s110, 1
      %s112 = scalar_select %p109, %s110, %s111
      %p115 = pneg %p109
      %p116 = scmp.eq.s32.totalorder %s16, 3
      %p117 = por %p115, %p116
      %p118 = scmp.ne.s32.totalorder %s110, %s113
      %p119 = scmp.eq.s32.totalorder %s16, 0
      %p120 = por %p118, %p119
      %p121 = scmp.ne.s32.totalorder %s110, %s113
      %p122 = scmp.eq.s32.totalorder %s21, 3
      %p123 = por %p121, %p122
      %p124 = scmp.ne.s32.totalorder %s113, %s114
      %p125 = scmp.eq.s32.totalorder %s21, 0
      %p126 = por %p124, %p125
      %p127 = scmp.ne.s32.totalorder %s113, %s114
      %p128 = scmp.eq.s32.totalorder %s22, 3
      %p129 = por %p127, %p128
      %p131 = scmp.ne.s32.totalorder %s114, %s130
      %p132 = scmp.eq.s32.totalorder %s22, 0
      %p133 = por %p131, %p132
      %p134 = scmp.le.s32.totalorder 1, %s16
      %p135 = scmp.lt.s32.totalorder %s16, 5
      %p136 = pnand %p134, %p135
      %p137 = pneg %p136
      // Predicated region
      $region9: #{trans_model_forward.2} parent=5 // pred_check
        _
      $region10: #{trans_model_forward.2} parent=5 // pred_check_branch
        %139 = sbr.rel (%p136) target = $region12
      $region11: #{trans_model_forward.2} parent=5 // pred_region
        %s140 = ssub.s32 %s16, 1
        // Predicated region
        $region13: #{trans_model_forward.2} parent=11 // pred_check
          %p141 = pneg %p77
        $region14: #{trans_model_forward.2} parent=11 // pred_check_branch
          %143 = sbr.rel (%p141) target = $region16
        $region15: #{trans_model_forward.2} parent=11 // pred_region
          %145 = vsyncadd [#allocation6], 0
          %s146 = sshll.u32 %s1, 4
          %s147 = int_to_ptr.hbm [resolvable:$true] %s146
          %s148 = sshll.u32 [#allocation5], 4
          %s149 = int_to_ptr.vmem [resolvable:$true] %s148
          %154 = dma.hbm_to_vmem [thread:$0]  %s147, 2048, %s149, [#allocation6], 128, 128, 8
        $region16: #{trans_model_forward.2} parent=11 // pred_fallthru
          _
        // Predicated region
        $region17: #{trans_model_forward.2} parent=11 // pred_check
          %p155 = pneg %p98
        $region18: #{trans_model_forward.2} parent=11 // pred_check_branch
          %157 = sbr.rel (%p155) target = $region20
        $region19: #{trans_model_forward.2} parent=11 // pred_region
          _
        $region20: #{trans_model_forward.2} parent=11 // pred_fallthru
          _
      $region12: #{trans_model_forward.2} parent=5 // pred_fallthru
        _
      %p158 = scmp.lt.s32.totalorder %s16, 4
      // Predicated region
      $region21: #{trans_model_forward.2} parent=5 // pred_check
        %p159 = pneg %p158
      $region22: #{trans_model_forward.2} parent=5 // pred_check_branch
        %161 = sbr.rel (%p159) target = $region24
      $region23: #{trans_model_forward.2} parent=5 // pred_region
        // Predicated region
        $region25: #{trans_model_forward.2} parent=23 // pred_check
          %p162 = pneg %p50
        $region26: #{trans_model_forward.2} parent=23 // pred_check_branch
          %164 = sbr.rel (%p162) target = $region28
        $region27: #{trans_model_forward.2} parent=23 // pred_region
          %s165 = sand.u32 %s40, 1
          %s166 = scalar_lea.sflag [#allocation3], %s165
          %s167 = sand.u32 %s40, 1
          %s168 = smul.addr %s167, 128
          %s169 = scalar_lea.vmem [#allocation2], %s168
          %s170 = smul.u32 16, %s24
          %172 = vsyncadd %s166, 0
          %s173 = smul.addr %s23, 32
          %s174 = sadd.s32 %s170, %s173
          %s175 = smul.addr %s174, 8
          %s176 = scalar_lea.hbm %s0, %s175
          %s177 = sshll.u32 %s176, 4
          %s178 = int_to_ptr.hbm [resolvable:$true] %s177
          %s179 = sshll.u32 %s169, 4
          %s180 = int_to_ptr.vmem [resolvable:$true] %s179
          %185 = dma.hbm_to_vmem [thread:$0]  %s178, 2048, %s180, %s166, 128, 128, 8
        $region28: #{trans_model_forward.2} parent=23 // pred_fallthru
          _
      $region24: #{trans_model_forward.2} parent=5 // pred_fallthru
        _
      %p186 = scmp.le.s32.totalorder 1, %s16
      %p187 = scmp.lt.s32.totalorder %s16, 5
      %p188 = pnand %p186, %p187
      %p189 = pneg %p188
      // Predicated region
      $region29: #{trans_model_forward.2} parent=5 // pred_check
        _
      $region30: #{trans_model_forward.2} parent=5 // pred_check_branch
        %191 = sbr.rel (%p188) target = $region32
      $region31: #{trans_model_forward.2} parent=5 // pred_region
        %s192 = ssub.s32 %s16, 1
        %s193 = sand.u32 %s43, 1
        %s194 = scalar_lea.sflag [#allocation3], %s193
        %s195 = sand.u32 %s43, 1
        %s196 = smul.addr %s195, 128
        %s197 = scalar_lea.vmem [#allocation2], %s196
        // Predicated region
        $region33: #{trans_model_forward.2} parent=31 // pred_check
          %p198 = pneg %p56
        $region34: #{trans_model_forward.2} parent=31 // pred_check_branch
          %200 = sbr.rel (%p198) target = $region36
        $region35: #{trans_model_forward.2} parent=31 // pred_region
          %202 = dma.done %s194, 2048
        $region36: #{trans_model_forward.2} parent=31 // pred_fallthru
          _
        // Predicated region
        $region37: #{trans_model_forward.2} parent=31 // pred_check
          %p203 = pneg %p77
        $region38: #{trans_model_forward.2} parent=31 // pred_check_branch
          %205 = sbr.rel (%p203) target = $region40
        $region39: #{trans_model_forward.2} parent=31 // pred_region
          %207 = dma.done [#allocation6], 2048
        $region40: #{trans_model_forward.2} parent=31 // pred_fallthru
          _
        %s208 = sand.u32 %s43, 1
        %s209 = scalar_lea.sflag [#allocation3], %s208
        %s210 = sand.u32 %s43, 1
        %s211 = smul.addr %s210, 128
        %s212 = scalar_lea.vmem [#allocation2], %s211
        %p213 = pneg %p56
        %p214 = pneg %p53
        %p215 = pneg %p77
        %p216 = pneg %p74
        %p217 = pneg %p98
        %p218 = pneg %p95
        %p219 = pneg %p126
        %p220 = pneg %p123
        %s221 = sand.u32 %s113, 1
        %s222 = scalar_lea.sflag [#allocation4], %s221
        %s223 = sand.u32 %s113, 1
        %s224 = smul.addr %s223, 128
        %s225 = scalar_lea.vmem [#allocation7], %s224
        %s226 = smul.u32 16, %s26
        %s227 = smul.u32 16, %s26
        %v228 = vld [vmem:[%s197] sm:$0xff]
        %v229 = vld [vmem:[%s197 + $0x8] sm:$0xff]
        %v230 = vld [vmem:[%s197 + $0x10] sm:$0xff]
        %v231 = vld [vmem:[%s197 + $0x18] sm:$0xff]
        %v232 = vld [vmem:[%s197 + $0x20] sm:$0xff]
        %v233 = vld [vmem:[%s197 + $0x28] sm:$0xff]
        %v234 = vld [vmem:[%s197 + $0x30] sm:$0xff]
        %v235 = vld [vmem:[%s197 + $0x38] sm:$0xff]
        %v236 = vld [vmem:[%s197 + $0x40] sm:$0xff]
        %v237 = vld [vmem:[%s197 + $0x48] sm:$0xff]
        %v238 = vld [vmem:[%s197 + $0x50] sm:$0xff]
        %v239 = vld [vmem:[%s197 + $0x58] sm:$0xff]
        %v240 = vld [vmem:[%s197 + $0x60] sm:$0xff]
        %v241 = vld [vmem:[%s197 + $0x68] sm:$0xff]
        %v242 = vld [vmem:[%s197 + $0x70] sm:$0xff]
        %v243 = vld [vmem:[%s197 + $0x78] sm:$0xff]
        %v244 = vld [vmem:[#allocation5] sm:$0xff]
        %v245 = vld [vmem:[#allocation5 + $0x8] sm:$0xff]
        %v246 = vld [vmem:[#allocation5 + $0x10] sm:$0xff]
        %v247 = vld [vmem:[#allocation5 + $0x18] sm:$0xff]
        %v248 = vld [vmem:[#allocation5 + $0x20] sm:$0xff]
        %v249 = vld [vmem:[#allocation5 + $0x28] sm:$0xff]
        %v250 = vld [vmem:[#allocation5 + $0x30] sm:$0xff]
        %v251 = vld [vmem:[#allocation5 + $0x38] sm:$0xff]
        %v252 = vld [vmem:[#allocation5 + $0x40] sm:$0xff]
        %v253 = vld [vmem:[#allocation5 + $0x48] sm:$0xff]
        %v254 = vld [vmem:[#allocation5 + $0x50] sm:$0xff]
        %v255 = vld [vmem:[#allocation5 + $0x58] sm:$0xff]
        %v256 = vld [vmem:[#allocation5 + $0x60] sm:$0xff]
        %v257 = vld [vmem:[#allocation5 + $0x68] sm:$0xff]
        %v258 = vld [vmem:[#allocation5 + $0x70] sm:$0xff]
        %v259 = vld [vmem:[#allocation5 + $0x78] sm:$0xff]
        %v260 = vld [vmem:[%s2] sm:$0x1]
        %v262 = vperm.slane %v260, 0
        %264 = vmatpush.msra.mxu0 %v259
        %265 = vmatpush.msra.mxu0 %v258
        %266 = vmatpush.msra.mxu0 %v257
        %267 = vmatpush.msra.mxu0 %v256
        %268 = vmatpush.msra.mxu0 %v255
        %269 = vmatpush.msra.mxu0 %v254
        %270 = vmatpush.msra.mxu0 %v253
        %271 = vmatpush.msra.mxu0 %v252
        %272 = vmatpush.msra.mxu0 %v251
        %273 = vmatpush.msra.mxu0 %v250
        %274 = vmatpush.msra.mxu0 %v249
        %275 = vmatpush.msra.mxu0 %v248
        %276 = vmatpush.msra.mxu0 %v247
        %277 = vmatpush.msra.mxu0 %v246
        %278 = vmatpush.msra.mxu0 %v245
        %279 = vmatpush.msra.mxu0 %v244
        %280 = vmatmul.f32.gmra.mxu0 %v228
        %v281 = vpop.f32.mrf.mxu0
        %v282 = vadd.f32 %v262, %v281
        %283 = vmatmul.f32.gmra.mxu0 %v229
        %v284 = vpop.f32.mrf.mxu0
        %v285 = vadd.f32 %v262, %v284
        %286 = vmatmul.f32.gmra.mxu0 %v230
        %v287 = vpop.f32.mrf.mxu0
        %v288 = vadd.f32 %v262, %v287
        %289 = vmatmul.f32.gmra.mxu0 %v231
        %v290 = vpop.f32.mrf.mxu0
        %v291 = vadd.f32 %v262, %v290
        %292 = vmatmul.f32.gmra.mxu0 %v232
        %v293 = vpop.f32.mrf.mxu0
        %v294 = vadd.f32 %v262, %v293
        %295 = vmatmul.f32.gmra.mxu0 %v233
        %v296 = vpop.f32.mrf.mxu0
        %v297 = vadd.f32 %v262, %v296
        %298 = vmatmul.f32.gmra.mxu0 %v234
        %v299 = vpop.f32.mrf.mxu0
        %v300 = vadd.f32 %v262, %v299
        %301 = vmatmul.f32.gmra.mxu0 %v235
        %v302 = vpop.f32.mrf.mxu0
        %v303 = vadd.f32 %v262, %v302
        %304 = vmatmul.f32.gmra.mxu0 %v236
        %v305 = vpop.f32.mrf.mxu0
        %v306 = vadd.f32 %v262, %v305
        %307 = vmatmul.f32.gmra.mxu0 %v237
        %v308 = vpop.f32.mrf.mxu0
        %v309 = vadd.f32 %v262, %v308
        %310 = vmatmul.f32.gmra.mxu0 %v238
        %v311 = vpop.f32.mrf.mxu0
        %v312 = vadd.f32 %v262, %v311
        %313 = vmatmul.f32.gmra.mxu0 %v239
        %v314 = vpop.f32.mrf.mxu0
        %v315 = vadd.f32 %v262, %v314
        %316 = vmatmul.f32.gmra.mxu0 %v240
        %v317 = vpop.f32.mrf.mxu0
        %v318 = vadd.f32 %v262, %v317
        %319 = vmatmul.f32.gmra.mxu0 %v241
        %v320 = vpop.f32.mrf.mxu0
        %v321 = vadd.f32 %v262, %v320
        %322 = vmatmul.f32.gmra.mxu0 %v242
        %v323 = vpop.f32.mrf.mxu0
        %v324 = vadd.f32 %v262, %v323
        %325 = vmatmul.f32.gmra.mxu0 %v243
        %v326 = vpop.f32.mrf.mxu0
        %v327 = vadd.f32 %v262, %v326
        %328 = vdwg.mxu0
        %v329 = vmul.f32 %v282, 0.5
        %v330 = vmul.f32 %v285, 0.5
        %v331 = vmul.f32 %v288, 0.5
        %v332 = vmul.f32 %v291, 0.5
        %v333 = vmul.f32 %v294, 0.5
        %v334 = vmul.f32 %v297, 0.5
        %v335 = vmul.f32 %v300, 0.5
        %v336 = vmul.f32 %v303, 0.5
        %v337 = vmul.f32 %v306, 0.5
        %v338 = vmul.f32 %v309, 0.5
        %v339 = vmul.f32 %v312, 0.5
        %v340 = vmul.f32 %v315, 0.5
        %v341 = vmul.f32 %v318, 0.5
        %v342 = vmul.f32 %v321, 0.5
        %v343 = vmul.f32 %v324, 0.5
        %v344 = vmul.f32 %v327, 0.5
        %v345 = vmul.f32 %v282, 0.70710677
        %v346 = vmul.f32 %v285, 0.70710677
        %v347 = vmul.f32 %v288, 0.70710677
        %v348 = vmul.f32 %v291, 0.70710677
        %v349 = vmul.f32 %v294, 0.70710677
        %v350 = vmul.f32 %v297, 0.70710677
        %v351 = vmul.f32 %v300, 0.70710677
        %v352 = vmul.f32 %v303, 0.70710677
        %v353 = vmul.f32 %v306, 0.70710677
        %v354 = vmul.f32 %v309, 0.70710677
        %v355 = vmul.f32 %v312, 0.70710677
        %v356 = vmul.f32 %v315, 0.70710677
        %v357 = vmul.f32 %v318, 0.70710677
        %v358 = vmul.f32 %v321, 0.70710677
        %v359 = vmul.f32 %v324, 0.70710677
        %v360 = vmul.f32 %v327, 0.70710677
        %v361 = vand.u32 2147483647, %v345
        %v362 = vand.u32 2147483647, %v346
        %v363 = vand.u32 2147483647, %v347
        %v364 = vand.u32 2147483647, %v348
        %v365 = vand.u32 2147483647, %v349
        %v366 = vand.u32 2147483647, %v350
        %v367 = vand.u32 2147483647, %v351
        %v368 = vand.u32 2147483647, %v352
        %v369 = vand.u32 2147483647, %v353
        %v370 = vand.u32 2147483647, %v354
        %v371 = vand.u32 2147483647, %v355
        %v372 = vand.u32 2147483647, %v356
        %v373 = vand.u32 2147483647, %v357
        %v374 = vand.u32 2147483647, %v358
        %v375 = vand.u32 2147483647, %v359
        %v376 = vand.u32 2147483647, %v360
        %v377 = vmul.f32 %v361, 0.3275911
        %v378 = vmul.f32 %v362, 0.3275911
        %v379 = vmul.f32 %v363, 0.3275911
        %v380 = vmul.f32 %v364, 0.3275911
        %v381 = vmul.f32 %v365, 0.3275911
        %v382 = vmul.f32 %v366, 0.3275911
        %v383 = vmul.f32 %v367, 0.3275911
        %v384 = vmul.f32 %v368, 0.3275911
        %v385 = vmul.f32 %v369, 0.3275911
        %v386 = vmul.f32 %v370, 0.3275911
        %v387 = vmul.f32 %v371, 0.3275911
        %v388 = vmul.f32 %v372, 0.3275911
        %v389 = vmul.f32 %v373, 0.3275911
        %v390 = vmul.f32 %v374, 0.3275911
        %v391 = vmul.f32 %v375, 0.3275911
        %v392 = vmul.f32 %v376, 0.3275911
        %v393 = vadd.f32 %v377, 1.0
        %v394 = vadd.f32 %v378, 1.0
        %v395 = vadd.f32 %v379, 1.0
        %v396 = vadd.f32 %v380, 1.0
        %v397 = vadd.f32 %v381, 1.0
        %v398 = vadd.f32 %v382, 1.0
        %v399 = vadd.f32 %v383, 1.0
        %v400 = vadd.f32 %v384, 1.0
        %v401 = vadd.f32 %v385, 1.0
        %v402 = vadd.f32 %v386, 1.0
        %v403 = vadd.f32 %v387, 1.0
        %v404 = vadd.f32 %v388, 1.0
        %v405 = vadd.f32 %v389, 1.0
        %v406 = vadd.f32 %v390, 1.0
        %v407 = vadd.f32 %v391, 1.0
        %v408 = vadd.f32 %v392, 1.0
        %v409 = vrcp.pop %v393
        %v410 = vmul.f32 %v393, %v409
        %v411 = vsub.f32 1.0, %v410
        %v412 = vmul.f32 %v409, %v411
        %v413 = vadd.f32 %v409, %v412
        %vm414 = vweird.f32 %v393
        %vm415 = vweird.f32 %v409
        %vm416 = vmor %vm414, %vm415
        %v417 = vsel %vm416, %v409, %v413
        %v418 = vand.u32 2147483647, %v393
        %vm419 = vcmp.eq.f32.partialorder %v418, 8.507059e+37
        %v420 = vand.u32 %v393, 2147483648
        %v421 = vor.u32 1.1754944e-38, %v420
        %v422 = vsel %vm419, %v421, %v417
        %v423 = vmul.f32 1.0, %v422
        %v424 = vrcp.pop %v394
        %v425 = vmul.f32 %v394, %v424
        %v426 = vsub.f32 1.0, %v425
        %v427 = vmul.f32 %v424, %v426
        %v428 = vadd.f32 %v424, %v427
        %vm429 = vweird.f32 %v394
        %vm430 = vweird.f32 %v424
        %vm431 = vmor %vm429, %vm430
        %v432 = vsel %vm431, %v424, %v428
        %v433 = vand.u32 2147483647, %v394
        %vm434 = vcmp.eq.f32.partialorder %v433, 8.507059e+37
        %v435 = vand.u32 %v394, 2147483648
        %v436 = vor.u32 1.1754944e-38, %v435
        %v437 = vsel %vm434, %v436, %v432
        %v438 = vmul.f32 1.0, %v437
        %v439 = vrcp.pop %v395
        %v440 = vmul.f32 %v395, %v439
        %v441 = vsub.f32 1.0, %v440
        %v442 = vmul.f32 %v439, %v441
        %v443 = vadd.f32 %v439, %v442
        %vm444 = vweird.f32 %v395
        %vm445 = vweird.f32 %v439
        %vm446 = vmor %vm444, %vm445
        %v447 = vsel %vm446, %v439, %v443
        %v448 = vand.u32 2147483647, %v395
        %vm449 = vcmp.eq.f32.partialorder %v448, 8.507059e+37
        %v450 = vand.u32 %v395, 2147483648
        %v451 = vor.u32 1.1754944e-38, %v450
        %v452 = vsel %vm449, %v451, %v447
        %v453 = vmul.f32 1.0, %v452
        %v454 = vrcp.pop %v396
        %v455 = vmul.f32 %v396, %v454
        %v456 = vsub.f32 1.0, %v455
        %v457 = vmul.f32 %v454, %v456
        %v458 = vadd.f32 %v454, %v457
        %vm459 = vweird.f32 %v396
        %vm460 = vweird.f32 %v454
        %vm461 = vmor %vm459, %vm460
        %v462 = vsel %vm461, %v454, %v458
        %v463 = vand.u32 2147483647, %v396
        %vm464 = vcmp.eq.f32.partialorder %v463, 8.507059e+37
        %v465 = vand.u32 %v396, 2147483648
        %v466 = vor.u32 1.1754944e-38, %v465
        %v467 = vsel %vm464, %v466, %v462
        %v468 = vmul.f32 1.0, %v467
        %v469 = vrcp.pop %v397
        %v470 = vmul.f32 %v397, %v469
        %v471 = vsub.f32 1.0, %v470
        %v472 = vmul.f32 %v469, %v471
        %v473 = vadd.f32 %v469, %v472
        %vm474 = vweird.f32 %v397
        %vm475 = vweird.f32 %v469
        %vm476 = vmor %vm474, %vm475
        %v477 = vsel %vm476, %v469, %v473
        %v478 = vand.u32 2147483647, %v397
        %vm479 = vcmp.eq.f32.partialorder %v478, 8.507059e+37
        %v480 = vand.u32 %v397, 2147483648
        %v481 = vor.u32 1.1754944e-38, %v480
        %v482 = vsel %vm479, %v481, %v477
        %v483 = vmul.f32 1.0, %v482
        %v484 = vrcp.pop %v398
        %v485 = vmul.f32 %v398, %v484
        %v486 = vsub.f32 1.0, %v485
        %v487 = vmul.f32 %v484, %v486
        %v488 = vadd.f32 %v484, %v487
        %vm489 = vweird.f32 %v398
        %vm490 = vweird.f32 %v484
        %vm491 = vmor %vm489, %vm490
        %v492 = vsel %vm491, %v484, %v488
        %v493 = vand.u32 2147483647, %v398
        %vm494 = vcmp.eq.f32.partialorder %v493, 8.507059e+37
        %v495 = vand.u32 %v398, 2147483648
        %v496 = vor.u32 1.1754944e-38, %v495
        %v497 = vsel %vm494, %v496, %v492
        %v498 = vmul.f32 1.0, %v497
        %v499 = vrcp.pop %v399
        %v500 = vmul.f32 %v399, %v499
        %v501 = vsub.f32 1.0, %v500
        %v502 = vmul.f32 %v499, %v501
        %v503 = vadd.f32 %v499, %v502
        %vm504 = vweird.f32 %v399
        %vm505 = vweird.f32 %v499
        %vm506 = vmor %vm504, %vm505
        %v507 = vsel %vm506, %v499, %v503
        %v508 = vand.u32 2147483647, %v399
        %vm509 = vcmp.eq.f32.partialorder %v508, 8.507059e+37
        %v510 = vand.u32 %v399, 2147483648
        %v511 = vor.u32 1.1754944e-38, %v510
        %v512 = vsel %vm509, %v511, %v507
        %v513 = vmul.f32 1.0, %v512
        %v514 = vrcp.pop %v400
        %v515 = vmul.f32 %v400, %v514
        %v516 = vsub.f32 1.0, %v515
        %v517 = vmul.f32 %v514, %v516
        %v518 = vadd.f32 %v514, %v517
        %vm519 = vweird.f32 %v400
        %vm520 = vweird.f32 %v514
        %vm521 = vmor %vm519, %vm520
        %v522 = vsel %vm521, %v514, %v518
        %v523 = vand.u32 2147483647, %v400
        %vm524 = vcmp.eq.f32.partialorder %v523, 8.507059e+37
        %v525 = vand.u32 %v400, 2147483648
        %v526 = vor.u32 1.1754944e-38, %v525
        %v527 = vsel %vm524, %v526, %v522
        %v528 = vmul.f32 1.0, %v527
        %v529 = vrcp.pop %v401
        %v530 = vmul.f32 %v401, %v529
        %v531 = vsub.f32 1.0, %v530
        %v532 = vmul.f32 %v529, %v531
        %v533 = vadd.f32 %v529, %v532
        %vm534 = vweird.f32 %v401
        %vm535 = vweird.f32 %v529
        %vm536 = vmor %vm534, %vm535
        %v537 = vsel %vm536, %v529, %v533
        %v538 = vand.u32 2147483647, %v401
        %vm539 = vcmp.eq.f32.partialorder %v538, 8.507059e+37
        %v540 = vand.u32 %v401, 2147483648
        %v541 = vor.u32 1.1754944e-38, %v540
        %v542 = vsel %vm539, %v541, %v537
        %v543 = vmul.f32 1.0, %v542
        %v544 = vrcp.pop %v402
        %v545 = vmul.f32 %v402, %v544
        %v546 = vsub.f32 1.0, %v545
        %v547 = vmul.f32 %v544, %v546
        %v548 = vadd.f32 %v544, %v547
        %vm549 = vweird.f32 %v402
        %vm550 = vweird.f32 %v544
        %vm551 = vmor %vm549, %vm550
        %v552 = vsel %vm551, %v544, %v548
        %v553 = vand.u32 2147483647, %v402
        %vm554 = vcmp.eq.f32.partialorder %v553, 8.507059e+37
        %v555 = vand.u32 %v402, 2147483648
        %v556 = vor.u32 1.1754944e-38, %v555
        %v557 = vsel %vm554, %v556, %v552
        %v558 = vmul.f32 1.0, %v557
        %v559 = vrcp.pop %v403
        %v560 = vmul.f32 %v403, %v559
        %v561 = vsub.f32 1.0, %v560
        %v562 = vmul.f32 %v559, %v561
        %v563 = vadd.f32 %v559, %v562
        %vm564 = vweird.f32 %v403
        %vm565 = vweird.f32 %v559
        %vm566 = vmor %vm564, %vm565
        %v567 = vsel %vm566, %v559, %v563
        %v568 = vand.u32 2147483647, %v403
        %vm569 = vcmp.eq.f32.partialorder %v568, 8.507059e+37
        %v570 = vand.u32 %v403, 2147483648
        %v571 = vor.u32 1.1754944e-38, %v570
        %v572 = vsel %vm569, %v571, %v567
        %v573 = vmul.f32 1.0, %v572
        %v574 = vrcp.pop %v404
        %v575 = vmul.f32 %v404, %v574
        %v576 = vsub.f32 1.0, %v575
        %v577 = vmul.f32 %v574, %v576
        %v578 = vadd.f32 %v574, %v577
        %vm579 = vweird.f32 %v404
        %vm580 = vweird.f32 %v574
        %vm581 = vmor %vm579, %vm580
        %v582 = vsel %vm581, %v574, %v578
        %v583 = vand.u32 2147483647, %v404
        %vm584 = vcmp.eq.f32.partialorder %v583, 8.507059e+37
        %v585 = vand.u32 %v404, 2147483648
        %v586 = vor.u32 1.1754944e-38, %v585
        %v587 = vsel %vm584, %v586, %v582
        %v588 = vmul.f32 1.0, %v587
        %v589 = vrcp.pop %v405
        %v590 = vmul.f32 %v405, %v589
        %v591 = vsub.f32 1.0, %v590
        %v592 = vmul.f32 %v589, %v591
        %v593 = vadd.f32 %v589, %v592
        %vm594 = vweird.f32 %v405
        %vm595 = vweird.f32 %v589
        %vm596 = vmor %vm594, %vm595
        %v597 = vsel %vm596, %v589, %v593
        %v598 = vand.u32 2147483647, %v405
        %vm599 = vcmp.eq.f32.partialorder %v598, 8.507059e+37
        %v600 = vand.u32 %v405, 2147483648
        %v601 = vor.u32 1.1754944e-38, %v600
        %v602 = vsel %vm599, %v601, %v597
        %v603 = vmul.f32 1.0, %v602
        %v604 = vrcp.pop %v406
        %v605 = vmul.f32 %v406, %v604
        %v606 = vsub.f32 1.0, %v605
        %v607 = vmul.f32 %v604, %v606
        %v608 = vadd.f32 %v604, %v607
        %vm609 = vweird.f32 %v406
        %vm610 = vweird.f32 %v604
        %vm611 = vmor %vm609, %vm610
        %v612 = vsel %vm611, %v604, %v608
        %v613 = vand.u32 2147483647, %v406
        %vm614 = vcmp.eq.f32.partialorder %v613, 8.507059e+37
        %v615 = vand.u32 %v406, 2147483648
        %v616 = vor.u32 1.1754944e-38, %v615
        %v617 = vsel %vm614, %v616, %v612
        %v618 = vmul.f32 1.0, %v617
        %v619 = vrcp.pop %v407
        %v620 = vmul.f32 %v407, %v619
        %v621 = vsub.f32 1.0, %v620
        %v622 = vmul.f32 %v619, %v621
        %v623 = vadd.f32 %v619, %v622
        %vm624 = vweird.f32 %v407
        %vm625 = vweird.f32 %v619
        %vm626 = vmor %vm624, %vm625
        %v627 = vsel %vm626, %v619, %v623
        %v628 = vand.u32 2147483647, %v407
        %vm629 = vcmp.eq.f32.partialorder %v628, 8.507059e+37
        %v630 = vand.u32 %v407, 2147483648
        %v631 = vor.u32 1.1754944e-38, %v630
        %v632 = vsel %vm629, %v631, %v627
        %v633 = vmul.f32 1.0, %v632
        %v634 = vrcp.pop %v408
        %v635 = vmul.f32 %v408, %v634
        %v636 = vsub.f32 1.0, %v635
        %v637 = vmul.f32 %v634, %v636
        %v638 = vadd.f32 %v634, %v637
        %vm639 = vweird.f32 %v408
        %vm640 = vweird.f32 %v634
        %vm641 = vmor %vm639, %vm640
        %v642 = vsel %vm641, %v634, %v638
        %v643 = vand.u32 2147483647, %v408
        %vm644 = vcmp.eq.f32.partialorder %v643, 8.507059e+37
        %v645 = vand.u32 %v408, 2147483648
        %v646 = vor.u32 1.1754944e-38, %v645
        %v647 = vsel %vm644, %v646, %v642
        %v648 = vmul.f32 1.0, %v647
        %v649 = vmul.f32 %v423, 1.0614054
        %v650 = vmul.f32 %v438, 1.0614054
        %v651 = vmul.f32 %v453, 1.0614054
        %v652 = vmul.f32 %v468, 1.0614054
        %v653 = vmul.f32 %v483, 1.0614054
        %v654 = vmul.f32 %v498, 1.0614054
        %v655 = vmul.f32 %v513, 1.0614054
        %v656 = vmul.f32 %v528, 1.0614054
        %v657 = vmul.f32 %v543, 1.0614054
        %v658 = vmul.f32 %v558, 1.0614054
        %v659 = vmul.f32 %v573, 1.0614054
        %v660 = vmul.f32 %v588, 1.0614054
        %v661 = vmul.f32 %v603, 1.0614054
        %v662 = vmul.f32 %v618, 1.0614054
        %v663 = vmul.f32 %v633, 1.0614054
        %v664 = vmul.f32 %v648, 1.0614054
        %v665 = vadd.f32 %v649, -1.4531521
        %v666 = vadd.f32 %v650, -1.4531521
        %v667 = vadd.f32 %v651, -1.4531521
        %v668 = vadd.f32 %v652, -1.4531521
        %v669 = vadd.f32 %v653, -1.4531521
        %v670 = vadd.f32 %v654, -1.4531521
        %v671 = vadd.f32 %v655, -1.4531521
        %v672 = vadd.f32 %v656, -1.4531521
        %v673 = vadd.f32 %v657, -1.4531521
        %v674 = vadd.f32 %v658, -1.4531521
        %v675 = vadd.f32 %v659, -1.4531521
        %v676 = vadd.f32 %v660, -1.4531521
        %v677 = vadd.f32 %v661, -1.4531521
        %v678 = vadd.f32 %v662, -1.4531521
        %v679 = vadd.f32 %v663, -1.4531521
        %v680 = vadd.f32 %v664, -1.4531521
        %v681 = vmul.f32 %v665, %v423
        %v682 = vmul.f32 %v666, %v438
        %v683 = vmul.f32 %v667, %v453
        %v684 = vmul.f32 %v668, %v468
        %v685 = vmul.f32 %v669, %v483
        %v686 = vmul.f32 %v670, %v498
        %v687 = vmul.f32 %v671, %v513
        %v688 = vmul.f32 %v672, %v528
        %v689 = vmul.f32 %v673, %v543
        %v690 = vmul.f32 %v674, %v558
        %v691 = vmul.f32 %v675, %v573
        %v692 = vmul.f32 %v676, %v588
        %v693 = vmul.f32 %v677, %v603
        %v694 = vmul.f32 %v678, %v618
        %v695 = vmul.f32 %v679, %v633
        %v696 = vmul.f32 %v680, %v648
        %v697 = vadd.f32 %v681, 1.4214138
        %v698 = vadd.f32 %v682, 1.4214138
        %v699 = vadd.f32 %v683, 1.4214138
        %v700 = vadd.f32 %v684, 1.4214138
        %v701 = vadd.f32 %v685, 1.4214138
        %v702 = vadd.f32 %v686, 1.4214138
        %v703 = vadd.f32 %v687, 1.4214138
        %v704 = vadd.f32 %v688, 1.4214138
        %v705 = vadd.f32 %v689, 1.4214138
        %v706 = vadd.f32 %v690, 1.4214138
        %v707 = vadd.f32 %v691, 1.4214138
        %v708 = vadd.f32 %v692, 1.4214138
        %v709 = vadd.f32 %v693, 1.4214138
        %v710 = vadd.f32 %v694, 1.4214138
        %v711 = vadd.f32 %v695, 1.4214138
        %v712 = vadd.f32 %v696, 1.4214138
        %v713 = vmul.f32 %v697, %v423
        %v714 = vmul.f32 %v698, %v438
        %v715 = vmul.f32 %v699, %v453
        %v716 = vmul.f32 %v700, %v468
        %v717 = vmul.f32 %v701, %v483
        %v718 = vmul.f32 %v702, %v498
        %v719 = vmul.f32 %v703, %v513
        %v720 = vmul.f32 %v704, %v528
        %v721 = vmul.f32 %v705, %v543
        %v722 = vmul.f32 %v706, %v558
        %v723 = vmul.f32 %v707, %v573
        %v724 = vmul.f32 %v708, %v588
        %v725 = vmul.f32 %v709, %v603
        %v726 = vmul.f32 %v710, %v618
        %v727 = vmul.f32 %v711, %v633
        %v728 = vmul.f32 %v712, %v648
        %v729 = vadd.f32 %v713, -0.28449672
        %v730 = vadd.f32 %v714, -0.28449672
        %v731 = vadd.f32 %v715, -0.28449672
        %v732 = vadd.f32 %v716, -0.28449672
        %v733 = vadd.f32 %v717, -0.28449672
        %v734 = vadd.f32 %v718, -0.28449672
        %v735 = vadd.f32 %v719, -0.28449672
        %v736 = vadd.f32 %v720, -0.28449672
        %v737 = vadd.f32 %v721, -0.28449672
        %v738 = vadd.f32 %v722, -0.28449672
        %v739 = vadd.f32 %v723, -0.28449672
        %v740 = vadd.f32 %v724, -0.28449672
        %v741 = vadd.f32 %v725, -0.28449672
        %v742 = vadd.f32 %v726, -0.28449672
        %v743 = vadd.f32 %v727, -0.28449672
        %v744 = vadd.f32 %v728, -0.28449672
        %v745 = vmul.f32 %v729, %v423
        %v746 = vmul.f32 %v730, %v438
        %v747 = vmul.f32 %v731, %v453
        %v748 = vmul.f32 %v732, %v468
        %v749 = vmul.f32 %v733, %v483
        %v750 = vmul.f32 %v734, %v498
        %v751 = vmul.f32 %v735, %v513
        %v752 = vmul.f32 %v736, %v528
        %v753 = vmul.f32 %v737, %v543
        %v754 = vmul.f32 %v738, %v558
        %v755 = vmul.f32 %v739, %v573
        %v756 = vmul.f32 %v740, %v588
        %v757 = vmul.f32 %v741, %v603
        %v758 = vmul.f32 %v742, %v618
        %v759 = vmul.f32 %v743, %v633
        %v760 = vmul.f32 %v744, %v648
        %v761 = vadd.f32 %v745, 0.2548296
        %v762 = vadd.f32 %v746, 0.2548296
        %v763 = vadd.f32 %v747, 0.2548296
        %v764 = vadd.f32 %v748, 0.2548296
        %v765 = vadd.f32 %v749, 0.2548296
        %v766 = vadd.f32 %v750, 0.2548296
        %v767 = vadd.f32 %v751, 0.2548296
        %v768 = vadd.f32 %v752, 0.2548296
        %v769 = vadd.f32 %v753, 0.2548296
        %v770 = vadd.f32 %v754, 0.2548296
        %v771 = vadd.f32 %v755, 0.2548296
        %v772 = vadd.f32 %v756, 0.2548296
        %v773 = vadd.f32 %v757, 0.2548296
        %v774 = vadd.f32 %v758, 0.2548296
        %v775 = vadd.f32 %v759, 0.2548296
        %v776 = vadd.f32 %v760, 0.2548296
        %v777 = vmul.f32 %v761, %v423
        %v778 = vmul.f32 %v762, %v438
        %v779 = vmul.f32 %v763, %v453
        %v780 = vmul.f32 %v764, %v468
        %v781 = vmul.f32 %v765, %v483
        %v782 = vmul.f32 %v766, %v498
        %v783 = vmul.f32 %v767, %v513
        %v784 = vmul.f32 %v768, %v528
        %v785 = vmul.f32 %v769, %v543
        %v786 = vmul.f32 %v770, %v558
        %v787 = vmul.f32 %v771, %v573
        %v788 = vmul.f32 %v772, %v588
        %v789 = vmul.f32 %v773, %v603
        %v790 = vmul.f32 %v774, %v618
        %v791 = vmul.f32 %v775, %v633
        %v792 = vmul.f32 %v776, %v648
        %v793 = vsub.f32 0.0, %v361
        %v794 = vsub.f32 0.0, %v362
        %v795 = vsub.f32 0.0, %v363
        %v796 = vsub.f32 0.0, %v364
        %v797 = vsub.f32 0.0, %v365
        %v798 = vsub.f32 0.0, %v366
        %v799 = vsub.f32 0.0, %v367
        %v800 = vsub.f32 0.0, %v368
        %v801 = vsub.f32 0.0, %v369
        %v802 = vsub.f32 0.0, %v370
        %v803 = vsub.f32 0.0, %v371
        %v804 = vsub.f32 0.0, %v372
        %v805 = vsub.f32 0.0, %v373
        %v806 = vsub.f32 0.0, %v374
        %v807 = vsub.f32 0.0, %v375
        %v808 = vsub.f32 0.0, %v376
        %v809 = vmul.f32 %v793, %v361
        %v810 = vmul.f32 %v794, %v362
        %v811 = vmul.f32 %v795, %v363
        %v812 = vmul.f32 %v796, %v364
        %v813 = vmul.f32 %v797, %v365
        %v814 = vmul.f32 %v798, %v366
        %v815 = vmul.f32 %v799, %v367
        %v816 = vmul.f32 %v800, %v368
        %v817 = vmul.f32 %v801, %v369
        %v818 = vmul.f32 %v802, %v370
        %v819 = vmul.f32 %v803, %v371
        %v820 = vmul.f32 %v804, %v372
        %v821 = vmul.f32 %v805, %v373
        %v822 = vmul.f32 %v806, %v374
        %v823 = vmul.f32 %v807, %v375
        %v824 = vmul.f32 %v808, %v376
        %v825 = vmul.f32 %v809, 1.442695
        %v826 = vpow.pop %v825
        %v827 = vmul.f32 %v810, 1.442695
        %v828 = vpow.pop %v827
        %v829 = vmul.f32 %v811, 1.442695
        %v830 = vpow.pop %v829
        %v831 = vmul.f32 %v812, 1.442695
        %v832 = vpow.pop %v831
        %v833 = vmul.f32 %v813, 1.442695
        %v834 = vpow.pop %v833
        %v835 = vmul.f32 %v814, 1.442695
        %v836 = vpow.pop %v835
        %v837 = vmul.f32 %v815, 1.442695
        %v838 = vpow.pop %v837
        %v839 = vmul.f32 %v816, 1.442695
        %v840 = vpow.pop %v839
        %v841 = vmul.f32 %v817, 1.442695
        %v842 = vpow.pop %v841
        %v843 = vmul.f32 %v818, 1.442695
        %v844 = vpow.pop %v843
        %v845 = vmul.f32 %v819, 1.442695
        %v846 = vpow.pop %v845
        %v847 = vmul.f32 %v820, 1.442695
        %v848 = vpow.pop %v847
        %v849 = vmul.f32 %v821, 1.442695
        %v850 = vpow.pop %v849
        %v851 = vmul.f32 %v822, 1.442695
        %v852 = vpow.pop %v851
        %v853 = vmul.f32 %v823, 1.442695
        %v854 = vpow.pop %v853
        %v855 = vmul.f32 %v824, 1.442695
        %v856 = vpow.pop %v855
        %v857 = vmul.f32 %v777, %v826
        %v858 = vmul.f32 %v778, %v828
        %v859 = vmul.f32 %v779, %v830
        %v860 = vmul.f32 %v780, %v832
        %v861 = vmul.f32 %v781, %v834
        %v862 = vmul.f32 %v782, %v836
        %v863 = vmul.f32 %v783, %v838
        %v864 = vmul.f32 %v784, %v840
        %v865 = vmul.f32 %v785, %v842
        %v866 = vmul.f32 %v786, %v844
        %v867 = vmul.f32 %v787, %v846
        %v868 = vmul.f32 %v788, %v848
        %v869 = vmul.f32 %v789, %v850
        %v870 = vmul.f32 %v790, %v852
        %v871 = vmul.f32 %v791, %v854
        %v872 = vmul.f32 %v792, %v856
        %v873 = vsub.f32 1.0, %v857
        %v874 = vsub.f32 1.0, %v858
        %v875 = vsub.f32 1.0, %v859
        %v876 = vsub.f32 1.0, %v860
        %v877 = vsub.f32 1.0, %v861
        %v878 = vsub.f32 1.0, %v862
        %v879 = vsub.f32 1.0, %v863
        %v880 = vsub.f32 1.0, %v864
        %v881 = vsub.f32 1.0, %v865
        %v882 = vsub.f32 1.0, %v866
        %v883 = vsub.f32 1.0, %v867
        %v884 = vsub.f32 1.0, %v868
        %v885 = vsub.f32 1.0, %v869
        %v886 = vsub.f32 1.0, %v870
        %v887 = vsub.f32 1.0, %v871
        %v888 = vsub.f32 1.0, %v872
        %vm889 = vcmp.ge.f32.partialorder %v345, 0.0
        %vm890 = vcmp.ge.f32.partialorder %v346, 0.0
        %vm891 = vcmp.ge.f32.partialorder %v347, 0.0
        %vm892 = vcmp.ge.f32.partialorder %v348, 0.0
        %vm893 = vcmp.ge.f32.partialorder %v349, 0.0
        %vm894 = vcmp.ge.f32.partialorder %v350, 0.0
        %vm895 = vcmp.ge.f32.partialorder %v351, 0.0
        %vm896 = vcmp.ge.f32.partialorder %v352, 0.0
        %vm897 = vcmp.ge.f32.partialorder %v353, 0.0
        %vm898 = vcmp.ge.f32.partialorder %v354, 0.0
        %vm899 = vcmp.ge.f32.partialorder %v355, 0.0
        %vm900 = vcmp.ge.f32.partialorder %v356, 0.0
        %vm901 = vcmp.ge.f32.partialorder %v357, 0.0
        %vm902 = vcmp.ge.f32.partialorder %v358, 0.0
        %vm903 = vcmp.ge.f32.partialorder %v359, 0.0
        %vm904 = vcmp.ge.f32.partialorder %v360, 0.0
        %v905 = vsub.f32 0.0, %v873
        %v906 = vsub.f32 0.0, %v874
        %v907 = vsub.f32 0.0, %v875
        %v908 = vsub.f32 0.0, %v876
        %v909 = vsub.f32 0.0, %v877
        %v910 = vsub.f32 0.0, %v878
        %v911 = vsub.f32 0.0, %v879
        %v912 = vsub.f32 0.0, %v880
        %v913 = vsub.f32 0.0, %v881
        %v914 = vsub.f32 0.0, %v882
        %v915 = vsub.f32 0.0, %v883
        %v916 = vsub.f32 0.0, %v884
        %v917 = vsub.f32 0.0, %v885
        %v918 = vsub.f32 0.0, %v886
        %v919 = vsub.f32 0.0, %v887
        %v920 = vsub.f32 0.0, %v888
        %v921 = vsel %vm889, %v873, %v905
        %v922 = vsel %vm890, %v874, %v906
        %v923 = vsel %vm891, %v875, %v907
        %v924 = vsel %vm892, %v876, %v908
        %v925 = vsel %vm893, %v877, %v909
        %v926 = vsel %vm894, %v878, %v910
        %v927 = vsel %vm895, %v879, %v911
        %v928 = vsel %vm896, %v880, %v912
        %v929 = vsel %vm897, %v881, %v913
        %v930 = vsel %vm898, %v882, %v914
        %v931 = vsel %vm899, %v883, %v915
        %v932 = vsel %vm900, %v884, %v916
        %v933 = vsel %vm901, %v885, %v917
        %v934 = vsel %vm902, %v886, %v918
        %v935 = vsel %vm903, %v887, %v919
        %v936 = vsel %vm904, %v888, %v920
        %v937 = vadd.f32 %v921, 1.0
        %v938 = vadd.f32 %v922, 1.0
        %v939 = vadd.f32 %v923, 1.0
        %v940 = vadd.f32 %v924, 1.0
        %v941 = vadd.f32 %v925, 1.0
        %v942 = vadd.f32 %v926, 1.0
        %v943 = vadd.f32 %v927, 1.0
        %v944 = vadd.f32 %v928, 1.0
        %v945 = vadd.f32 %v929, 1.0
        %v946 = vadd.f32 %v930, 1.0
        %v947 = vadd.f32 %v931, 1.0
        %v948 = vadd.f32 %v932, 1.0
        %v949 = vadd.f32 %v933, 1.0
        %v950 = vadd.f32 %v934, 1.0
        %v951 = vadd.f32 %v935, 1.0
        %v952 = vadd.f32 %v936, 1.0
        %v953 = vmul.f32 %v329, %v937
        %v954 = vmul.f32 %v330, %v938
        %v955 = vmul.f32 %v331, %v939
        %v956 = vmul.f32 %v332, %v940
        %v957 = vmul.f32 %v333, %v941
        %v958 = vmul.f32 %v334, %v942
        %v959 = vmul.f32 %v335, %v943
        %v960 = vmul.f32 %v336, %v944
        %v961 = vmul.f32 %v337, %v945
        %v962 = vmul.f32 %v338, %v946
        %v963 = vmul.f32 %v339, %v947
        %v964 = vmul.f32 %v340, %v948
        %v965 = vmul.f32 %v341, %v949
        %v966 = vmul.f32 %v342, %v950
        %v967 = vmul.f32 %v343, %v951
        %v968 = vmul.f32 %v344, %v952
        %969 = vst [vmem:[%s225] sm:$0xff] %v953
        %970 = vst [vmem:[%s225 + $0x8] sm:$0xff] %v954
        %971 = vst [vmem:[%s225 + $0x10] sm:$0xff] %v955
        %972 = vst [vmem:[%s225 + $0x18] sm:$0xff] %v956
        %973 = vst [vmem:[%s225 + $0x20] sm:$0xff] %v957
        %974 = vst [vmem:[%s225 + $0x28] sm:$0xff] %v958
        %975 = vst [vmem:[%s225 + $0x30] sm:$0xff] %v959
        %976 = vst [vmem:[%s225 + $0x38] sm:$0xff] %v960
        %977 = vst [vmem:[%s225 + $0x40] sm:$0xff] %v961
        %978 = vst [vmem:[%s225 + $0x48] sm:$0xff] %v962
        %979 = vst [vmem:[%s225 + $0x50] sm:$0xff] %v963
        %980 = vst [vmem:[%s225 + $0x58] sm:$0xff] %v964
        %981 = vst [vmem:[%s225 + $0x60] sm:$0xff] %v965
        %982 = vst [vmem:[%s225 + $0x68] sm:$0xff] %v966
        %983 = vst [vmem:[%s225 + $0x70] sm:$0xff] %v967
        %984 = vst [vmem:[%s225 + $0x78] sm:$0xff] %v968
        %s985 = sand.u32 %s113, 1
        %s986 = scalar_lea.sflag [#allocation4], %s985
        %s987 = sand.u32 %s113, 1
        %s988 = smul.addr %s987, 128
        %s989 = scalar_lea.vmem [#allocation7], %s988
        // Predicated region
        $region41: #{trans_model_forward.2} parent=31 // pred_check
          %p990 = pneg %p123
        $region42: #{trans_model_forward.2} parent=31 // pred_check_branch
          %992 = sbr.rel (%p990) target = $region44
        $region43: #{trans_model_forward.2} parent=31 // pred_region
          %s993 = smul.u32 16, %s26
          %995 = vsyncadd %s986, 0
          %s996 = smul.addr %s25, 80
          %s997 = sadd.s32 %s993, %s996
          %s998 = smul.addr %s997, 8
          %s999 = scalar_lea.hbm %s3, %s998
          %s1000 = sshll.u32 %s989, 4
          %s1001 = int_to_ptr.vmem [resolvable:$true] %s1000
          %s1002 = sshll.u32 %s999, 4
          %s1003 = int_to_ptr.hbm [resolvable:$true] %s1002
          %1008 = dma.vmem_to_hbm [thread:$0]  %s1001, 2048, %s1003, %s986, 128, 128, 8
        $region44: #{trans_model_forward.2} parent=31 // pred_fallthru
          _
      $region32: #{trans_model_forward.2} parent=5 // pred_fallthru
        _
      %p1009 = scmp.le.s32.totalorder 2, %s16
      // Predicated region
      $region45: #{trans_model_forward.2} parent=5 // pred_check
        %p1010 = pneg %p1009
      $region46: #{trans_model_forward.2} parent=5 // pred_check_branch
        %1012 = sbr.rel (%p1010) target = $region48
      $region47: #{trans_model_forward.2} parent=5 // pred_region
        %s1013 = ssub.s32 %s16, 2
        // Predicated region
        $region49: #{trans_model_forward.2} parent=47 // pred_check
          %p1014 = pneg %p129
        $region50: #{trans_model_forward.2} parent=47 // pred_check_branch
          %1016 = sbr.rel (%p1014) target = $region52
        $region51: #{trans_model_forward.2} parent=47 // pred_region
          %s1017 = sand.u32 %s114, 1
          %s1018 = scalar_lea.sflag [#allocation4], %s1017
          %s1019 = sand.u32 %s114, 1
          %s1020 = smul.addr %s1019, 128
          %s1021 = scalar_lea.vmem [#allocation7], %s1020
          %1023 = dma.done %s1018, 2048
        $region52: #{trans_model_forward.2} parent=47 // pred_fallthru
          _
      $region48: #{trans_model_forward.2} parent=5 // pred_fallthru
        _
    $region6: #{trans_model_forward.2} parent=1 // loop_footer
      %s20 = sadd.s32 1, %s16
    $region7: #{trans_model_forward.2} parent=1 // loop_footer_branch
      %15 = sbr.rel target = $region3
    $region8: #{trans_model_forward.2} parent=1 // loop_exit
      _
    %1024 = vsyncpa [#allocation3], 1
    %s1025 = scalar_lea.sflag [#allocation3], 1
    %1026 = vsyncpa %s1025, 1
    %1027 = vsyncpa [#allocation6], 1
    %1028 = vsyncpa [#allocation4], 1
    %s1029 = scalar_lea.sflag [#allocation4], 1
    %1030 = vsyncpa %s1029, 1

// kernel: trans_model_forward.3
$region0: #{trans_model_forward.3}
  #allocation0 [shape = 'u32[]', space=smem, size = 0x4, offset = 0x4, fixed_abs, tag = 'smem constant byte address 0x4 - core index']
  #allocation1 [shape = 'u32[72,128]{1,0:T(1,128)}', space=vmem, size = 0x9000, scoped, tag = 'internal scratch']
  %s0 = inlined_call_operand.hbm [shape: f32[2,384,256], index: 0, kind: input, shape index: {}]
  %s1 = inlined_call_operand.hbm [shape: f32[256,128], index: 1, kind: input, shape index: {}]
  %s2 = inlined_call_operand.vmem [shape: f32[1,128], index: 2, kind: input, shape index: {}]
  %s3 = inlined_call_operand.hbm [shape: f32[128,128], index: 3, kind: input, shape index: {}]
  %s4 = inlined_call_operand.vmem [shape: f32[1,128], index: 4, kind: input, shape index: {}]
  %s5 = inlined_call_operand.hbm [shape: f32[2,640,128], index: 5, kind: input, shape index: {}, may-alias: {5,6}]
  %s6 = inlined_call_operand.hbm [shape: f32[2,640,128], index: 6, kind: output, shape index: {}, may-alias: {5,6}]
  %s7 = sld [smem:[#allocation0]]
  $region65: #{trans_model_forward.3} parent=0
    _
  %s9 = ssub.s32 1, %s7
  %s10 = scalar_select 0, %s9, %s7
  $region1: #{trans_model_forward.3} parent=0
    #allocation2 [shape = 'u8[262144]{0}', space=vmem, size = 0x40000, scoped, tag = 'input window, operand 0']
    #allocation3 [shape = 's32[2]{0}', space=sflag, size = 0x8, scoped, tag = 'scoped memory for trans_model_forward.3']
    #allocation4 [shape = 's32[2]{0}', space=sflag, size = 0x8, scoped, tag = 'scoped memory for trans_model_forward.3']
    #allocation5 [shape = 'u8[131072]{0}', space=vmem, size = 0x20000, scoped, tag = 'input window, operand 1, single buffered']
    #allocation6 [shape = 's32[1]{0}', space=sflag, size = 0x4, scoped, tag = 'scoped memory for trans_model_forward.3']
    #allocation7 [shape = 'u8[65536]{0}', space=vmem, size = 0x10000, scoped, tag = 'input window, operand 3, single buffered']
    #allocation8 [shape = 'u8[131072]{0}', space=vmem, size = 0x20000, scoped, tag = 'output window, operand 0']
    %11 = vsyncpa [#allocation3], 0
    %s12 = scalar_lea.sflag [#allocation3], 1
    %13 = vsyncpa %s12, 0
    %14 = vsyncpa [#allocation6], 0
    %15 = vsyncpa [#allocation4], 0
    %s16 = scalar_lea.sflag [#allocation4], 1
    %17 = vsyncpa %s16, 0
    loop: start=0, step=1, limit=8
    $region2: #{trans_model_forward.3} parent=1 // loop_pre_header
      _
    $region3: #{trans_model_forward.3} parent=1 // loop_header
      %s19 = sphi 0, %s23
      %p20 = scmp.ge.s32.totalorder %s19, 8
      %s26 = sphi 0, %s38
      %s27 = sphi 0, %s34
      %s28 = sphi 0, %s26
      %s29 = sphi 0, %s27
      %s30 = sphi 0, %s28
      %s31 = sphi 0, %s29
      %s43 = sphi 0, %s45
      %s46 = sphi 0, %s43
      %s47 = sphi 0, %s46
      %s63 = sphi 0, %s47
      %s67 = sphi 0, %s67
      %s69 = sphi 0, %s67
      %s70 = sphi 0, %s69
      %s84 = sphi 0, %s70
      %s88 = sphi 0, %s88
      %s90 = sphi 0, %s88
      %s91 = sphi 0, %s90
      %s105 = sphi 0, %s91
      %s109 = sphi 0, %s109
      %s111 = sphi 0, %s109
      %s112 = sphi 0, %s111
      %s126 = sphi 0, %s112
      %s130 = sphi 0, %s130
      %s132 = sphi 0, %s130
      %s133 = sphi 0, %s132
      %s147 = sphi 0, %s133
      %s157 = sphi 0, %s159
      %s160 = sphi 0, %s157
      %s161 = sphi 0, %s160
      %s177 = sphi 0, %s161
    $region4: #{trans_model_forward.3} parent=1 // loop_header_branch
      %22 = sbr.rel (%p20) target = $region8
    $region5: #{trans_model_forward.3} parent=1 // loop_body
      %s24 = ssub.s32 %s19, 1
      %s25 = ssub.s32 %s19, 2
      %s32 = sadd.s32 1, %s27
      %p33 = scmp.ge.s32.totalorder %s32, 3
      %s34 = scalar_select %p33, 0, %s32
      %s35 = sadd.s32 1, %s26
      %s36 = scalar_select %p33, %s35, %s26
      %p37 = scmp.ge.s32.totalorder %s36, 2
      %s38 = scalar_select %p37, 0, %s36
      %s39 = ssub.s32 %s26, %s38
      %s40 = ssub.s32 %s27, %s34
      %s41 = sor.u32 %s39, %s40
      %p42 = scmp.eq.s32.totalorder %s41, 0
      %s44 = sadd.s32 %s43, 1
      %s45 = scalar_select %p42, %s43, %s44
      %p48 = pneg %p42
      %p49 = scmp.eq.s32.totalorder %s19, 5
      %p50 = por %p48, %p49
      %p51 = scmp.ne.s32.totalorder %s43, %s46
      %p52 = scmp.eq.s32.totalorder %s19, 0
      %p53 = por %p51, %p52
      %p54 = scmp.ne.s32.totalorder %s43, %s46
      %p55 = scmp.eq.s32.totalorder %s24, 5
      %p56 = por %p54, %p55
      %p57 = scmp.ne.s32.totalorder %s46, %s47
      %p58 = scmp.eq.s32.totalorder %s24, 0
      %p59 = por %p57, %p58
      %p60 = scmp.ne.s32.totalorder %s46, %s47
      %p61 = scmp.eq.s32.totalorder %s25, 5
      %p62 = por %p60, %p61
      %p64 = scmp.ne.s32.totalorder %s47, %s63
      %p65 = scmp.eq.s32.totalorder %s25, 0
      %p66 = por %p64, %p65
      %s68 = sadd.s32 %s67, 1
      %p71 = scmp.eq.s32.totalorder %s19, 5
      %p72 = scmp.ne.s32.totalorder %s67, %s69
      %p73 = scmp.eq.s32.totalorder %s19, 0
      %p74 = por %p72, %p73
      %p75 = scmp.ne.s32.totalorder %s67, %s69
      %p76 = scmp.eq.s32.totalorder %s24, 5
      %p77 = por %p75, %p76
      %p78 = scmp.ne.s32.totalorder %s69, %s70
      %p79 = scmp.eq.s32.totalorder %s24, 0
      %p80 = por %p78, %p79
      %p81 = scmp.ne.s32.totalorder %s69, %s70
      %p82 = scmp.eq.s32.totalorder %s25, 5
      %p83 = por %p81, %p82
      %p85 = scmp.ne.s32.totalorder %s70, %s84
      %p86 = scmp.eq.s32.totalorder %s25, 0
      %p87 = por %p85, %p86
      %s89 = sadd.s32 %s88, 1
      %p92 = scmp.eq.s32.totalorder %s19, 5
      %p93 = scmp.ne.s32.totalorder %s88, %s90
      %p94 = scmp.eq.s32.totalorder %s19, 0
      %p95 = por %p93, %p94
      %p96 = scmp.ne.s32.totalorder %s88, %s90
      %p97 = scmp.eq.s32.totalorder %s24, 5
      %p98 = por %p96, %p97
      %p99 = scmp.ne.s32.totalorder %s90, %s91
      %p100 = scmp.eq.s32.totalorder %s24, 0
      %p101 = por %p99, %p100
      %p102 = scmp.ne.s32.totalorder %s90, %s91
      %p103 = scmp.eq.s32.totalorder %s25, 5
      %p104 = por %p102, %p103
      %p106 = scmp.ne.s32.totalorder %s91, %s105
      %p107 = scmp.eq.s32.totalorder %s25, 0
      %p108 = por %p106, %p107
      %s110 = sadd.s32 %s109, 1
      %p113 = scmp.eq.s32.totalorder %s19, 5
      %p114 = scmp.ne.s32.totalorder %s109, %s111
      %p115 = scmp.eq.s32.totalorder %s19, 0
      %p116 = por %p114, %p115
      %p117 = scmp.ne.s32.totalorder %s109, %s111
      %p118 = scmp.eq.s32.totalorder %s24, 5
      %p119 = por %p117, %p118
      %p120 = scmp.ne.s32.totalorder %s111, %s112
      %p121 = scmp.eq.s32.totalorder %s24, 0
      %p122 = por %p120, %p121
      %p123 = scmp.ne.s32.totalorder %s111, %s112
      %p124 = scmp.eq.s32.totalorder %s25, 5
      %p125 = por %p123, %p124
      %p127 = scmp.ne.s32.totalorder %s112, %s126
      %p128 = scmp.eq.s32.totalorder %s25, 0
      %p129 = por %p127, %p128
      %s131 = sadd.s32 %s130, 1
      %p134 = scmp.eq.s32.totalorder %s19, 5
      %p135 = scmp.ne.s32.totalorder %s130, %s132
      %p136 = scmp.eq.s32.totalorder %s19, 0
      %p137 = por %p135, %p136
      %p138 = scmp.ne.s32.totalorder %s130, %s132
      %p139 = scmp.eq.s32.totalorder %s24, 5
      %p140 = por %p138, %p139
      %p141 = scmp.ne.s32.totalorder %s132, %s133
      %p142 = scmp.eq.s32.totalorder %s24, 0
      %p143 = por %p141, %p142
      %p144 = scmp.ne.s32.totalorder %s132, %s133
      %p145 = scmp.eq.s32.totalorder %s25, 5
      %p146 = por %p144, %p145
      %p148 = scmp.ne.s32.totalorder %s133, %s147
      %p149 = scmp.eq.s32.totalorder %s25, 0
      %p150 = por %p148, %p149
      %s151 = sadd.s32 %s27, 2
      %s152 = sadd.s32 %s34, 2
      %s153 = ssub.s32 %s26, %s38
      %s154 = ssub.s32 %s151, %s152
      %s155 = sor.u32 %s153, %s154
      %p156 = scmp.eq.s32.totalorder %s155, 0
      %s158 = sadd.s32 %s157, 1
      %s159 = scalar_select %p156, %s157, %s158
      %p162 = pneg %p156
      %p163 = scmp.eq.s32.totalorder %s19, 5
      %p164 = por %p162, %p163
      %p165 = scmp.ne.s32.totalorder %s157, %s160
      %p166 = scmp.eq.s32.totalorder %s19, 0
      %p167 = por %p165, %p166
      %p168 = scmp.ne.s32.totalorder %s157, %s160
      %p169 = scmp.eq.s32.totalorder %s24, 5
      %p170 = por %p168, %p169
      %p171 = scmp.ne.s32.totalorder %s160, %s161
      %p172 = scmp.eq.s32.totalorder %s24, 0
      %p173 = por %p171, %p172
      %p174 = scmp.ne.s32.totalorder %s160, %s161
      %p175 = scmp.eq.s32.totalorder %s25, 5
      %p176 = por %p174, %p175
      %p178 = scmp.ne.s32.totalorder %s161, %s177
      %p179 = scmp.eq.s32.totalorder %s25, 0
      %p180 = por %p178, %p179
      %p181 = scmp.le.s32.totalorder 1, %s19
      %p182 = scmp.lt.s32.totalorder %s19, 7
      %p183 = pnand %p181, %p182
      %p184 = pneg %p183
      // Predicated region
      $region9: #{trans_model_forward.3} parent=5 // pred_check
        _
      $region10: #{trans_model_forward.3} parent=5 // pred_check_branch
        %186 = sbr.rel (%p183) target = $region12
      $region11: #{trans_model_forward.3} parent=5 // pred_region
        %s187 = ssub.s32 %s19, 1
        // Predicated region
        $region13: #{trans_model_forward.3} parent=11 // pred_check
          %p188 = pneg %p80
        $region14: #{trans_model_forward.3} parent=11 // pred_check_branch
          %190 = sbr.rel (%p188) target = $region16
        $region15: #{trans_model_forward.3} parent=11 // pred_region
          %192 = vsyncadd [#allocation6], 0
          %s193 = sshll.u32 %s1, 4
          %s194 = int_to_ptr.hbm [resolvable:$true] %s193
          %s195 = sshll.u32 [#allocation5], 4
          %s196 = int_to_ptr.vmem [resolvable:$true] %s195
          %201 = dma.hbm_to_vmem [thread:$0]  %s194, 4096, %s196, [#allocation6], 128, 128, 8
        $region16: #{trans_model_forward.3} parent=11 // pred_fallthru
          _
        // Predicated region
        $region17: #{trans_model_forward.3} parent=11 // pred_check
          %p202 = pneg %p101
        $region18: #{trans_model_forward.3} parent=11 // pred_check_branch
          %204 = sbr.rel (%p202) target = $region20
        $region19: #{trans_model_forward.3} parent=11 // pred_region
          _
        $region20: #{trans_model_forward.3} parent=11 // pred_fallthru
          _
        // Predicated region
        $region21: #{trans_model_forward.3} parent=11 // pred_check
          %p205 = pneg %p122
        $region22: #{trans_model_forward.3} parent=11 // pred_check_branch
          %207 = sbr.rel (%p205) target = $region24
        $region23: #{trans_model_forward.3} parent=11 // pred_region
          %209 = vsyncadd [#allocation6], 0
          %s210 = sshll.u32 %s3, 4
          %s211 = int_to_ptr.hbm [resolvable:$true] %s210
          %s212 = sshll.u32 [#allocation7], 4
          %s213 = int_to_ptr.vmem [resolvable:$true] %s212
          %218 = dma.hbm_to_vmem [thread:$0]  %s211, 2048, %s213, [#allocation6], 128, 128, 8
        $region24: #{trans_model_forward.3} parent=11 // pred_fallthru
          _
        // Predicated region
        $region25: #{trans_model_forward.3} parent=11 // pred_check
          %p219 = pneg %p143
        $region26: #{trans_model_forward.3} parent=11 // pred_check_branch
          %221 = sbr.rel (%p219) target = $region28
        $region27: #{trans_model_forward.3} parent=11 // pred_region
          _
        $region28: #{trans_model_forward.3} parent=11 // pred_fallthru
          _
      $region12: #{trans_model_forward.3} parent=5 // pred_fallthru
        _
      %p222 = scmp.lt.s32.totalorder %s19, 6
      // Predicated region
      $region29: #{trans_model_forward.3} parent=5 // pred_check
        %p223 = pneg %p222
      $region30: #{trans_model_forward.3} parent=5 // pred_check_branch
        %225 = sbr.rel (%p223) target = $region32
      $region31: #{trans_model_forward.3} parent=5 // pred_region
        // Predicated region
        $region33: #{trans_model_forward.3} parent=31 // pred_check
          %p226 = pneg %p53
        $region34: #{trans_model_forward.3} parent=31 // pred_check_branch
          %228 = sbr.rel (%p226) target = $region36
        $region35: #{trans_model_forward.3} parent=31 // pred_region
          %s229 = sand.u32 %s43, 1
          %s230 = scalar_lea.sflag [#allocation3], %s229
          %s231 = sand.u32 %s43, 1
          %s232 = smul.addr %s231, 256
          %s233 = scalar_lea.vmem [#allocation2], %s232
          %s234 = smul.u32 16, %s27
          %236 = vsyncadd %s230, 0
          %s237 = smul.addr %s234, 2
          %s238 = smul.addr %s26, 96
          %s239 = sadd.s32 %s237, %s238
          %s240 = smul.addr %s239, 8
          %s241 = scalar_lea.hbm %s0, %s240
          %s242 = sshll.u32 %s241, 4
          %s243 = int_to_ptr.hbm [resolvable:$true] %s242
          %s244 = sshll.u32 %s233, 4
          %s245 = int_to_ptr.vmem [resolvable:$true] %s244
          %250 = dma.hbm_to_vmem [thread:$0]  %s243, 4096, %s245, %s230, 256, 256, 16
        $region36: #{trans_model_forward.3} parent=31 // pred_fallthru
          _
      $region32: #{trans_model_forward.3} parent=5 // pred_fallthru
        _
      %p251 = scmp.le.s32.totalorder 1, %s19
      %p252 = scmp.lt.s32.totalorder %s19, 7
      %p253 = pnand %p251, %p252
      %p254 = pneg %p253
      // Predicated region
      $region37: #{trans_model_forward.3} parent=5 // pred_check
        _
      $region38: #{trans_model_forward.3} parent=5 // pred_check_branch
        %256 = sbr.rel (%p253) target = $region40
      $region39: #{trans_model_forward.3} parent=5 // pred_region
        %s257 = ssub.s32 %s19, 1
        %s258 = sand.u32 %s46, 1
        %s259 = scalar_lea.sflag [#allocation3], %s258
        %s260 = sand.u32 %s46, 1
        %s261 = smul.addr %s260, 256
        %s262 = scalar_lea.vmem [#allocation2], %s261
        // Predicated region
        $region41: #{trans_model_forward.3} parent=39 // pred_check
          %p263 = pneg %p59
        $region42: #{trans_model_forward.3} parent=39 // pred_check_branch
          %265 = sbr.rel (%p263) target = $region44
        $region43: #{trans_model_forward.3} parent=39 // pred_region
          %267 = dma.done %s259, 4096
        $region44: #{trans_model_forward.3} parent=39 // pred_fallthru
          _
        // Predicated region
        $region45: #{trans_model_forward.3} parent=39 // pred_check
          %p268 = pneg %p80
        $region46: #{trans_model_forward.3} parent=39 // pred_check_branch
          %270 = sbr.rel (%p268) target = $region48
        $region47: #{trans_model_forward.3} parent=39 // pred_region
          %272 = dma.done [#allocation6], 4096
        $region48: #{trans_model_forward.3} parent=39 // pred_fallthru
          _
        // Predicated region
        $region49: #{trans_model_forward.3} parent=39 // pred_check
          %p273 = pneg %p122
        $region50: #{trans_model_forward.3} parent=39 // pred_check_branch
          %275 = sbr.rel (%p273) target = $region52
        $region51: #{trans_model_forward.3} parent=39 // pred_region
          %277 = dma.done [#allocation6], 2048
        $region52: #{trans_model_forward.3} parent=39 // pred_fallthru
          _
        %s278 = sand.u32 %s46, 1
        %s279 = scalar_lea.sflag [#allocation3], %s278
        %s280 = sand.u32 %s46, 1
        %s281 = smul.addr %s280, 256
        %s282 = scalar_lea.vmem [#allocation2], %s281
        %p283 = pneg %p59
        %p284 = pneg %p56
        %p285 = pneg %p80
        %p286 = pneg %p77
        %p287 = pneg %p101
        %p288 = pneg %p98
        %p289 = pneg %p122
        %p290 = pneg %p119
        %p291 = pneg %p143
        %p292 = pneg %p140
        %p293 = pneg %p173
        %p294 = pneg %p170
        %s295 = sand.u32 %s160, 1
        %s296 = scalar_lea.sflag [#allocation4], %s295
        %s297 = sand.u32 %s160, 1
        %s298 = smul.addr %s297, 128
        %s299 = scalar_lea.vmem [#allocation8], %s298
        %s300 = smul.u32 16, %s29
        %s301 = sadd.s32 %s29, 2
        %s302 = smul.u32 16, %s301
        %v303 = vld [vmem:[%s262] sm:$0xff]
        %v304 = vld [vmem:[%s262 + $0x8] sm:$0xff]
        %v305 = vld [vmem:[%s262 + $0x10] sm:$0xff]
        %v306 = vld [vmem:[%s262 + $0x18] sm:$0xff]
        %v307 = vld [vmem:[%s262 + $0x20] sm:$0xff]
        %v308 = vld [vmem:[%s262 + $0x28] sm:$0xff]
        %v309 = vld [vmem:[%s262 + $0x30] sm:$0xff]
        %v310 = vld [vmem:[%s262 + $0x38] sm:$0xff]
        %v311 = vld [vmem:[%s262 + $0x40] sm:$0xff]
        %v312 = vld [vmem:[%s262 + $0x48] sm:$0xff]
        %v313 = vld [vmem:[%s262 + $0x50] sm:$0xff]
        %v314 = vld [vmem:[%s262 + $0x58] sm:$0xff]
        %v315 = vld [vmem:[%s262 + $0x60] sm:$0xff]
        %v316 = vld [vmem:[%s262 + $0x68] sm:$0xff]
        %v317 = vld [vmem:[%s262 + $0x70] sm:$0xff]
        %v318 = vld [vmem:[%s262 + $0x78] sm:$0xff]
        %v319 = vld [vmem:[%s262 + $0x80] sm:$0xff]
        %v320 = vld [vmem:[%s262 + $0x88] sm:$0xff]
        %v321 = vld [vmem:[%s262 + $0x90] sm:$0xff]
        %v322 = vld [vmem:[%s262 + $0x98] sm:$0xff]
        %v323 = vld [vmem:[%s262 + $0xa0] sm:$0xff]
        %v324 = vld [vmem:[%s262 + $0xa8] sm:$0xff]
        %v325 = vld [vmem:[%s262 + $0xb0] sm:$0xff]
        %v326 = vld [vmem:[%s262 + $0xb8] sm:$0xff]
        %v327 = vld [vmem:[%s262 + $0xc0] sm:$0xff]
        %v328 = vld [vmem:[%s262 + $0xc8] sm:$0xff]
        %v329 = vld [vmem:[%s262 + $0xd0] sm:$0xff]
        %v330 = vld [vmem:[%s262 + $0xd8] sm:$0xff]
        %v331 = vld [vmem:[%s262 + $0xe0] sm:$0xff]
        %v332 = vld [vmem:[%s262 + $0xe8] sm:$0xff]
        %v333 = vld [vmem:[%s262 + $0xf0] sm:$0xff]
        %v334 = vld [vmem:[%s262 + $0xf8] sm:$0xff]
        %v335 = vld [vmem:[#allocation5] sm:$0xff]
        %v336 = vld [vmem:[#allocation5 + $0x8] sm:$0xff]
        %v337 = vld [vmem:[#allocation5 + $0x10] sm:$0xff]
        %v338 = vld [vmem:[#allocation5 + $0x18] sm:$0xff]
        %v339 = vld [vmem:[#allocation5 + $0x20] sm:$0xff]
        %v340 = vld [vmem:[#allocation5 + $0x28] sm:$0xff]
        %v341 = vld [vmem:[#allocation5 + $0x30] sm:$0xff]
        %v342 = vld [vmem:[#allocation5 + $0x38] sm:$0xff]
        %v343 = vld [vmem:[#allocation5 + $0x40] sm:$0xff]
        %v344 = vld [vmem:[#allocation5 + $0x48] sm:$0xff]
        %v345 = vld [vmem:[#allocation5 + $0x50] sm:$0xff]
        %v346 = vld [vmem:[#allocation5 + $0x58] sm:$0xff]
        %v347 = vld [vmem:[#allocation5 + $0x60] sm:$0xff]
        %v348 = vld [vmem:[#allocation5 + $0x68] sm:$0xff]
        %v349 = vld [vmem:[#allocation5 + $0x70] sm:$0xff]
        %v350 = vld [vmem:[#allocation5 + $0x78] sm:$0xff]
        %v351 = vld [vmem:[#allocation5 + $0x80] sm:$0xff]
        %v352 = vld [vmem:[#allocation5 + $0x88] sm:$0xff]
        %v353 = vld [vmem:[#allocation5 + $0x90] sm:$0xff]
        %v354 = vld [vmem:[#allocation5 + $0x98] sm:$0xff]
        %v355 = vld [vmem:[#allocation5 + $0xa0] sm:$0xff]
        %v356 = vld [vmem:[#allocation5 + $0xa8] sm:$0xff]
        %v357 = vld [vmem:[#allocation5 + $0xb0] sm:$0xff]
        %v358 = vld [vmem:[#allocation5 + $0xb8] sm:$0xff]
        %v359 = vld [vmem:[#allocation5 + $0xc0] sm:$0xff]
        %v360 = vld [vmem:[#allocation5 + $0xc8] sm:$0xff]
        %v361 = vld [vmem:[#allocation5 + $0xd0] sm:$0xff]
        %v362 = vld [vmem:[#allocation5 + $0xd8] sm:$0xff]
        %v363 = vld [vmem:[#allocation5 + $0xe0] sm:$0xff]
        %v364 = vld [vmem:[#allocation5 + $0xe8] sm:$0xff]
        %v365 = vld [vmem:[#allocation5 + $0xf0] sm:$0xff]
        %v366 = vld [vmem:[#allocation5 + $0xf8] sm:$0xff]
        %v367 = vld [vmem:[%s2] sm:$0x1]
        %v369 = vperm.slane %v367, 0
        %371 = vmatpush.msra.mxu0 %v350
        %372 = vmatpush.msra.mxu0 %v349
        %373 = vmatpush.msra.mxu0 %v348
        %374 = vmatpush.msra.mxu0 %v347
        %375 = vmatpush.msra.mxu0 %v346
        %376 = vmatpush.msra.mxu0 %v345
        %377 = vmatpush.msra.mxu0 %v344
        %378 = vmatpush.msra.mxu0 %v343
        %379 = vmatpush.msra.mxu0 %v342
        %380 = vmatpush.msra.mxu0 %v341
        %381 = vmatpush.msra.mxu0 %v340
        %382 = vmatpush.msra.mxu0 %v339
        %383 = vmatpush.msra.mxu0 %v338
        %384 = vmatpush.msra.mxu0 %v337
        %385 = vmatpush.msra.mxu0 %v336
        %386 = vmatpush.msra.mxu0 %v335
        %387 = vmatmul.f32.gmra.mxu0 %v303
        %v388 = vpop.f32.mrf.mxu0
        %v389 = vadd.f32 %v369, %v388
        %390 = vmatmul.f32.gmra.mxu0 %v305
        %v391 = vpop.f32.mrf.mxu0
        %v392 = vadd.f32 %v369, %v391
        %393 = vmatmul.f32.gmra.mxu0 %v307
        %v394 = vpop.f32.mrf.mxu0
        %v395 = vadd.f32 %v369, %v394
        %396 = vmatmul.f32.gmra.mxu0 %v309
        %v397 = vpop.f32.mrf.mxu0
        %v398 = vadd.f32 %v369, %v397
        %399 = vmatmul.f32.gmra.mxu0 %v311
        %v400 = vpop.f32.mrf.mxu0
        %v401 = vadd.f32 %v369, %v400
        %402 = vmatmul.f32.gmra.mxu0 %v313
        %v403 = vpop.f32.mrf.mxu0
        %v404 = vadd.f32 %v369, %v403
        %405 = vmatmul.f32.gmra.mxu0 %v315
        %v406 = vpop.f32.mrf.mxu0
        %v407 = vadd.f32 %v369, %v406
        %408 = vmatmul.f32.gmra.mxu0 %v317
        %v409 = vpop.f32.mrf.mxu0
        %v410 = vadd.f32 %v369, %v409
        %411 = vmatmul.f32.gmra.mxu0 %v319
        %v412 = vpop.f32.mrf.mxu0
        %v413 = vadd.f32 %v369, %v412
        %414 = vmatmul.f32.gmra.mxu0 %v321
        %v415 = vpop.f32.mrf.mxu0
        %v416 = vadd.f32 %v369, %v415
        %417 = vmatmul.f32.gmra.mxu0 %v323
        %v418 = vpop.f32.mrf.mxu0
        %v419 = vadd.f32 %v369, %v418
        %420 = vmatmul.f32.gmra.mxu0 %v325
        %v421 = vpop.f32.mrf.mxu0
        %v422 = vadd.f32 %v369, %v421
        %423 = vmatmul.f32.gmra.mxu0 %v327
        %v424 = vpop.f32.mrf.mxu0
        %v425 = vadd.f32 %v369, %v424
        %426 = vmatmul.f32.gmra.mxu0 %v329
        %v427 = vpop.f32.mrf.mxu0
        %v428 = vadd.f32 %v369, %v427
        %429 = vmatmul.f32.gmra.mxu0 %v331
        %v430 = vpop.f32.mrf.mxu0
        %v431 = vadd.f32 %v369, %v430
        %432 = vmatmul.f32.gmra.mxu0 %v333
        %v433 = vpop.f32.mrf.mxu0
        %v434 = vadd.f32 %v369, %v433
        %435 = vdwg.mxu0
        %436 = vmatpush.msra.mxu0 %v366
        %437 = vmatpush.msra.mxu0 %v365
        %438 = vmatpush.msra.mxu0 %v364
        %439 = vmatpush.msra.mxu0 %v363
        %440 = vmatpush.msra.mxu0 %v362
        %441 = vmatpush.msra.mxu0 %v361
        %442 = vmatpush.msra.mxu0 %v360
        %443 = vmatpush.msra.mxu0 %v359
        %444 = vmatpush.msra.mxu0 %v358
        %445 = vmatpush.msra.mxu0 %v357
        %446 = vmatpush.msra.mxu0 %v356
        %447 = vmatpush.msra.mxu0 %v355
        %448 = vmatpush.msra.mxu0 %v354
        %449 = vmatpush.msra.mxu0 %v353
        %450 = vmatpush.msra.mxu0 %v352
        %451 = vmatpush.msra.mxu0 %v351
        %452 = vmatmul.f32.gmra.mxu0 %v304
        %v453 = vpop.f32.mrf.mxu0
        %v454 = vadd.f32 %v389, %v453
        %455 = vmatmul.f32.gmra.mxu0 %v306
        %v456 = vpop.f32.mrf.mxu0
        %v457 = vadd.f32 %v392, %v456
        %458 = vmatmul.f32.gmra.mxu0 %v308
        %v459 = vpop.f32.mrf.mxu0
        %v460 = vadd.f32 %v395, %v459
        %461 = vmatmul.f32.gmra.mxu0 %v310
        %v462 = vpop.f32.mrf.mxu0
        %v463 = vadd.f32 %v398, %v462
        %464 = vmatmul.f32.gmra.mxu0 %v312
        %v465 = vpop.f32.mrf.mxu0
        %v466 = vadd.f32 %v401, %v465
        %467 = vmatmul.f32.gmra.mxu0 %v314
        %v468 = vpop.f32.mrf.mxu0
        %v469 = vadd.f32 %v404, %v468
        %470 = vmatmul.f32.gmra.mxu0 %v316
        %v471 = vpop.f32.mrf.mxu0
        %v472 = vadd.f32 %v407, %v471
        %473 = vmatmul.f32.gmra.mxu0 %v318
        %v474 = vpop.f32.mrf.mxu0
        %v475 = vadd.f32 %v410, %v474
        %476 = vmatmul.f32.gmra.mxu0 %v320
        %v477 = vpop.f32.mrf.mxu0
        %v478 = vadd.f32 %v413, %v477
        %479 = vmatmul.f32.gmra.mxu0 %v322
        %v480 = vpop.f32.mrf.mxu0
        %v481 = vadd.f32 %v416, %v480
        %482 = vmatmul.f32.gmra.mxu0 %v324
        %v483 = vpop.f32.mrf.mxu0
        %v484 = vadd.f32 %v419, %v483
        %485 = vmatmul.f32.gmra.mxu0 %v326
        %v486 = vpop.f32.mrf.mxu0
        %v487 = vadd.f32 %v422, %v486
        %488 = vmatmul.f32.gmra.mxu0 %v328
        %v489 = vpop.f32.mrf.mxu0
        %v490 = vadd.f32 %v425, %v489
        %491 = vmatmul.f32.gmra.mxu0 %v330
        %v492 = vpop.f32.mrf.mxu0
        %v493 = vadd.f32 %v428, %v492
        %494 = vmatmul.f32.gmra.mxu0 %v332
        %v495 = vpop.f32.mrf.mxu0
        %v496 = vadd.f32 %v431, %v495
        %497 = vmatmul.f32.gmra.mxu0 %v334
        %v498 = vpop.f32.mrf.mxu0
        %v499 = vadd.f32 %v434, %v498
        %500 = vdwg.mxu0
        %v501 = vmul.f32 %v454, 0.5
        %v502 = vmul.f32 %v457, 0.5
        %v503 = vmul.f32 %v460, 0.5
        %v504 = vmul.f32 %v463, 0.5
        %v505 = vmul.f32 %v466, 0.5
        %v506 = vmul.f32 %v469, 0.5
        %v507 = vmul.f32 %v472, 0.5
        %v508 = vmul.f32 %v475, 0.5
        %v509 = vmul.f32 %v478, 0.5
        %v510 = vmul.f32 %v481, 0.5
        %v511 = vmul.f32 %v484, 0.5
        %v512 = vmul.f32 %v487, 0.5
        %v513 = vmul.f32 %v490, 0.5
        %v514 = vmul.f32 %v493, 0.5
        %v515 = vmul.f32 %v496, 0.5
        %v516 = vmul.f32 %v499, 0.5
        %v517 = vmul.f32 %v454, 0.70710677
        %v518 = vmul.f32 %v457, 0.70710677
        %v519 = vmul.f32 %v460, 0.70710677
        %v520 = vmul.f32 %v463, 0.70710677
        %v521 = vmul.f32 %v466, 0.70710677
        %v522 = vmul.f32 %v469, 0.70710677
        %v523 = vmul.f32 %v472, 0.70710677
        %v524 = vmul.f32 %v475, 0.70710677
        %v525 = vmul.f32 %v478, 0.70710677
        %v526 = vmul.f32 %v481, 0.70710677
        %v527 = vmul.f32 %v484, 0.70710677
        %v528 = vmul.f32 %v487, 0.70710677
        %v529 = vmul.f32 %v490, 0.70710677
        %v530 = vmul.f32 %v493, 0.70710677
        %v531 = vmul.f32 %v496, 0.70710677
        %v532 = vmul.f32 %v499, 0.70710677
        %v533 = vand.u32 2147483647, %v517
        %v534 = vand.u32 2147483647, %v518
        %v535 = vand.u32 2147483647, %v519
        %v536 = vand.u32 2147483647, %v520
        %v537 = vand.u32 2147483647, %v521
        %v538 = vand.u32 2147483647, %v522
        %v539 = vand.u32 2147483647, %v523
        %v540 = vand.u32 2147483647, %v524
        %v541 = vand.u32 2147483647, %v525
        %v542 = vand.u32 2147483647, %v526
        %v543 = vand.u32 2147483647, %v527
        %v544 = vand.u32 2147483647, %v528
        %v545 = vand.u32 2147483647, %v529
        %v546 = vand.u32 2147483647, %v530
        %v547 = vand.u32 2147483647, %v531
        %v548 = vand.u32 2147483647, %v532
        %v549 = vmul.f32 %v533, 0.3275911
        %v550 = vmul.f32 %v534, 0.3275911
        %v551 = vmul.f32 %v535, 0.3275911
        %v552 = vmul.f32 %v536, 0.3275911
        %v553 = vmul.f32 %v537, 0.3275911
        %v554 = vmul.f32 %v538, 0.3275911
        %v555 = vmul.f32 %v539, 0.3275911
        %v556 = vmul.f32 %v540, 0.3275911
        %v557 = vmul.f32 %v541, 0.3275911
        %v558 = vmul.f32 %v542, 0.3275911
        %v559 = vmul.f32 %v543, 0.3275911
        %v560 = vmul.f32 %v544, 0.3275911
        %v561 = vmul.f32 %v545, 0.3275911
        %v562 = vmul.f32 %v546, 0.3275911
        %v563 = vmul.f32 %v547, 0.3275911
        %v564 = vmul.f32 %v548, 0.3275911
        %v565 = vadd.f32 %v549, 1.0
        %v566 = vadd.f32 %v550, 1.0
        %v567 = vadd.f32 %v551, 1.0
        %v568 = vadd.f32 %v552, 1.0
        %v569 = vadd.f32 %v553, 1.0
        %v570 = vadd.f32 %v554, 1.0
        %v571 = vadd.f32 %v555, 1.0
        %v572 = vadd.f32 %v556, 1.0
        %v573 = vadd.f32 %v557, 1.0
        %v574 = vadd.f32 %v558, 1.0
        %v575 = vadd.f32 %v559, 1.0
        %v576 = vadd.f32 %v560, 1.0
        %v577 = vadd.f32 %v561, 1.0
        %v578 = vadd.f32 %v562, 1.0
        %v579 = vadd.f32 %v563, 1.0
        %v580 = vadd.f32 %v564, 1.0
        %v581 = vrcp.pop %v565
        %v582 = vmul.f32 %v565, %v581
        %v583 = vsub.f32 1.0, %v582
        %v584 = vmul.f32 %v581, %v583
        %v585 = vadd.f32 %v581, %v584
        %vm586 = vweird.f32 %v565
        %vm587 = vweird.f32 %v581
        %vm588 = vmor %vm586, %vm587
        %v589 = vsel %vm588, %v581, %v585
        %v590 = vand.u32 2147483647, %v565
        %vm591 = vcmp.eq.f32.partialorder %v590, 8.507059e+37
        %v592 = vand.u32 %v565, 2147483648
        %v593 = vor.u32 1.1754944e-38, %v592
        %v594 = vsel %vm591, %v593, %v589
        %v595 = vmul.f32 1.0, %v594
        %v596 = vrcp.pop %v566
        %v597 = vmul.f32 %v566, %v596
        %v598 = vsub.f32 1.0, %v597
        %v599 = vmul.f32 %v596, %v598
        %v600 = vadd.f32 %v596, %v599
        %vm601 = vweird.f32 %v566
        %vm602 = vweird.f32 %v596
        %vm603 = vmor %vm601, %vm602
        %v604 = vsel %vm603, %v596, %v600
        %v605 = vand.u32 2147483647, %v566
        %vm606 = vcmp.eq.f32.partialorder %v605, 8.507059e+37
        %v607 = vand.u32 %v566, 2147483648
        %v608 = vor.u32 1.1754944e-38, %v607
        %v609 = vsel %vm606, %v608, %v604
        %v610 = vmul.f32 1.0, %v609
        %v611 = vrcp.pop %v567
        %v612 = vmul.f32 %v567, %v611
        %v613 = vsub.f32 1.0, %v612
        %v614 = vmul.f32 %v611, %v613
        %v615 = vadd.f32 %v611, %v614
        %vm616 = vweird.f32 %v567
        %vm617 = vweird.f32 %v611
        %vm618 = vmor %vm616, %vm617
        %v619 = vsel %vm618, %v611, %v615
        %v620 = vand.u32 2147483647, %v567
        %vm621 = vcmp.eq.f32.partialorder %v620, 8.507059e+37
        %v622 = vand.u32 %v567, 2147483648
        %v623 = vor.u32 1.1754944e-38, %v622
        %v624 = vsel %vm621, %v623, %v619
        %v625 = vmul.f32 1.0, %v624
        %v626 = vrcp.pop %v568
        %v627 = vmul.f32 %v568, %v626
        %v628 = vsub.f32 1.0, %v627
        %v629 = vmul.f32 %v626, %v628
        %v630 = vadd.f32 %v626, %v629
        %vm631 = vweird.f32 %v568
        %vm632 = vweird.f32 %v626
        %vm633 = vmor %vm631, %vm632
        %v634 = vsel %vm633, %v626, %v630
        %v635 = vand.u32 2147483647, %v568
        %vm636 = vcmp.eq.f32.partialorder %v635, 8.507059e+37
        %v637 = vand.u32 %v568, 2147483648
        %v638 = vor.u32 1.1754944e-38, %v637
        %v639 = vsel %vm636, %v638, %v634
        %v640 = vmul.f32 1.0, %v639
        %v641 = vrcp.pop %v569
        %v642 = vmul.f32 %v569, %v641
        %v643 = vsub.f32 1.0, %v642
        %v644 = vmul.f32 %v641, %v643
        %v645 = vadd.f32 %v641, %v644
        %vm646 = vweird.f32 %v569
        %vm647 = vweird.f32 %v641
        %vm648 = vmor %vm646, %vm647
        %v649 = vsel %vm648, %v641, %v645
        %v650 = vand.u32 2147483647, %v569
        %vm651 = vcmp.eq.f32.partialorder %v650, 8.507059e+37
        %v652 = vand.u32 %v569, 2147483648
        %v653 = vor.u32 1.1754944e-38, %v652
        %v654 = vsel %vm651, %v653, %v649
        %v655 = vmul.f32 1.0, %v654
        %v656 = vrcp.pop %v570
        %v657 = vmul.f32 %v570, %v656
        %v658 = vsub.f32 1.0, %v657
        %v659 = vmul.f32 %v656, %v658
        %v660 = vadd.f32 %v656, %v659
        %vm661 = vweird.f32 %v570
        %vm662 = vweird.f32 %v656
        %vm663 = vmor %vm661, %vm662
        %v664 = vsel %vm663, %v656, %v660
        %v665 = vand.u32 2147483647, %v570
        %vm666 = vcmp.eq.f32.partialorder %v665, 8.507059e+37
        %v667 = vand.u32 %v570, 2147483648
        %v668 = vor.u32 1.1754944e-38, %v667
        %v669 = vsel %vm666, %v668, %v664
        %v670 = vmul.f32 1.0, %v669
        %v671 = vrcp.pop %v571
        %v672 = vmul.f32 %v571, %v671
        %v673 = vsub.f32 1.0, %v672
        %v674 = vmul.f32 %v671, %v673
        %v675 = vadd.f32 %v671, %v674
        %vm676 = vweird.f32 %v571
        %vm677 = vweird.f32 %v671
        %vm678 = vmor %vm676, %vm677
        %v679 = vsel %vm678, %v671, %v675
        %v680 = vand.u32 2147483647, %v571
        %vm681 = vcmp.eq.f32.partialorder %v680, 8.507059e+37
        %v682 = vand.u32 %v571, 2147483648
        %v683 = vor.u32 1.1754944e-38, %v682
        %v684 = vsel %vm681, %v683, %v679
        %v685 = vmul.f32 1.0, %v684
        %v686 = vrcp.pop %v572
        %v687 = vmul.f32 %v572, %v686
        %v688 = vsub.f32 1.0, %v687
        %v689 = vmul.f32 %v686, %v688
        %v690 = vadd.f32 %v686, %v689
        %vm691 = vweird.f32 %v572
        %vm692 = vweird.f32 %v686
        %vm693 = vmor %vm691, %vm692
        %v694 = vsel %vm693, %v686, %v690
        %v695 = vand.u32 2147483647, %v572
        %vm696 = vcmp.eq.f32.partialorder %v695, 8.507059e+37
        %v697 = vand.u32 %v572, 2147483648
        %v698 = vor.u32 1.1754944e-38, %v697
        %v699 = vsel %vm696, %v698, %v694
        %v700 = vmul.f32 1.0, %v699
        %v701 = vrcp.pop %v573
        %v702 = vmul.f32 %v573, %v701
        %v703 = vsub.f32 1.0, %v702
        %v704 = vmul.f32 %v701, %v703
        %v705 = vadd.f32 %v701, %v704
        %vm706 = vweird.f32 %v573
        %vm707 = vweird.f32 %v701
        %vm708 = vmor %vm706, %vm707
        %v709 = vsel %vm708, %v701, %v705
        %v710 = vand.u32 2147483647, %v573
        %vm711 = vcmp.eq.f32.partialorder %v710, 8.507059e+37
        %v712 = vand.u32 %v573, 2147483648
        %v713 = vor.u32 1.1754944e-38, %v712
        %v714 = vsel %vm711, %v713, %v709
        %v715 = vmul.f32 1.0, %v714
        %v716 = vrcp.pop %v574
        %v717 = vmul.f32 %v574, %v716
        %v718 = vsub.f32 1.0, %v717
        %v719 = vmul.f32 %v716, %v718
        %v720 = vadd.f32 %v716, %v719
        %vm721 = vweird.f32 %v574
        %vm722 = vweird.f32 %v716
        %vm723 = vmor %vm721, %vm722
        %v724 = vsel %vm723, %v716, %v720
        %v725 = vand.u32 2147483647, %v574
        %vm726 = vcmp.eq.f32.partialorder %v725, 8.507059e+37
        %v727 = vand.u32 %v574, 2147483648
        %v728 = vor.u32 1.1754944e-38, %v727
        %v729 = vsel %vm726, %v728, %v724
        %v730 = vmul.f32 1.0, %v729
        %v731 = vrcp.pop %v575
        %v732 = vmul.f32 %v575, %v731
        %v733 = vsub.f32 1.0, %v732
        %v734 = vmul.f32 %v731, %v733
        %v735 = vadd.f32 %v731, %v734
        %vm736 = vweird.f32 %v575
        %vm737 = vweird.f32 %v731
        %vm738 = vmor %vm736, %vm737
        %v739 = vsel %vm738, %v731, %v735
        %v740 = vand.u32 2147483647, %v575
        %vm741 = vcmp.eq.f32.partialorder %v740, 8.507059e+37
        %v742 = vand.u32 %v575, 2147483648
        %v743 = vor.u32 1.1754944e-38, %v742
        %v744 = vsel %vm741, %v743, %v739
        %v745 = vmul.f32 1.0, %v744
        %v746 = vrcp.pop %v576
        %v747 = vmul.f32 %v576, %v746
        %v748 = vsub.f32 1.0, %v747
        %v749 = vmul.f32 %v746, %v748
        %v750 = vadd.f32 %v746, %v749
        %vm751 = vweird.f32 %v576
        %vm752 = vweird.f32 %v746
        %vm753 = vmor %vm751, %vm752
        %v754 = vsel %vm753, %v746, %v750
        %v755 = vand.u32 2147483647, %v576
        %vm756 = vcmp.eq.f32.partialorder %v755, 8.507059e+37
        %v757 = vand.u32 %v576, 2147483648
        %v758 = vor.u32 1.1754944e-38, %v757
        %v759 = vsel %vm756, %v758, %v754
        %v760 = vmul.f32 1.0, %v759
        %v761 = vrcp.pop %v577
        %v762 = vmul.f32 %v577, %v761
        %v763 = vsub.f32 1.0, %v762
        %v764 = vmul.f32 %v761, %v763
        %v765 = vadd.f32 %v761, %v764
        %vm766 = vweird.f32 %v577
        %vm767 = vweird.f32 %v761
        %vm768 = vmor %vm766, %vm767
        %v769 = vsel %vm768, %v761, %v765
        %v770 = vand.u32 2147483647, %v577
        %vm771 = vcmp.eq.f32.partialorder %v770, 8.507059e+37
        %v772 = vand.u32 %v577, 2147483648
        %v773 = vor.u32 1.1754944e-38, %v772
        %v774 = vsel %vm771, %v773, %v769
        %v775 = vmul.f32 1.0, %v774
        %v776 = vrcp.pop %v578
        %v777 = vmul.f32 %v578, %v776
        %v778 = vsub.f32 1.0, %v777
        %v779 = vmul.f32 %v776, %v778
        %v780 = vadd.f32 %v776, %v779
        %vm781 = vweird.f32 %v578
        %vm782 = vweird.f32 %v776
        %vm783 = vmor %vm781, %vm782
        %v784 = vsel %vm783, %v776, %v780
        %v785 = vand.u32 2147483647, %v578
        %vm786 = vcmp.eq.f32.partialorder %v785, 8.507059e+37
        %v787 = vand.u32 %v578, 2147483648
        %v788 = vor.u32 1.1754944e-38, %v787
        %v789 = vsel %vm786, %v788, %v784
        %v790 = vmul.f32 1.0, %v789
        %v791 = vrcp.pop %v579
        %v792 = vmul.f32 %v579, %v791
        %v793 = vsub.f32 1.0, %v792
        %v794 = vmul.f32 %v791, %v793
        %v795 = vadd.f32 %v791, %v794
        %vm796 = vweird.f32 %v579
        %vm797 = vweird.f32 %v791
        %vm798 = vmor %vm796, %vm797
        %v799 = vsel %vm798, %v791, %v795
        %v800 = vand.u32 2147483647, %v579
        %vm801 = vcmp.eq.f32.partialorder %v800, 8.507059e+37
        %v802 = vand.u32 %v579, 2147483648
        %v803 = vor.u32 1.1754944e-38, %v802
        %v804 = vsel %vm801, %v803, %v799
        %v805 = vmul.f32 1.0, %v804
        %v806 = vrcp.pop %v580
        %v807 = vmul.f32 %v580, %v806
        %v808 = vsub.f32 1.0, %v807
        %v809 = vmul.f32 %v806, %v808
        %v810 = vadd.f32 %v806, %v809
        %vm811 = vweird.f32 %v580
        %vm812 = vweird.f32 %v806
        %vm813 = vmor %vm811, %vm812
        %v814 = vsel %vm813, %v806, %v810
        %v815 = vand.u32 2147483647, %v580
        %vm816 = vcmp.eq.f32.partialorder %v815, 8.507059e+37
        %v817 = vand.u32 %v580, 2147483648
        %v818 = vor.u32 1.1754944e-38, %v817
        %v819 = vsel %vm816, %v818, %v814
        %v820 = vmul.f32 1.0, %v819
        %v821 = vmul.f32 %v595, 1.0614054
        %v822 = vmul.f32 %v610, 1.0614054
        %v823 = vmul.f32 %v625, 1.0614054
        %v824 = vmul.f32 %v640, 1.0614054
        %v825 = vmul.f32 %v655, 1.0614054
        %v826 = vmul.f32 %v670, 1.0614054
        %v827 = vmul.f32 %v685, 1.0614054
        %v828 = vmul.f32 %v700, 1.0614054
        %v829 = vmul.f32 %v715, 1.0614054
        %v830 = vmul.f32 %v730, 1.0614054
        %v831 = vmul.f32 %v745, 1.0614054
        %v832 = vmul.f32 %v760, 1.0614054
        %v833 = vmul.f32 %v775, 1.0614054
        %v834 = vmul.f32 %v790, 1.0614054
        %v835 = vmul.f32 %v805, 1.0614054
        %v836 = vmul.f32 %v820, 1.0614054
        %v837 = vadd.f32 %v821, -1.4531521
        %v838 = vadd.f32 %v822, -1.4531521
        %v839 = vadd.f32 %v823, -1.4531521
        %v840 = vadd.f32 %v824, -1.4531521
        %v841 = vadd.f32 %v825, -1.4531521
        %v842 = vadd.f32 %v826, -1.4531521
        %v843 = vadd.f32 %v827, -1.4531521
        %v844 = vadd.f32 %v828, -1.4531521
        %v845 = vadd.f32 %v829, -1.4531521
        %v846 = vadd.f32 %v830, -1.4531521
        %v847 = vadd.f32 %v831, -1.4531521
        %v848 = vadd.f32 %v832, -1.4531521
        %v849 = vadd.f32 %v833, -1.4531521
        %v850 = vadd.f32 %v834, -1.4531521
        %v851 = vadd.f32 %v835, -1.4531521
        %v852 = vadd.f32 %v836, -1.4531521
        %v853 = vmul.f32 %v837, %v595
        %v854 = vmul.f32 %v838, %v610
        %v855 = vmul.f32 %v839, %v625
        %v856 = vmul.f32 %v840, %v640
        %v857 = vmul.f32 %v841, %v655
        %v858 = vmul.f32 %v842, %v670
        %v859 = vmul.f32 %v843, %v685
        %v860 = vmul.f32 %v844, %v700
        %v861 = vmul.f32 %v845, %v715
        %v862 = vmul.f32 %v846, %v730
        %v863 = vmul.f32 %v847, %v745
        %v864 = vmul.f32 %v848, %v760
        %v865 = vmul.f32 %v849, %v775
        %v866 = vmul.f32 %v850, %v790
        %v867 = vmul.f32 %v851, %v805
        %v868 = vmul.f32 %v852, %v820
        %v869 = vadd.f32 %v853, 1.4214138
        %v870 = vadd.f32 %v854, 1.4214138
        %v871 = vadd.f32 %v855, 1.4214138
        %v872 = vadd.f32 %v856, 1.4214138
        %v873 = vadd.f32 %v857, 1.4214138
        %v874 = vadd.f32 %v858, 1.4214138
        %v875 = vadd.f32 %v859, 1.4214138
        %v876 = vadd.f32 %v860, 1.4214138
        %v877 = vadd.f32 %v861, 1.4214138
        %v878 = vadd.f32 %v862, 1.4214138
        %v879 = vadd.f32 %v863, 1.4214138
        %v880 = vadd.f32 %v864, 1.4214138
        %v881 = vadd.f32 %v865, 1.4214138
        %v882 = vadd.f32 %v866, 1.4214138
        %v883 = vadd.f32 %v867, 1.4214138
        %v884 = vadd.f32 %v868, 1.4214138
        %v885 = vmul.f32 %v869, %v595
        %v886 = vmul.f32 %v870, %v610
        %v887 = vmul.f32 %v871, %v625
        %v888 = vmul.f32 %v872, %v640
        %v889 = vmul.f32 %v873, %v655
        %v890 = vmul.f32 %v874, %v670
        %v891 = vmul.f32 %v875, %v685
        %v892 = vmul.f32 %v876, %v700
        %v893 = vmul.f32 %v877, %v715
        %v894 = vmul.f32 %v878, %v730
        %v895 = vmul.f32 %v879, %v745
        %v896 = vmul.f32 %v880, %v760
        %v897 = vmul.f32 %v881, %v775
        %v898 = vmul.f32 %v882, %v790
        %v899 = vmul.f32 %v883, %v805
        %v900 = vmul.f32 %v884, %v820
        %v901 = vadd.f32 %v885, -0.28449672
        %v902 = vadd.f32 %v886, -0.28449672
        %v903 = vadd.f32 %v887, -0.28449672
        %v904 = vadd.f32 %v888, -0.28449672
        %v905 = vadd.f32 %v889, -0.28449672
        %v906 = vadd.f32 %v890, -0.28449672
        %v907 = vadd.f32 %v891, -0.28449672
        %v908 = vadd.f32 %v892, -0.28449672
        %v909 = vadd.f32 %v893, -0.28449672
        %v910 = vadd.f32 %v894, -0.28449672
        %v911 = vadd.f32 %v895, -0.28449672
        %v912 = vadd.f32 %v896, -0.28449672
        %v913 = vadd.f32 %v897, -0.28449672
        %v914 = vadd.f32 %v898, -0.28449672
        %v915 = vadd.f32 %v899, -0.28449672
        %v916 = vadd.f32 %v900, -0.28449672
        %v917 = vmul.f32 %v901, %v595
        %v918 = vmul.f32 %v902, %v610
        %v919 = vmul.f32 %v903, %v625
        %v920 = vmul.f32 %v904, %v640
        %v921 = vmul.f32 %v905, %v655
        %v922 = vmul.f32 %v906, %v670
        %v923 = vmul.f32 %v907, %v685
        %v924 = vmul.f32 %v908, %v700
        %v925 = vmul.f32 %v909, %v715
        %v926 = vmul.f32 %v910, %v730
        %v927 = vmul.f32 %v911, %v745
        %v928 = vmul.f32 %v912, %v760
        %v929 = vmul.f32 %v913, %v775
        %v930 = vmul.f32 %v914, %v790
        %v931 = vmul.f32 %v915, %v805
        %v932 = vmul.f32 %v916, %v820
        %v933 = vadd.f32 %v917, 0.2548296
        %v934 = vadd.f32 %v918, 0.2548296
        %v935 = vadd.f32 %v919, 0.2548296
        %v936 = vadd.f32 %v920, 0.2548296
        %v937 = vadd.f32 %v921, 0.2548296
        %v938 = vadd.f32 %v922, 0.2548296
        %v939 = vadd.f32 %v923, 0.2548296
        %v940 = vadd.f32 %v924, 0.2548296
        %v941 = vadd.f32 %v925, 0.2548296
        %v942 = vadd.f32 %v926, 0.2548296
        %v943 = vadd.f32 %v927, 0.2548296
        %v944 = vadd.f32 %v928, 0.2548296
        %v945 = vadd.f32 %v929, 0.2548296
        %v946 = vadd.f32 %v930, 0.2548296
        %v947 = vadd.f32 %v931, 0.2548296
        %v948 = vadd.f32 %v932, 0.2548296
        %v949 = vmul.f32 %v933, %v595
        %v950 = vmul.f32 %v934, %v610
        %v951 = vmul.f32 %v935, %v625
        %v952 = vmul.f32 %v936, %v640
        %v953 = vmul.f32 %v937, %v655
        %v954 = vmul.f32 %v938, %v670
        %v955 = vmul.f32 %v939, %v685
        %v956 = vmul.f32 %v940, %v700
        %v957 = vmul.f32 %v941, %v715
        %v958 = vmul.f32 %v942, %v730
        %v959 = vmul.f32 %v943, %v745
        %v960 = vmul.f32 %v944, %v760
        %v961 = vmul.f32 %v945, %v775
        %v962 = vmul.f32 %v946, %v790
        %v963 = vmul.f32 %v947, %v805
        %v964 = vmul.f32 %v948, %v820
        %v965 = vsub.f32 0.0, %v533
        %v966 = vsub.f32 0.0, %v534
        %v967 = vsub.f32 0.0, %v535
        %v968 = vsub.f32 0.0, %v536
        %v969 = vsub.f32 0.0, %v537
        %v970 = vsub.f32 0.0, %v538
        %v971 = vsub.f32 0.0, %v539
        %v972 = vsub.f32 0.0, %v540
        %v973 = vsub.f32 0.0, %v541
        %v974 = vsub.f32 0.0, %v542
        %v975 = vsub.f32 0.0, %v543
        %v976 = vsub.f32 0.0, %v544
        %v977 = vsub.f32 0.0, %v545
        %v978 = vsub.f32 0.0, %v546
        %v979 = vsub.f32 0.0, %v547
        %v980 = vsub.f32 0.0, %v548
        %v981 = vmul.f32 %v965, %v533
        %v982 = vmul.f32 %v966, %v534
        %v983 = vmul.f32 %v967, %v535
        %v984 = vmul.f32 %v968, %v536
        %v985 = vmul.f32 %v969, %v537
        %v986 = vmul.f32 %v970, %v538
        %v987 = vmul.f32 %v971, %v539
        %v988 = vmul.f32 %v972, %v540
        %v989 = vmul.f32 %v973, %v541
        %v990 = vmul.f32 %v974, %v542
        %v991 = vmul.f32 %v975, %v543
        %v992 = vmul.f32 %v976, %v544
        %v993 = vmul.f32 %v977, %v545
        %v994 = vmul.f32 %v978, %v546
        %v995 = vmul.f32 %v979, %v547
        %v996 = vmul.f32 %v980, %v548
        %v997 = vmul.f32 %v981, 1.442695
        %v998 = vpow.pop %v997
        %v999 = vmul.f32 %v982, 1.442695
        %v1000 = vpow.pop %v999
        %v1001 = vmul.f32 %v983, 1.442695
        %v1002 = vpow.pop %v1001
        %v1003 = vmul.f32 %v984, 1.442695
        %v1004 = vpow.pop %v1003
        %v1005 = vmul.f32 %v985, 1.442695
        %v1006 = vpow.pop %v1005
        %v1007 = vmul.f32 %v986, 1.442695
        %v1008 = vpow.pop %v1007
        %v1009 = vmul.f32 %v987, 1.442695
        %v1010 = vpow.pop %v1009
        %v1011 = vmul.f32 %v988, 1.442695
        %v1012 = vpow.pop %v1011
        %v1013 = vmul.f32 %v989, 1.442695
        %v1014 = vpow.pop %v1013
        %v1015 = vmul.f32 %v990, 1.442695
        %v1016 = vpow.pop %v1015
        %v1017 = vmul.f32 %v991, 1.442695
        %v1018 = vpow.pop %v1017
        %v1019 = vmul.f32 %v992, 1.442695
        %v1020 = vpow.pop %v1019
        %v1021 = vmul.f32 %v993, 1.442695
        %v1022 = vpow.pop %v1021
        %v1023 = vmul.f32 %v994, 1.442695
        %v1024 = vpow.pop %v1023
        %v1025 = vmul.f32 %v995, 1.442695
        %v1026 = vpow.pop %v1025
        %v1027 = vmul.f32 %v996, 1.442695
        %v1028 = vpow.pop %v1027
        %v1029 = vmul.f32 %v949, %v998
        %v1030 = vmul.f32 %v950, %v1000
        %v1031 = vmul.f32 %v951, %v1002
        %v1032 = vmul.f32 %v952, %v1004
        %v1033 = vmul.f32 %v953, %v1006
        %v1034 = vmul.f32 %v954, %v1008
        %v1035 = vmul.f32 %v955, %v1010
        %v1036 = vmul.f32 %v956, %v1012
        %v1037 = vmul.f32 %v957, %v1014
        %v1038 = vmul.f32 %v958, %v1016
        %v1039 = vmul.f32 %v959, %v1018
        %v1040 = vmul.f32 %v960, %v1020
        %v1041 = vmul.f32 %v961, %v1022
        %v1042 = vmul.f32 %v962, %v1024
        %v1043 = vmul.f32 %v963, %v1026
        %v1044 = vmul.f32 %v964, %v1028
        %v1045 = vsub.f32 1.0, %v1029
        %v1046 = vsub.f32 1.0, %v1030
        %v1047 = vsub.f32 1.0, %v1031
        %v1048 = vsub.f32 1.0, %v1032
        %v1049 = vsub.f32 1.0, %v1033
        %v1050 = vsub.f32 1.0, %v1034
        %v1051 = vsub.f32 1.0, %v1035
        %v1052 = vsub.f32 1.0, %v1036
        %v1053 = vsub.f32 1.0, %v1037
        %v1054 = vsub.f32 1.0, %v1038
        %v1055 = vsub.f32 1.0, %v1039
        %v1056 = vsub.f32 1.0, %v1040
        %v1057 = vsub.f32 1.0, %v1041
        %v1058 = vsub.f32 1.0, %v1042
        %v1059 = vsub.f32 1.0, %v1043
        %v1060 = vsub.f32 1.0, %v1044
        %vm1061 = vcmp.ge.f32.partialorder %v517, 0.0
        %vm1062 = vcmp.ge.f32.partialorder %v518, 0.0
        %vm1063 = vcmp.ge.f32.partialorder %v519, 0.0
        %vm1064 = vcmp.ge.f32.partialorder %v520, 0.0
        %vm1065 = vcmp.ge.f32.partialorder %v521, 0.0
        %vm1066 = vcmp.ge.f32.partialorder %v522, 0.0
        %vm1067 = vcmp.ge.f32.partialorder %v523, 0.0
        %vm1068 = vcmp.ge.f32.partialorder %v524, 0.0
        %vm1069 = vcmp.ge.f32.partialorder %v525, 0.0
        %vm1070 = vcmp.ge.f32.partialorder %v526, 0.0
        %vm1071 = vcmp.ge.f32.partialorder %v527, 0.0
        %vm1072 = vcmp.ge.f32.partialorder %v528, 0.0
        %vm1073 = vcmp.ge.f32.partialorder %v529, 0.0
        %vm1074 = vcmp.ge.f32.partialorder %v530, 0.0
        %vm1075 = vcmp.ge.f32.partialorder %v531, 0.0
        %vm1076 = vcmp.ge.f32.partialorder %v532, 0.0
        %v1077 = vsub.f32 0.0, %v1045
        %v1078 = vsub.f32 0.0, %v1046
        %v1079 = vsub.f32 0.0, %v1047
        %v1080 = vsub.f32 0.0, %v1048
        %v1081 = vsub.f32 0.0, %v1049
        %v1082 = vsub.f32 0.0, %v1050
        %v1083 = vsub.f32 0.0, %v1051
        %v1084 = vsub.f32 0.0, %v1052
        %v1085 = vsub.f32 0.0, %v1053
        %v1086 = vsub.f32 0.0, %v1054
        %v1087 = vsub.f32 0.0, %v1055
        %v1088 = vsub.f32 0.0, %v1056
        %v1089 = vsub.f32 0.0, %v1057
        %v1090 = vsub.f32 0.0, %v1058
        %v1091 = vsub.f32 0.0, %v1059
        %v1092 = vsub.f32 0.0, %v1060
        %v1093 = vsel %vm1061, %v1045, %v1077
        %v1094 = vsel %vm1062, %v1046, %v1078
        %v1095 = vsel %vm1063, %v1047, %v1079
        %v1096 = vsel %vm1064, %v1048, %v1080
        %v1097 = vsel %vm1065, %v1049, %v1081
        %v1098 = vsel %vm1066, %v1050, %v1082
        %v1099 = vsel %vm1067, %v1051, %v1083
        %v1100 = vsel %vm1068, %v1052, %v1084
        %v1101 = vsel %vm1069, %v1053, %v1085
        %v1102 = vsel %vm1070, %v1054, %v1086
        %v1103 = vsel %vm1071, %v1055, %v1087
        %v1104 = vsel %vm1072, %v1056, %v1088
        %v1105 = vsel %vm1073, %v1057, %v1089
        %v1106 = vsel %vm1074, %v1058, %v1090
        %v1107 = vsel %vm1075, %v1059, %v1091
        %v1108 = vsel %vm1076, %v1060, %v1092
        %v1109 = vadd.f32 %v1093, 1.0
        %v1110 = vadd.f32 %v1094, 1.0
        %v1111 = vadd.f32 %v1095, 1.0
        %v1112 = vadd.f32 %v1096, 1.0
        %v1113 = vadd.f32 %v1097, 1.0
        %v1114 = vadd.f32 %v1098, 1.0
        %v1115 = vadd.f32 %v1099, 1.0
        %v1116 = vadd.f32 %v1100, 1.0
        %v1117 = vadd.f32 %v1101, 1.0
        %v1118 = vadd.f32 %v1102, 1.0
        %v1119 = vadd.f32 %v1103, 1.0
        %v1120 = vadd.f32 %v1104, 1.0
        %v1121 = vadd.f32 %v1105, 1.0
        %v1122 = vadd.f32 %v1106, 1.0
        %v1123 = vadd.f32 %v1107, 1.0
        %v1124 = vadd.f32 %v1108, 1.0
        %v1125 = vmul.f32 %v501, %v1109
        %v1126 = vmul.f32 %v502, %v1110
        %v1127 = vmul.f32 %v503, %v1111
        %v1128 = vmul.f32 %v504, %v1112
        %v1129 = vmul.f32 %v505, %v1113
        %v1130 = vmul.f32 %v506, %v1114
        %v1131 = vmul.f32 %v507, %v1115
        %v1132 = vmul.f32 %v508, %v1116
        %v1133 = vmul.f32 %v509, %v1117
        %v1134 = vmul.f32 %v510, %v1118
        %v1135 = vmul.f32 %v511, %v1119
        %v1136 = vmul.f32 %v512, %v1120
        %v1137 = vmul.f32 %v513, %v1121
        %v1138 = vmul.f32 %v514, %v1122
        %v1139 = vmul.f32 %v515, %v1123
        %v1140 = vmul.f32 %v516, %v1124
        %v1141 = vld [vmem:[#allocation7] sm:$0xff]
        %v1142 = vld [vmem:[#allocation7 + $0x8] sm:$0xff]
        %v1143 = vld [vmem:[#allocation7 + $0x10] sm:$0xff]
        %v1144 = vld [vmem:[#allocation7 + $0x18] sm:$0xff]
        %v1145 = vld [vmem:[#allocation7 + $0x20] sm:$0xff]
        %v1146 = vld [vmem:[#allocation7 + $0x28] sm:$0xff]
        %v1147 = vld [vmem:[#allocation7 + $0x30] sm:$0xff]
        %v1148 = vld [vmem:[#allocation7 + $0x38] sm:$0xff]
        %v1149 = vld [vmem:[#allocation7 + $0x40] sm:$0xff]
        %v1150 = vld [vmem:[#allocation7 + $0x48] sm:$0xff]
        %v1151 = vld [vmem:[#allocation7 + $0x50] sm:$0xff]
        %v1152 = vld [vmem:[#allocation7 + $0x58] sm:$0xff]
        %v1153 = vld [vmem:[#allocation7 + $0x60] sm:$0xff]
        %v1154 = vld [vmem:[#allocation7 + $0x68] sm:$0xff]
        %v1155 = vld [vmem:[#allocation7 + $0x70] sm:$0xff]
        %v1156 = vld [vmem:[#allocation7 + $0x78] sm:$0xff]
        %v1157 = vld [vmem:[%s4] sm:$0x1]
        %v1159 = vperm.slane %v1157, 0
        %1161 = vmatpush.msra.mxu0 %v1156
        %1162 = vmatpush.msra.mxu0 %v1155
        %1163 = vmatpush.msra.mxu0 %v1154
        %1164 = vmatpush.msra.mxu0 %v1153
        %1165 = vmatpush.msra.mxu0 %v1152
        %1166 = vmatpush.msra.mxu0 %v1151
        %1167 = vmatpush.msra.mxu0 %v1150
        %1168 = vmatpush.msra.mxu0 %v1149
        %1169 = vmatpush.msra.mxu0 %v1148
        %1170 = vmatpush.msra.mxu0 %v1147
        %1171 = vmatpush.msra.mxu0 %v1146
        %1172 = vmatpush.msra.mxu0 %v1145
        %1173 = vmatpush.msra.mxu0 %v1144
        %1174 = vmatpush.msra.mxu0 %v1143
        %1175 = vmatpush.msra.mxu0 %v1142
        %1176 = vmatpush.msra.mxu0 %v1141
        %1177 = vmatmul.f32.gmra.mxu0 %v1125
        %v1178 = vpop.f32.mrf.mxu0
        %v1179 = vadd.f32 %v1159, %v1178
        %1180 = vmatmul.f32.gmra.mxu0 %v1126
        %v1181 = vpop.f32.mrf.mxu0
        %v1182 = vadd.f32 %v1159, %v1181
        %1183 = vmatmul.f32.gmra.mxu0 %v1127
        %v1184 = vpop.f32.mrf.mxu0
        %v1185 = vadd.f32 %v1159, %v1184
        %1186 = vmatmul.f32.gmra.mxu0 %v1128
        %v1187 = vpop.f32.mrf.mxu0
        %v1188 = vadd.f32 %v1159, %v1187
        %1189 = vmatmul.f32.gmra.mxu0 %v1129
        %v1190 = vpop.f32.mrf.mxu0
        %v1191 = vadd.f32 %v1159, %v1190
        %1192 = vmatmul.f32.gmra.mxu0 %v1130
        %v1193 = vpop.f32.mrf.mxu0
        %v1194 = vadd.f32 %v1159, %v1193
        %1195 = vmatmul.f32.gmra.mxu0 %v1131
        %v1196 = vpop.f32.mrf.mxu0
        %v1197 = vadd.f32 %v1159, %v1196
        %1198 = vmatmul.f32.gmra.mxu0 %v1132
        %v1199 = vpop.f32.mrf.mxu0
        %v1200 = vadd.f32 %v1159, %v1199
        %1201 = vmatmul.f32.gmra.mxu0 %v1133
        %v1202 = vpop.f32.mrf.mxu0
        %v1203 = vadd.f32 %v1159, %v1202
        %1204 = vmatmul.f32.gmra.mxu0 %v1134
        %v1205 = vpop.f32.mrf.mxu0
        %v1206 = vadd.f32 %v1159, %v1205
        %1207 = vmatmul.f32.gmra.mxu0 %v1135
        %v1208 = vpop.f32.mrf.mxu0
        %v1209 = vadd.f32 %v1159, %v1208
        %1210 = vmatmul.f32.gmra.mxu0 %v1136
        %v1211 = vpop.f32.mrf.mxu0
        %v1212 = vadd.f32 %v1159, %v1211
        %1213 = vmatmul.f32.gmra.mxu0 %v1137
        %v1214 = vpop.f32.mrf.mxu0
        %v1215 = vadd.f32 %v1159, %v1214
        %1216 = vmatmul.f32.gmra.mxu0 %v1138
        %v1217 = vpop.f32.mrf.mxu0
        %v1218 = vadd.f32 %v1159, %v1217
        %1219 = vmatmul.f32.gmra.mxu0 %v1139
        %v1220 = vpop.f32.mrf.mxu0
        %v1221 = vadd.f32 %v1159, %v1220
        %1222 = vmatmul.f32.gmra.mxu0 %v1140
        %v1223 = vpop.f32.mrf.mxu0
        %v1224 = vadd.f32 %v1159, %v1223
        %1225 = vdwg.mxu0
        %v1226 = vmul.f32 %v1179, 0.5
        %v1227 = vmul.f32 %v1182, 0.5
        %v1228 = vmul.f32 %v1185, 0.5
        %v1229 = vmul.f32 %v1188, 0.5
        %v1230 = vmul.f32 %v1191, 0.5
        %v1231 = vmul.f32 %v1194, 0.5
        %v1232 = vmul.f32 %v1197, 0.5
        %v1233 = vmul.f32 %v1200, 0.5
        %v1234 = vmul.f32 %v1203, 0.5
        %v1235 = vmul.f32 %v1206, 0.5
        %v1236 = vmul.f32 %v1209, 0.5
        %v1237 = vmul.f32 %v1212, 0.5
        %v1238 = vmul.f32 %v1215, 0.5
        %v1239 = vmul.f32 %v1218, 0.5
        %v1240 = vmul.f32 %v1221, 0.5
        %v1241 = vmul.f32 %v1224, 0.5
        %v1242 = vmul.f32 %v1179, 0.70710677
        %v1243 = vmul.f32 %v1182, 0.70710677
        %v1244 = vmul.f32 %v1185, 0.70710677
        %v1245 = vmul.f32 %v1188, 0.70710677
        %v1246 = vmul.f32 %v1191, 0.70710677
        %v1247 = vmul.f32 %v1194, 0.70710677
        %v1248 = vmul.f32 %v1197, 0.70710677
        %v1249 = vmul.f32 %v1200, 0.70710677
        %v1250 = vmul.f32 %v1203, 0.70710677
        %v1251 = vmul.f32 %v1206, 0.70710677
        %v1252 = vmul.f32 %v1209, 0.70710677
        %v1253 = vmul.f32 %v1212, 0.70710677
        %v1254 = vmul.f32 %v1215, 0.70710677
        %v1255 = vmul.f32 %v1218, 0.70710677
        %v1256 = vmul.f32 %v1221, 0.70710677
        %v1257 = vmul.f32 %v1224, 0.70710677
        %v1258 = vand.u32 2147483647, %v1242
        %v1259 = vand.u32 2147483647, %v1243
        %v1260 = vand.u32 2147483647, %v1244
        %v1261 = vand.u32 2147483647, %v1245
        %v1262 = vand.u32 2147483647, %v1246
        %v1263 = vand.u32 2147483647, %v1247
        %v1264 = vand.u32 2147483647, %v1248
        %v1265 = vand.u32 2147483647, %v1249
        %v1266 = vand.u32 2147483647, %v1250
        %v1267 = vand.u32 2147483647, %v1251
        %v1268 = vand.u32 2147483647, %v1252
        %v1269 = vand.u32 2147483647, %v1253
        %v1270 = vand.u32 2147483647, %v1254
        %v1271 = vand.u32 2147483647, %v1255
        %v1272 = vand.u32 2147483647, %v1256
        %v1273 = vand.u32 2147483647, %v1257
        %v1274 = vmul.f32 %v1258, 0.3275911
        %v1275 = vmul.f32 %v1259, 0.3275911
        %v1276 = vmul.f32 %v1260, 0.3275911
        %v1277 = vmul.f32 %v1261, 0.3275911
        %v1278 = vmul.f32 %v1262, 0.3275911
        %v1279 = vmul.f32 %v1263, 0.3275911
        %v1280 = vmul.f32 %v1264, 0.3275911
        %v1281 = vmul.f32 %v1265, 0.3275911
        %v1282 = vmul.f32 %v1266, 0.3275911
        %v1283 = vmul.f32 %v1267, 0.3275911
        %v1284 = vmul.f32 %v1268, 0.3275911
        %v1285 = vmul.f32 %v1269, 0.3275911
        %v1286 = vmul.f32 %v1270, 0.3275911
        %v1287 = vmul.f32 %v1271, 0.3275911
        %v1288 = vmul.f32 %v1272, 0.3275911
        %v1289 = vmul.f32 %v1273, 0.3275911
        %v1290 = vadd.f32 %v1274, 1.0
        %v1291 = vadd.f32 %v1275, 1.0
        %v1292 = vadd.f32 %v1276, 1.0
        %v1293 = vadd.f32 %v1277, 1.0
        %v1294 = vadd.f32 %v1278, 1.0
        %v1295 = vadd.f32 %v1279, 1.0
        %v1296 = vadd.f32 %v1280, 1.0
        %v1297 = vadd.f32 %v1281, 1.0
        %v1298 = vadd.f32 %v1282, 1.0
        %v1299 = vadd.f32 %v1283, 1.0
        %v1300 = vadd.f32 %v1284, 1.0
        %v1301 = vadd.f32 %v1285, 1.0
        %v1302 = vadd.f32 %v1286, 1.0
        %v1303 = vadd.f32 %v1287, 1.0
        %v1304 = vadd.f32 %v1288, 1.0
        %v1305 = vadd.f32 %v1289, 1.0
        %v1306 = vrcp.pop %v1290
        %v1307 = vmul.f32 %v1290, %v1306
        %v1308 = vsub.f32 1.0, %v1307
        %v1309 = vmul.f32 %v1306, %v1308
        %v1310 = vadd.f32 %v1306, %v1309
        %vm1311 = vweird.f32 %v1290
        %vm1312 = vweird.f32 %v1306
        %vm1313 = vmor %vm1311, %vm1312
        %v1314 = vsel %vm1313, %v1306, %v1310
        %v1315 = vand.u32 2147483647, %v1290
        %vm1316 = vcmp.eq.f32.partialorder %v1315, 8.507059e+37
        %v1317 = vand.u32 %v1290, 2147483648
        %v1318 = vor.u32 1.1754944e-38, %v1317
        %v1319 = vsel %vm1316, %v1318, %v1314
        %v1320 = vmul.f32 1.0, %v1319
        %v1321 = vrcp.pop %v1291
        %v1322 = vmul.f32 %v1291, %v1321
        %v1323 = vsub.f32 1.0, %v1322
        %v1324 = vmul.f32 %v1321, %v1323
        %v1325 = vadd.f32 %v1321, %v1324
        %vm1326 = vweird.f32 %v1291
        %vm1327 = vweird.f32 %v1321
        %vm1328 = vmor %vm1326, %vm1327
        %v1329 = vsel %vm1328, %v1321, %v1325
        %v1330 = vand.u32 2147483647, %v1291
        %vm1331 = vcmp.eq.f32.partialorder %v1330, 8.507059e+37
        %v1332 = vand.u32 %v1291, 2147483648
        %v1333 = vor.u32 1.1754944e-38, %v1332
        %v1334 = vsel %vm1331, %v1333, %v1329
        %v1335 = vmul.f32 1.0, %v1334
        %v1336 = vrcp.pop %v1292
        %v1337 = vmul.f32 %v1292, %v1336
        %v1338 = vsub.f32 1.0, %v1337
        %v1339 = vmul.f32 %v1336, %v1338
        %v1340 = vadd.f32 %v1336, %v1339
        %vm1341 = vweird.f32 %v1292
        %vm1342 = vweird.f32 %v1336
        %vm1343 = vmor %vm1341, %vm1342
        %v1344 = vsel %vm1343, %v1336, %v1340
        %v1345 = vand.u32 2147483647, %v1292
        %vm1346 = vcmp.eq.f32.partialorder %v1345, 8.507059e+37
        %v1347 = vand.u32 %v1292, 2147483648
        %v1348 = vor.u32 1.1754944e-38, %v1347
        %v1349 = vsel %vm1346, %v1348, %v1344
        %v1350 = vmul.f32 1.0, %v1349
        %v1351 = vrcp.pop %v1293
        %v1352 = vmul.f32 %v1293, %v1351
        %v1353 = vsub.f32 1.0, %v1352
        %v1354 = vmul.f32 %v1351, %v1353
        %v1355 = vadd.f32 %v1351, %v1354
        %vm1356 = vweird.f32 %v1293
        %vm1357 = vweird.f32 %v1351
        %vm1358 = vmor %vm1356, %vm1357
        %v1359 = vsel %vm1358, %v1351, %v1355
        %v1360 = vand.u32 2147483647, %v1293
        %vm1361 = vcmp.eq.f32.partialorder %v1360, 8.507059e+37
        %v1362 = vand.u32 %v1293, 2147483648
        %v1363 = vor.u32 1.1754944e-38, %v1362
        %v1364 = vsel %vm1361, %v1363, %v1359
        %v1365 = vmul.f32 1.0, %v1364
        %v1366 = vrcp.pop %v1294
        %v1367 = vmul.f32 %v1294, %v1366
        %v1368 = vsub.f32 1.0, %v1367
        %v1369 = vmul.f32 %v1366, %v1368
        %v1370 = vadd.f32 %v1366, %v1369
        %vm1371 = vweird.f32 %v1294
        %vm1372 = vweird.f32 %v1366
        %vm1373 = vmor %vm1371, %vm1372
        %v1374 = vsel %vm1373, %v1366, %v1370
        %v1375 = vand.u32 2147483647, %v1294
        %vm1376 = vcmp.eq.f32.partialorder %v1375, 8.507059e+37
        %v1377 = vand.u32 %v1294, 2147483648
        %v1378 = vor.u32 1.1754944e-38, %v1377
        %v1379 = vsel %vm1376, %v1378, %v1374
        %v1380 = vmul.f32 1.0, %v1379
        %v1381 = vrcp.pop %v1295
        %v1382 = vmul.f32 %v1295, %v1381
        %v1383 = vsub.f32 1.0, %v1382
        %v1384 = vmul.f32 %v1381, %v1383
        %v1385 = vadd.f32 %v1381, %v1384
        %vm1386 = vweird.f32 %v1295
        %vm1387 = vweird.f32 %v1381
        %vm1388 = vmor %vm1386, %vm1387
        %v1389 = vsel %vm1388, %v1381, %v1385
        %v1390 = vand.u32 2147483647, %v1295
        %vm1391 = vcmp.eq.f32.partialorder %v1390, 8.507059e+37
        %v1392 = vand.u32 %v1295, 2147483648
        %v1393 = vor.u32 1.1754944e-38, %v1392
        %v1394 = vsel %vm1391, %v1393, %v1389
        %v1395 = vmul.f32 1.0, %v1394
        %v1396 = vrcp.pop %v1296
        %v1397 = vmul.f32 %v1296, %v1396
        %v1398 = vsub.f32 1.0, %v1397
        %v1399 = vmul.f32 %v1396, %v1398
        %v1400 = vadd.f32 %v1396, %v1399
        %vm1401 = vweird.f32 %v1296
        %vm1402 = vweird.f32 %v1396
        %vm1403 = vmor %vm1401, %vm1402
        %v1404 = vsel %vm1403, %v1396, %v1400
        %v1405 = vand.u32 2147483647, %v1296
        %vm1406 = vcmp.eq.f32.partialorder %v1405, 8.507059e+37
        %v1407 = vand.u32 %v1296, 2147483648
        %v1408 = vor.u32 1.1754944e-38, %v1407
        %v1409 = vsel %vm1406, %v1408, %v1404
        %v1410 = vmul.f32 1.0, %v1409
        %v1411 = vrcp.pop %v1297
        %v1412 = vmul.f32 %v1297, %v1411
        %v1413 = vsub.f32 1.0, %v1412
        %v1414 = vmul.f32 %v1411, %v1413
        %v1415 = vadd.f32 %v1411, %v1414
        %vm1416 = vweird.f32 %v1297
        %vm1417 = vweird.f32 %v1411
        %vm1418 = vmor %vm1416, %vm1417
        %v1419 = vsel %vm1418, %v1411, %v1415
        %v1420 = vand.u32 2147483647, %v1297
        %vm1421 = vcmp.eq.f32.partialorder %v1420, 8.507059e+37
        %v1422 = vand.u32 %v1297, 2147483648
        %v1423 = vor.u32 1.1754944e-38, %v1422
        %v1424 = vsel %vm1421, %v1423, %v1419
        %v1425 = vmul.f32 1.0, %v1424
        %v1426 = vrcp.pop %v1298
        %v1427 = vmul.f32 %v1298, %v1426
        %v1428 = vsub.f32 1.0, %v1427
        %v1429 = vmul.f32 %v1426, %v1428
        %v1430 = vadd.f32 %v1426, %v1429
        %vm1431 = vweird.f32 %v1298
        %vm1432 = vweird.f32 %v1426
        %vm1433 = vmor %vm1431, %vm1432
        %v1434 = vsel %vm1433, %v1426, %v1430
        %v1435 = vand.u32 2147483647, %v1298
        %vm1436 = vcmp.eq.f32.partialorder %v1435, 8.507059e+37
        %v1437 = vand.u32 %v1298, 2147483648
        %v1438 = vor.u32 1.1754944e-38, %v1437
        %v1439 = vsel %vm1436, %v1438, %v1434
        %v1440 = vmul.f32 1.0, %v1439
        %v1441 = vrcp.pop %v1299
        %v1442 = vmul.f32 %v1299, %v1441
        %v1443 = vsub.f32 1.0, %v1442
        %v1444 = vmul.f32 %v1441, %v1443
        %v1445 = vadd.f32 %v1441, %v1444
        %vm1446 = vweird.f32 %v1299
        %vm1447 = vweird.f32 %v1441
        %vm1448 = vmor %vm1446, %vm1447
        %v1449 = vsel %vm1448, %v1441, %v1445
        %v1450 = vand.u32 2147483647, %v1299
        %vm1451 = vcmp.eq.f32.partialorder %v1450, 8.507059e+37
        %v1452 = vand.u32 %v1299, 2147483648
        %v1453 = vor.u32 1.1754944e-38, %v1452
        %v1454 = vsel %vm1451, %v1453, %v1449
        %v1455 = vmul.f32 1.0, %v1454
        %v1456 = vrcp.pop %v1300
        %v1457 = vmul.f32 %v1300, %v1456
        %v1458 = vsub.f32 1.0, %v1457
        %v1459 = vmul.f32 %v1456, %v1458
        %v1460 = vadd.f32 %v1456, %v1459
        %vm1461 = vweird.f32 %v1300
        %vm1462 = vweird.f32 %v1456
        %vm1463 = vmor %vm1461, %vm1462
        %v1464 = vsel %vm1463, %v1456, %v1460
        %v1465 = vand.u32 2147483647, %v1300
        %vm1466 = vcmp.eq.f32.partialorder %v1465, 8.507059e+37
        %v1467 = vand.u32 %v1300, 2147483648
        %v1468 = vor.u32 1.1754944e-38, %v1467
        %v1469 = vsel %vm1466, %v1468, %v1464
        %v1470 = vmul.f32 1.0, %v1469
        %v1471 = vrcp.pop %v1301
        %v1472 = vmul.f32 %v1301, %v1471
        %v1473 = vsub.f32 1.0, %v1472
        %v1474 = vmul.f32 %v1471, %v1473
        %v1475 = vadd.f32 %v1471, %v1474
        %vm1476 = vweird.f32 %v1301
        %vm1477 = vweird.f32 %v1471
        %vm1478 = vmor %vm1476, %vm1477
        %v1479 = vsel %vm1478, %v1471, %v1475
        %v1480 = vand.u32 2147483647, %v1301
        %vm1481 = vcmp.eq.f32.partialorder %v1480, 8.507059e+37
        %v1482 = vand.u32 %v1301, 2147483648
        %v1483 = vor.u32 1.1754944e-38, %v1482
        %v1484 = vsel %vm1481, %v1483, %v1479
        %v1485 = vmul.f32 1.0, %v1484
        %v1486 = vrcp.pop %v1302
        %v1487 = vmul.f32 %v1302, %v1486
        %v1488 = vsub.f32 1.0, %v1487
        %v1489 = vmul.f32 %v1486, %v1488
        %v1490 = vadd.f32 %v1486, %v1489
        %vm1491 = vweird.f32 %v1302
        %vm1492 = vweird.f32 %v1486
        %vm1493 = vmor %vm1491, %vm1492
        %v1494 = vsel %vm1493, %v1486, %v1490
        %v1495 = vand.u32 2147483647, %v1302
        %vm1496 = vcmp.eq.f32.partialorder %v1495, 8.507059e+37
        %v1497 = vand.u32 %v1302, 2147483648
        %v1498 = vor.u32 1.1754944e-38, %v1497
        %v1499 = vsel %vm1496, %v1498, %v1494
        %v1500 = vmul.f32 1.0, %v1499
        %v1501 = vrcp.pop %v1303
        %v1502 = vmul.f32 %v1303, %v1501
        %v1503 = vsub.f32 1.0, %v1502
        %v1504 = vmul.f32 %v1501, %v1503
        %v1505 = vadd.f32 %v1501, %v1504
        %vm1506 = vweird.f32 %v1303
        %vm1507 = vweird.f32 %v1501
        %vm1508 = vmor %vm1506, %vm1507
        %v1509 = vsel %vm1508, %v1501, %v1505
        %v1510 = vand.u32 2147483647, %v1303
        %vm1511 = vcmp.eq.f32.partialorder %v1510, 8.507059e+37
        %v1512 = vand.u32 %v1303, 2147483648
        %v1513 = vor.u32 1.1754944e-38, %v1512
        %v1514 = vsel %vm1511, %v1513, %v1509
        %v1515 = vmul.f32 1.0, %v1514
        %v1516 = vrcp.pop %v1304
        %v1517 = vmul.f32 %v1304, %v1516
        %v1518 = vsub.f32 1.0, %v1517
        %v1519 = vmul.f32 %v1516, %v1518
        %v1520 = vadd.f32 %v1516, %v1519
        %vm1521 = vweird.f32 %v1304
        %vm1522 = vweird.f32 %v1516
        %vm1523 = vmor %vm1521, %vm1522
        %v1524 = vsel %vm1523, %v1516, %v1520
        %v1525 = vand.u32 2147483647, %v1304
        %vm1526 = vcmp.eq.f32.partialorder %v1525, 8.507059e+37
        %v1527 = vand.u32 %v1304, 2147483648
        %v1528 = vor.u32 1.1754944e-38, %v1527
        %v1529 = vsel %vm1526, %v1528, %v1524
        %v1530 = vmul.f32 1.0, %v1529
        %v1531 = vrcp.pop %v1305
        %v1532 = vmul.f32 %v1305, %v1531
        %v1533 = vsub.f32 1.0, %v1532
        %v1534 = vmul.f32 %v1531, %v1533
        %v1535 = vadd.f32 %v1531, %v1534
        %vm1536 = vweird.f32 %v1305
        %vm1537 = vweird.f32 %v1531
        %vm1538 = vmor %vm1536, %vm1537
        %v1539 = vsel %vm1538, %v1531, %v1535
        %v1540 = vand.u32 2147483647, %v1305
        %vm1541 = vcmp.eq.f32.partialorder %v1540, 8.507059e+37
        %v1542 = vand.u32 %v1305, 2147483648
        %v1543 = vor.u32 1.1754944e-38, %v1542
        %v1544 = vsel %vm1541, %v1543, %v1539
        %v1545 = vmul.f32 1.0, %v1544
        %v1546 = vmul.f32 %v1320, 1.0614054
        %v1547 = vmul.f32 %v1335, 1.0614054
        %v1548 = vmul.f32 %v1350, 1.0614054
        %v1549 = vmul.f32 %v1365, 1.0614054
        %v1550 = vmul.f32 %v1380, 1.0614054
        %v1551 = vmul.f32 %v1395, 1.0614054
        %v1552 = vmul.f32 %v1410, 1.0614054
        %v1553 = vmul.f32 %v1425, 1.0614054
        %v1554 = vmul.f32 %v1440, 1.0614054
        %v1555 = vmul.f32 %v1455, 1.0614054
        %v1556 = vmul.f32 %v1470, 1.0614054
        %v1557 = vmul.f32 %v1485, 1.0614054
        %v1558 = vmul.f32 %v1500, 1.0614054
        %v1559 = vmul.f32 %v1515, 1.0614054
        %v1560 = vmul.f32 %v1530, 1.0614054
        %v1561 = vmul.f32 %v1545, 1.0614054
        %v1562 = vadd.f32 %v1546, -1.4531521
        %v1563 = vadd.f32 %v1547, -1.4531521
        %v1564 = vadd.f32 %v1548, -1.4531521
        %v1565 = vadd.f32 %v1549, -1.4531521
        %v1566 = vadd.f32 %v1550, -1.4531521
        %v1567 = vadd.f32 %v1551, -1.4531521
        %v1568 = vadd.f32 %v1552, -1.4531521
        %v1569 = vadd.f32 %v1553, -1.4531521
        %v1570 = vadd.f32 %v1554, -1.4531521
        %v1571 = vadd.f32 %v1555, -1.4531521
        %v1572 = vadd.f32 %v1556, -1.4531521
        %v1573 = vadd.f32 %v1557, -1.4531521
        %v1574 = vadd.f32 %v1558, -1.4531521
        %v1575 = vadd.f32 %v1559, -1.4531521
        %v1576 = vadd.f32 %v1560, -1.4531521
        %v1577 = vadd.f32 %v1561, -1.4531521
        %v1578 = vmul.f32 %v1562, %v1320
        %v1579 = vmul.f32 %v1563, %v1335
        %v1580 = vmul.f32 %v1564, %v1350
        %v1581 = vmul.f32 %v1565, %v1365
        %v1582 = vmul.f32 %v1566, %v1380
        %v1583 = vmul.f32 %v1567, %v1395
        %v1584 = vmul.f32 %v1568, %v1410
        %v1585 = vmul.f32 %v1569, %v1425
        %v1586 = vmul.f32 %v1570, %v1440
        %v1587 = vmul.f32 %v1571, %v1455
        %v1588 = vmul.f32 %v1572, %v1470
        %v1589 = vmul.f32 %v1573, %v1485
        %v1590 = vmul.f32 %v1574, %v1500
        %v1591 = vmul.f32 %v1575, %v1515
        %v1592 = vmul.f32 %v1576, %v1530
        %v1593 = vmul.f32 %v1577, %v1545
        %v1594 = vadd.f32 %v1578, 1.4214138
        %v1595 = vadd.f32 %v1579, 1.4214138
        %v1596 = vadd.f32 %v1580, 1.4214138
        %v1597 = vadd.f32 %v1581, 1.4214138
        %v1598 = vadd.f32 %v1582, 1.4214138
        %v1599 = vadd.f32 %v1583, 1.4214138
        %v1600 = vadd.f32 %v1584, 1.4214138
        %v1601 = vadd.f32 %v1585, 1.4214138
        %v1602 = vadd.f32 %v1586, 1.4214138
        %v1603 = vadd.f32 %v1587, 1.4214138
        %v1604 = vadd.f32 %v1588, 1.4214138
        %v1605 = vadd.f32 %v1589, 1.4214138
        %v1606 = vadd.f32 %v1590, 1.4214138
        %v1607 = vadd.f32 %v1591, 1.4214138
        %v1608 = vadd.f32 %v1592, 1.4214138
        %v1609 = vadd.f32 %v1593, 1.4214138
        %v1610 = vmul.f32 %v1594, %v1320
        %v1611 = vmul.f32 %v1595, %v1335
        %v1612 = vmul.f32 %v1596, %v1350
        %v1613 = vmul.f32 %v1597, %v1365
        %v1614 = vmul.f32 %v1598, %v1380
        %v1615 = vmul.f32 %v1599, %v1395
        %v1616 = vmul.f32 %v1600, %v1410
        %v1617 = vmul.f32 %v1601, %v1425
        %v1618 = vmul.f32 %v1602, %v1440
        %v1619 = vmul.f32 %v1603, %v1455
        %v1620 = vmul.f32 %v1604, %v1470
        %v1621 = vmul.f32 %v1605, %v1485
        %v1622 = vmul.f32 %v1606, %v1500
        %v1623 = vmul.f32 %v1607, %v1515
        %v1624 = vmul.f32 %v1608, %v1530
        %v1625 = vmul.f32 %v1609, %v1545
        %v1626 = vadd.f32 %v1610, -0.28449672
        %v1627 = vadd.f32 %v1611, -0.28449672
        %v1628 = vadd.f32 %v1612, -0.28449672
        %v1629 = vadd.f32 %v1613, -0.28449672
        %v1630 = vadd.f32 %v1614, -0.28449672
        %v1631 = vadd.f32 %v1615, -0.28449672
        %v1632 = vadd.f32 %v1616, -0.28449672
        %v1633 = vadd.f32 %v1617, -0.28449672
        %v1634 = vadd.f32 %v1618, -0.28449672
        %v1635 = vadd.f32 %v1619, -0.28449672
        %v1636 = vadd.f32 %v1620, -0.28449672
        %v1637 = vadd.f32 %v1621, -0.28449672
        %v1638 = vadd.f32 %v1622, -0.28449672
        %v1639 = vadd.f32 %v1623, -0.28449672
        %v1640 = vadd.f32 %v1624, -0.28449672
        %v1641 = vadd.f32 %v1625, -0.28449672
        %v1642 = vmul.f32 %v1626, %v1320
        %v1643 = vmul.f32 %v1627, %v1335
        %v1644 = vmul.f32 %v1628, %v1350
        %v1645 = vmul.f32 %v1629, %v1365
        %v1646 = vmul.f32 %v1630, %v1380
        %v1647 = vmul.f32 %v1631, %v1395
        %v1648 = vmul.f32 %v1632, %v1410
        %v1649 = vmul.f32 %v1633, %v1425
        %v1650 = vmul.f32 %v1634, %v1440
        %v1651 = vmul.f32 %v1635, %v1455
        %v1652 = vmul.f32 %v1636, %v1470
        %v1653 = vmul.f32 %v1637, %v1485
        %v1654 = vmul.f32 %v1638, %v1500
        %v1655 = vmul.f32 %v1639, %v1515
        %v1656 = vmul.f32 %v1640, %v1530
        %v1657 = vmul.f32 %v1641, %v1545
        %v1658 = vadd.f32 %v1642, 0.2548296
        %v1659 = vadd.f32 %v1643, 0.2548296
        %v1660 = vadd.f32 %v1644, 0.2548296
        %v1661 = vadd.f32 %v1645, 0.2548296
        %v1662 = vadd.f32 %v1646, 0.2548296
        %v1663 = vadd.f32 %v1647, 0.2548296
        %v1664 = vadd.f32 %v1648, 0.2548296
        %v1665 = vadd.f32 %v1649, 0.2548296
        %v1666 = vadd.f32 %v1650, 0.2548296
        %v1667 = vadd.f32 %v1651, 0.2548296
        %v1668 = vadd.f32 %v1652, 0.2548296
        %v1669 = vadd.f32 %v1653, 0.2548296
        %v1670 = vadd.f32 %v1654, 0.2548296
        %v1671 = vadd.f32 %v1655, 0.2548296
        %v1672 = vadd.f32 %v1656, 0.2548296
        %v1673 = vadd.f32 %v1657, 0.2548296
        %v1674 = vmul.f32 %v1658, %v1320
        %v1675 = vmul.f32 %v1659, %v1335
        %v1676 = vmul.f32 %v1660, %v1350
        %v1677 = vmul.f32 %v1661, %v1365
        %v1678 = vmul.f32 %v1662, %v1380
        %v1679 = vmul.f32 %v1663, %v1395
        %v1680 = vmul.f32 %v1664, %v1410
        %v1681 = vmul.f32 %v1665, %v1425
        %v1682 = vmul.f32 %v1666, %v1440
        %v1683 = vmul.f32 %v1667, %v1455
        %v1684 = vmul.f32 %v1668, %v1470
        %v1685 = vmul.f32 %v1669, %v1485
        %v1686 = vmul.f32 %v1670, %v1500
        %v1687 = vmul.f32 %v1671, %v1515
        %v1688 = vmul.f32 %v1672, %v1530
        %v1689 = vmul.f32 %v1673, %v1545
        %v1690 = vsub.f32 0.0, %v1258
        %v1691 = vsub.f32 0.0, %v1259
        %v1692 = vsub.f32 0.0, %v1260
        %v1693 = vsub.f32 0.0, %v1261
        %v1694 = vsub.f32 0.0, %v1262
        %v1695 = vsub.f32 0.0, %v1263
        %v1696 = vsub.f32 0.0, %v1264
        %v1697 = vsub.f32 0.0, %v1265
        %v1698 = vsub.f32 0.0, %v1266
        %v1699 = vsub.f32 0.0, %v1267
        %v1700 = vsub.f32 0.0, %v1268
        %v1701 = vsub.f32 0.0, %v1269
        %v1702 = vsub.f32 0.0, %v1270
        %v1703 = vsub.f32 0.0, %v1271
        %v1704 = vsub.f32 0.0, %v1272
        %v1705 = vsub.f32 0.0, %v1273
        %v1706 = vmul.f32 %v1690, %v1258
        %v1707 = vmul.f32 %v1691, %v1259
        %v1708 = vmul.f32 %v1692, %v1260
        %v1709 = vmul.f32 %v1693, %v1261
        %v1710 = vmul.f32 %v1694, %v1262
        %v1711 = vmul.f32 %v1695, %v1263
        %v1712 = vmul.f32 %v1696, %v1264
        %v1713 = vmul.f32 %v1697, %v1265
        %v1714 = vmul.f32 %v1698, %v1266
        %v1715 = vmul.f32 %v1699, %v1267
        %v1716 = vmul.f32 %v1700, %v1268
        %v1717 = vmul.f32 %v1701, %v1269
        %v1718 = vmul.f32 %v1702, %v1270
        %v1719 = vmul.f32 %v1703, %v1271
        %v1720 = vmul.f32 %v1704, %v1272
        %v1721 = vmul.f32 %v1705, %v1273
        %v1722 = vmul.f32 %v1706, 1.442695
        %v1723 = vpow.pop %v1722
        %v1724 = vmul.f32 %v1707, 1.442695
        %v1725 = vpow.pop %v1724
        %v1726 = vmul.f32 %v1708, 1.442695
        %v1727 = vpow.pop %v1726
        %v1728 = vmul.f32 %v1709, 1.442695
        %v1729 = vpow.pop %v1728
        %v1730 = vmul.f32 %v1710, 1.442695
        %v1731 = vpow.pop %v1730
        %v1732 = vmul.f32 %v1711, 1.442695
        %v1733 = vpow.pop %v1732
        %v1734 = vmul.f32 %v1712, 1.442695
        %v1735 = vpow.pop %v1734
        %v1736 = vmul.f32 %v1713, 1.442695
        %v1737 = vpow.pop %v1736
        %v1738 = vmul.f32 %v1714, 1.442695
        %v1739 = vpow.pop %v1738
        %v1740 = vmul.f32 %v1715, 1.442695
        %v1741 = vpow.pop %v1740
        %v1742 = vmul.f32 %v1716, 1.442695
        %v1743 = vpow.pop %v1742
        %v1744 = vmul.f32 %v1717, 1.442695
        %v1745 = vpow.pop %v1744
        %v1746 = vmul.f32 %v1718, 1.442695
        %v1747 = vpow.pop %v1746
        %v1748 = vmul.f32 %v1719, 1.442695
        %v1749 = vpow.pop %v1748
        %v1750 = vmul.f32 %v1720, 1.442695
        %v1751 = vpow.pop %v1750
        %v1752 = vmul.f32 %v1721, 1.442695
        %v1753 = vpow.pop %v1752
        %v1754 = vmul.f32 %v1674, %v1723
        %v1755 = vmul.f32 %v1675, %v1725
        %v1756 = vmul.f32 %v1676, %v1727
        %v1757 = vmul.f32 %v1677, %v1729
        %v1758 = vmul.f32 %v1678, %v1731
        %v1759 = vmul.f32 %v1679, %v1733
        %v1760 = vmul.f32 %v1680, %v1735
        %v1761 = vmul.f32 %v1681, %v1737
        %v1762 = vmul.f32 %v1682, %v1739
        %v1763 = vmul.f32 %v1683, %v1741
        %v1764 = vmul.f32 %v1684, %v1743
        %v1765 = vmul.f32 %v1685, %v1745
        %v1766 = vmul.f32 %v1686, %v1747
        %v1767 = vmul.f32 %v1687, %v1749
        %v1768 = vmul.f32 %v1688, %v1751
        %v1769 = vmul.f32 %v1689, %v1753
        %v1770 = vsub.f32 1.0, %v1754
        %v1771 = vsub.f32 1.0, %v1755
        %v1772 = vsub.f32 1.0, %v1756
        %v1773 = vsub.f32 1.0, %v1757
        %v1774 = vsub.f32 1.0, %v1758
        %v1775 = vsub.f32 1.0, %v1759
        %v1776 = vsub.f32 1.0, %v1760
        %v1777 = vsub.f32 1.0, %v1761
        %v1778 = vsub.f32 1.0, %v1762
        %v1779 = vsub.f32 1.0, %v1763
        %v1780 = vsub.f32 1.0, %v1764
        %v1781 = vsub.f32 1.0, %v1765
        %v1782 = vsub.f32 1.0, %v1766
        %v1783 = vsub.f32 1.0, %v1767
        %v1784 = vsub.f32 1.0, %v1768
        %v1785 = vsub.f32 1.0, %v1769
        %vm1786 = vcmp.ge.f32.partialorder %v1242, 0.0
        %vm1787 = vcmp.ge.f32.partialorder %v1243, 0.0
        %vm1788 = vcmp.ge.f32.partialorder %v1244, 0.0
        %vm1789 = vcmp.ge.f32.partialorder %v1245, 0.0
        %vm1790 = vcmp.ge.f32.partialorder %v1246, 0.0
        %vm1791 = vcmp.ge.f32.partialorder %v1247, 0.0
        %vm1792 = vcmp.ge.f32.partialorder %v1248, 0.0
        %vm1793 = vcmp.ge.f32.partialorder %v1249, 0.0
        %vm1794 = vcmp.ge.f32.partialorder %v1250, 0.0
        %vm1795 = vcmp.ge.f32.partialorder %v1251, 0.0
        %vm1796 = vcmp.ge.f32.partialorder %v1252, 0.0
        %vm1797 = vcmp.ge.f32.partialorder %v1253, 0.0
        %vm1798 = vcmp.ge.f32.partialorder %v1254, 0.0
        %vm1799 = vcmp.ge.f32.partialorder %v1255, 0.0
        %vm1800 = vcmp.ge.f32.partialorder %v1256, 0.0
        %vm1801 = vcmp.ge.f32.partialorder %v1257, 0.0
        %v1802 = vsub.f32 0.0, %v1770
        %v1803 = vsub.f32 0.0, %v1771
        %v1804 = vsub.f32 0.0, %v1772
        %v1805 = vsub.f32 0.0, %v1773
        %v1806 = vsub.f32 0.0, %v1774
        %v1807 = vsub.f32 0.0, %v1775
        %v1808 = vsub.f32 0.0, %v1776
        %v1809 = vsub.f32 0.0, %v1777
        %v1810 = vsub.f32 0.0, %v1778
        %v1811 = vsub.f32 0.0, %v1779
        %v1812 = vsub.f32 0.0, %v1780
        %v1813 = vsub.f32 0.0, %v1781
        %v1814 = vsub.f32 0.0, %v1782
        %v1815 = vsub.f32 0.0, %v1783
        %v1816 = vsub.f32 0.0, %v1784
        %v1817 = vsub.f32 0.0, %v1785
        %v1818 = vsel %vm1786, %v1770, %v1802
        %v1819 = vsel %vm1787, %v1771, %v1803
        %v1820 = vsel %vm1788, %v1772, %v1804
        %v1821 = vsel %vm1789, %v1773, %v1805
        %v1822 = vsel %vm1790, %v1774, %v1806
        %v1823 = vsel %vm1791, %v1775, %v1807
        %v1824 = vsel %vm1792, %v1776, %v1808
        %v1825 = vsel %vm1793, %v1777, %v1809
        %v1826 = vsel %vm1794, %v1778, %v1810
        %v1827 = vsel %vm1795, %v1779, %v1811
        %v1828 = vsel %vm1796, %v1780, %v1812
        %v1829 = vsel %vm1797, %v1781, %v1813
        %v1830 = vsel %vm1798, %v1782, %v1814
        %v1831 = vsel %vm1799, %v1783, %v1815
        %v1832 = vsel %vm1800, %v1784, %v1816
        %v1833 = vsel %vm1801, %v1785, %v1817
        %v1834 = vadd.f32 %v1818, 1.0
        %v1835 = vadd.f32 %v1819, 1.0
        %v1836 = vadd.f32 %v1820, 1.0
        %v1837 = vadd.f32 %v1821, 1.0
        %v1838 = vadd.f32 %v1822, 1.0
        %v1839 = vadd.f32 %v1823, 1.0
        %v1840 = vadd.f32 %v1824, 1.0
        %v1841 = vadd.f32 %v1825, 1.0
        %v1842 = vadd.f32 %v1826, 1.0
        %v1843 = vadd.f32 %v1827, 1.0
        %v1844 = vadd.f32 %v1828, 1.0
        %v1845 = vadd.f32 %v1829, 1.0
        %v1846 = vadd.f32 %v1830, 1.0
        %v1847 = vadd.f32 %v1831, 1.0
        %v1848 = vadd.f32 %v1832, 1.0
        %v1849 = vadd.f32 %v1833, 1.0
        %v1850 = vmul.f32 %v1226, %v1834
        %v1851 = vmul.f32 %v1227, %v1835
        %v1852 = vmul.f32 %v1228, %v1836
        %v1853 = vmul.f32 %v1229, %v1837
        %v1854 = vmul.f32 %v1230, %v1838
        %v1855 = vmul.f32 %v1231, %v1839
        %v1856 = vmul.f32 %v1232, %v1840
        %v1857 = vmul.f32 %v1233, %v1841
        %v1858 = vmul.f32 %v1234, %v1842
        %v1859 = vmul.f32 %v1235, %v1843
        %v1860 = vmul.f32 %v1236, %v1844
        %v1861 = vmul.f32 %v1237, %v1845
        %v1862 = vmul.f32 %v1238, %v1846
        %v1863 = vmul.f32 %v1239, %v1847
        %v1864 = vmul.f32 %v1240, %v1848
        %v1865 = vmul.f32 %v1241, %v1849
        %1866 = vst [vmem:[%s299] sm:$0xff] %v1850
        %1867 = vst [vmem:[%s299 + $0x8] sm:$0xff] %v1851
        %1868 = vst [vmem:[%s299 + $0x10] sm:$0xff] %v1852
        %1869 = vst [vmem:[%s299 + $0x18] sm:$0xff] %v1853
        %1870 = vst [vmem:[%s299 + $0x20] sm:$0xff] %v1854
        %1871 = vst [vmem:[%s299 + $0x28] sm:$0xff] %v1855
        %1872 = vst [vmem:[%s299 + $0x30] sm:$0xff] %v1856
        %1873 = vst [vmem:[%s299 + $0x38] sm:$0xff] %v1857
        %1874 = vst [vmem:[%s299 + $0x40] sm:$0xff] %v1858
        %1875 = vst [vmem:[%s299 + $0x48] sm:$0xff] %v1859
        %1876 = vst [vmem:[%s299 + $0x50] sm:$0xff] %v1860
        %1877 = vst [vmem:[%s299 + $0x58] sm:$0xff] %v1861
        %1878 = vst [vmem:[%s299 + $0x60] sm:$0xff] %v1862
        %1879 = vst [vmem:[%s299 + $0x68] sm:$0xff] %v1863
        %1880 = vst [vmem:[%s299 + $0x70] sm:$0xff] %v1864
        %1881 = vst [vmem:[%s299 + $0x78] sm:$0xff] %v1865
        %s1882 = sand.u32 %s160, 1
        %s1883 = scalar_lea.sflag [#allocation4], %s1882
        %s1884 = sand.u32 %s160, 1
        %s1885 = smul.addr %s1884, 128
        %s1886 = scalar_lea.vmem [#allocation8], %s1885
        // Predicated region
        $region53: #{trans_model_forward.3} parent=39 // pred_check
          %p1887 = pneg %p170
        $region54: #{trans_model_forward.3} parent=39 // pred_check_branch
          %1889 = sbr.rel (%p1887) target = $region56
        $region55: #{trans_model_forward.3} parent=39 // pred_region
          %s1890 = sadd.s32 %s29, 2
          %s1891 = smul.u32 16, %s1890
          %1893 = vsyncadd %s1883, 0
          %s1894 = smul.addr %s28, 80
          %s1895 = sadd.s32 %s1891, %s1894
          %s1896 = smul.addr %s1895, 8
          %s1897 = scalar_lea.hbm %s6, %s1896
          %s1898 = sshll.u32 %s1886, 4
          %s1899 = int_to_ptr.vmem [resolvable:$true] %s1898
          %s1900 = sshll.u32 %s1897, 4
          %s1901 = int_to_ptr.hbm [resolvable:$true] %s1900
          %1906 = dma.vmem_to_hbm [thread:$0]  %s1899, 2048, %s1901, %s1883, 128, 128, 8
        $region56: #{trans_model_forward.3} parent=39 // pred_fallthru
          _
      $region40: #{trans_model_forward.3} parent=5 // pred_fallthru
        _
      %p1907 = scmp.le.s32.totalorder 2, %s19
      // Predicated region
      $region57: #{trans_model_forward.3} parent=5 // pred_check
        %p1908 = pneg %p1907
      $region58: #{trans_model_forward.3} parent=5 // pred_check_branch
        %1910 = sbr.rel (%p1908) target = $region60
      $region59: #{trans_model_forward.3} parent=5 // pred_region
        %s1911 = ssub.s32 %s19, 2
        // Predicated region
        $region61: #{trans_model_forward.3} parent=59 // pred_check
          %p1912 = pneg %p176
        $region62: #{trans_model_forward.3} parent=59 // pred_check_branch
          %1914 = sbr.rel (%p1912) target = $region64
        $region63: #{trans_model_forward.3} parent=59 // pred_region
          %s1915 = sand.u32 %s161, 1
          %s1916 = scalar_lea.sflag [#allocation4], %s1915
          %s1917 = sand.u32 %s161, 1
          %s1918 = smul.addr %s1917, 128
          %s1919 = scalar_lea.vmem [#allocation8], %s1918
          %1921 = dma.done %s1916, 2048
        $region64: #{trans_model_forward.3} parent=59 // pred_fallthru
          _
      $region60: #{trans_model_forward.3} parent=5 // pred_fallthru
        _
    $region6: #{trans_model_forward.3} parent=1 // loop_footer
      %s23 = sadd.s32 1, %s19
    $region7: #{trans_model_forward.3} parent=1 // loop_footer_branch
      %18 = sbr.rel target = $region3
    $region8: #{trans_model_forward.3} parent=1 // loop_exit
      _
    %1922 = vsyncpa [#allocation3], 1
    %s1923 = scalar_lea.sflag [#allocation3], 1
    %1924 = vsyncpa %s1923, 1
    %1925 = vsyncpa [#allocation6], 1
    %1926 = vsyncpa [#allocation4], 1
    %s1927 = scalar_lea.sflag [#allocation4], 1
    %1928 = vsyncpa %s1927, 1

</llo_original>
